<compile_context>
chip_gen: v7x
topology: tpu7x:2x2x1
jax: 0.10.0
libtpu: 0.0.40
codegen_flags: <defaults>
</compile_context>

<pallas_src>
import functools

import jax
import jax.numpy as jnp
from jax.experimental import pallas as pl
from jax.experimental.pallas import tpu as pltpu

LANE = 128
EPS = 1e-5


def _round_up(x, m):
    return (x + m - 1) // m * m


def _pick_th(H, W):
    """Largest divisor of H whose output tile has at most max(128, W) rows."""
    cap = max(LANE, W)
    best = 1
    for th in range(1, H + 1):
        if H % th == 0 and th * W <= cap:
            best = th
    return best


# ---------------------------------------------------------------------------
# Fused conv kernel: [optional BN+ReLU prelude] -> 3x3 conv -> bias -> stats.
# One (batch n, H-row-tile h) step per grid point.
# ---------------------------------------------------------------------------
def _conv_kernel(x_hbm, w_ref, b_ref, scale_ref, shift_ref,
                 y_ref, s_ref, ss_ref, xbuf,
                 *, TH, H, W, apply_prelude):
    # x_hbm : (N, H+2, W+2, Cin_p)  spatially + channel padded, resident in HBM
    # w_ref : (9*Cin_p, Cout_p)     bf16 packed taps (ky, kx, cin) -> rows
    # b_ref : (1, Cout_p)           f32 bias
    # scale_ref / shift_ref: (1, Cin_p) f32 BN affine of the *previous* layer
    # y_ref : (1, TH, W, Cout_p)    raw conv output tile
    # s_ref / ss_ref: (1, 1, Cout_p) per-batch-element stat partials
    # xbuf  : VMEM (TH+2, W+2, Cin_p) halo tile
    n = pl.program_id(0)
    h = pl.program_id(1)
    Wp = W + 2

    # Halo fetch: rows [h*TH, h*TH + TH + 2) of the padded input.
    # TODO(synk): double-buffer this DMA (make_async_copy + 2 slots + DMA sems)
    # to overlap the fetch with the previous tile's matmul.
    pltpu.sync_copy(x_hbm.at[n, pl.ds(h * TH, TH + 2)], xbuf)

    x = xbuf[...].astype(jnp.float32)                    # (TH+2, W+2, Cin_p)

    if apply_prelude:
        # Previous layer's BatchNorm affine + ReLU fused into this conv's
        # input path (scale/shift finalized from that layer's batch stats).
        a = jnp.maximum(x * scale_ref[...] + shift_ref[...], 0.0)
        # "same" zero padding belongs *after* BN+ReLU -> re-zero the halo ring.
        row = jax.lax.broadcasted_iota(jnp.int32, (TH + 2, Wp, 1), 0) + h * TH
        col = jax.lax.broadcasted_iota(jnp.int32, (TH + 2, Wp, 1), 1)
        valid = (row >= 1) & (row <= H) & (col >= 1) & (col <= W)
        x = jnp.where(valid, a, 0.0)

    # im2col: one deep-K MXU matmul (TH*W, 9*Cin_p) @ (9*Cin_p, Cout_p),
    # bf16 operands with f32 accumulation.
    xc = x.astype(w_ref.dtype)
    cin_p = xc.shape[-1]
    taps = [xc[dy:dy + TH, dx:dx + W, :] for dy in range(3) for dx in range(3)]
    pat = jnp.concatenate(taps, axis=-1).reshape(TH * W, 9 * cin_p)
    acc = jnp.dot(pat, w_ref[...], preferred_element_type=jnp.float32)
    acc = acc + b_ref[...]                               # (TH*W, Cout_p) f32
    cout_p = acc.shape[-1]

    # Per-channel batch-stat partials (reduced over h here, over n in wrapper).
    @pl.when(h == 0)
    def _():
        s_ref[...] = jnp.zeros_like(s_ref)
        ss_ref[...] = jnp.zeros_like(ss_ref)

    s_ref[...] += jnp.sum(acc, axis=0, keepdims=True).reshape(1, 1, cout_p)
    ss_ref[...] += jnp.sum(acc * acc, axis=0, keepdims=True).reshape(1, 1, cout_p)

    y_ref[...] = acc.reshape(1, TH, W, cout_p).astype(y_ref.dtype)


def _conv_bn_layer(xpad, w, b, scale=None, shift=None, *, TH):
    """xpad: (N, H+2, W+2, Cin_p).  Returns raw conv out + per-n stat partials."""
    N, Hp, Wp, cin_p = xpad.shape
    H, W = Hp - 2, Wp - 2
    cout_p = w.shape[-1]
    apply_prelude = scale is not None
    if not apply_prelude:
        scale = jnp.ones((1, cin_p), jnp.float32)
        shift = jnp.zeros((1, cin_p), jnp.float32)
    nh = H // TH

    kernel = functools.partial(_conv_kernel, TH=TH, H=H, W=W,
                               apply_prelude=apply_prelude)
    y, s, ss = pl.pallas_call(
        kernel,
        out_shape=(
            jax.ShapeDtypeStruct((N, H, W, cout_p), jnp.float32),
            jax.ShapeDtypeStruct((N, 1, cout_p), jnp.float32),
            jax.ShapeDtypeStruct((N, 1, cout_p), jnp.float32),
        ),
        grid=(N, nh),
        in_specs=[
            pl.BlockSpec(memory_space=pl.ANY),                       # x in HBM
            pl.BlockSpec((9 * cin_p, cout_p), lambda n, h: (0, 0)),  # weights
            pl.BlockSpec((1, cout_p), lambda n, h: (0, 0)),          # bias
            pl.BlockSpec((1, cin_p), lambda n, h: (0, 0)),           # bn scale
            pl.BlockSpec((1, cin_p), lambda n, h: (0, 0)),           # bn shift
        ],
        out_specs=(
            pl.BlockSpec((1, TH, W, cout_p), lambda n, h: (n, h, 0, 0)),
            pl.BlockSpec((1, 1, cout_p), lambda n, h: (n, 0, 0)),
            pl.BlockSpec((1, 1, cout_p), lambda n, h: (n, 0, 0)),
        ),
        scratch_shapes=[pltpu.VMEM((TH + 2, Wp, cin_p), xpad.dtype)],
        compiler_params=pltpu.CompilerParams(
            dimension_semantics=("parallel", "arbitrary"),
            vmem_limit_bytes=32 * 1024 * 1024,
        ),
    )(xpad, w, b, scale, shift)
    return y, s, ss


# ---------------------------------------------------------------------------
# Final BN-affine + ReLU: lane-dense tiled elementwise pass.
# ---------------------------------------------------------------------------
def _bn_relu_kernel(x_ref, scale_ref, shift_ref, o_ref):
    x = x_ref[...].astype(jnp.float32)
    y = jnp.maximum(x * scale_ref[...] + shift_ref[...], 0.0)
    o_ref[...] = y.astype(o_ref.dtype)


def _bn_relu_apply(y_nhwc, scale, shift):
    N, H, W, C = y_nhwc.shape
    M = N * H * W
    tr = M
    for cand in (512, 256, 128, 64, 32, 16, 8):
        if M % cand == 0:
            tr = cand
            break
    x2 = y_nhwc.reshape(M, C)
    out = pl.pallas_call(
        _bn_relu_kernel,
        out_shape=jax.ShapeDtypeStruct((M, C), y_nhwc.dtype),
        grid=(M // tr,),
        in_specs=[
            pl.BlockSpec((tr, C), lambda i: (i, 0)),
            pl.BlockSpec((1, C), lambda i: (0, 0)),
            pl.BlockSpec((1, C), lambda i: (0, 0)),
        ],
        out_specs=pl.BlockSpec((tr, C), lambda i: (i, 0)),
        compiler_params=pltpu.CompilerParams(
            dimension_semantics=("parallel",)),
    )(x2, scale, shift)
    return out.reshape(N, H, W, C)


# ---------------------------------------------------------------------------
# Parameter packing & BN finalization (tiny (C,)-sized jnp math).
# ---------------------------------------------------------------------------
def _pack_weight(w_oihw, cin_p, cout_p):
    cout, cin, kh, kw = w_oihw.shape
    w = jnp.transpose(w_oihw, (2, 3, 1, 0))                  # (3,3,Cin,Cout)
    w = jnp.pad(w, ((0, 0), (0, 0), (0, cin_p - cin), (0, cout_p - cout)))
    return w.reshape(kh * kw * cin_p, cout_p).astype(jnp.bfloat16)


def _pad_vec(v, n):
    return jnp.pad(v, (0, n - v.shape[0]))


def _bn_scale_shift(s, ss, gamma_p, beta_p, count):
    tot = jnp.sum(s, axis=0)                                 # (1, Cp)
    tot2 = jnp.sum(ss, axis=0)
    mean = tot / count
    var = jnp.maximum(tot2 / count - mean * mean, 0.0)       # biased (train-mode)
    inv = jax.lax.rsqrt(var + EPS)
    scale = gamma_p.reshape(1, -1) * inv
    shift = beta_p.reshape(1, -1) - mean * scale
    return scale.astype(jnp.float32), shift.astype(jnp.float32)


# ---------------------------------------------------------------------------
# ConvBlock forward
# ---------------------------------------------------------------------------
def conv_block_forward(x_nchw, params):
    x = jnp.transpose(x_nchw, (0, 2, 3, 1))                  # NCHW -> NHWC
    N, H, W, cin = x.shape
    out_ch = params["b1"].shape[0]
    cin_p = _round_up(cin, LANE)
    cout_p = _round_up(out_ch, LANE)
    count = N * H * W
    TH = _pick_th(H, W)

    w1 = _pack_weight(params["w1"], cin_p, cout_p)
    b1 = _pad_vec(params["b1"], cout_p).reshape(1, cout_p).astype(jnp.float32)
    w2 = _pack_weight(params["w2"], cout_p, cout_p)
    b2 = _pad_vec(params["b2"], cout_p).reshape(1, cout_p).astype(jnp.float32)
    g1 = _pad_vec(params["g1"], cout_p)
    be1 = _pad_vec(params["beta1"], cout_p)
    g2 = _pad_vec(params["g2"], cout_p)
    be2 = _pad_vec(params["beta2"], cout_p)

    # Lane-pad channels to 128 and add the 1-pixel spatial halo once.
    xpad = jnp.pad(x, ((0, 0), (1, 1), (1, 1), (0, cin_p - cin)))

    # conv1 + bias + BN1 batch-stat partials
    y1, s1, ss1 = _conv_bn_layer(xpad, w1, b1, TH=TH)
    scale1, shift1 = _bn_scale_shift(s1, ss1, g1, be1, count)

    # conv2 with BN1 + ReLU fused into its input path, + bias + BN2 stats.
    # TODO(synk): have conv1 write directly into a spatially padded buffer (or
    # handle the halo fully in-kernel) to drop this jnp.pad HBM round trip.
    y1pad = jnp.pad(y1, ((0, 0), (1, 1), (1, 1), (0, 0)))
    y2, s2, ss2 = _conv_bn_layer(y1pad, w2, b2, scale1, shift1, TH=TH)
    scale2, shift2 = _bn_scale_shift(s2, ss2, g2, be2, count)

    # final BN2 + ReLU, then strip lane padding
    out = _bn_relu_apply(y2, scale2, shift2)[..., :out_ch]
    return jnp.transpose(out, (0, 3, 1, 2))                  # NHWC -> NCHW


def init_params(key, in_ch, out_ch):
    k1, k2, k3, k4 = jax.random.split(key, 4)
    # Conv2d-style init: uniform(-bound, bound) with bound = 1/sqrt(fan_in)
    fan1 = in_ch * 9
    fan2 = out_ch * 9
    w1 = jax.random.uniform(k1, (out_ch, in_ch, 3, 3), jnp.float32,
                            -1.0 / jnp.sqrt(fan1), 1.0 / jnp.sqrt(fan1))
    b1 = jax.random.uniform(k2, (out_ch,), jnp.float32,
                            -1.0 / jnp.sqrt(fan1), 1.0 / jnp.sqrt(fan1))
    w2 = jax.random.uniform(k3, (out_ch, out_ch, 3, 3), jnp.float32,
                            -1.0 / jnp.sqrt(fan2), 1.0 / jnp.sqrt(fan2))
    b2 = jax.random.uniform(k4, (out_ch,), jnp.float32,
                            -1.0 / jnp.sqrt(fan2), 1.0 / jnp.sqrt(fan2))
    # BatchNorm2d defaults: weight = 1, bias = 0
    return {
        "w1": w1, "b1": b1, "g1": jnp.ones((out_ch,), jnp.float32),
        "beta1": jnp.zeros((out_ch,), jnp.float32),
        "w2": w2, "b2": b2, "g2": jnp.ones((out_ch,), jnp.float32),
        "beta2": jnp.zeros((out_ch,), jnp.float32),
    }


if __name__ == "__main__":
    N, in_ch, out_ch, H, W = 2, 4, 8, 16, 16
    key = jax.random.PRNGKey(0)
    kx, kp = jax.random.split(key)
    x = jax.random.normal(kx, (N, in_ch, H, W), jnp.float32)  # NCHW like PyTorch
    params = init_params(kp, in_ch, out_ch)

    y = jax.jit(conv_block_forward)(x, params)
    y = jax.block_until_ready(y)
    assert y.shape == (N, out_ch, H, W)
    assert bool(jnp.all(y >= 0.0))  # ReLU output
    print("KERNEL_OK")
</pallas_src>

<mosaic_0001>
module attributes {stable_mosaic.version = 11 : i64} {
  func.func @_conv_kernel(%arg0: i32, %arg1: i32, %arg2: memref<2x18x18x128xf32, #tpu.memory_space<any>>, %arg3: memref<1152x128xbf16, #tpu.memory_space<vmem>>, %arg4: memref<1x128xf32, #tpu.memory_space<vmem>>, %arg5: memref<1x128xf32, #tpu.memory_space<vmem>>, %arg6: memref<1x128xf32, #tpu.memory_space<vmem>>, %arg7: memref<1x8x16x128xf32, #tpu.memory_space<vmem>>, %arg8: memref<1x1x128xf32, #tpu.memory_space<vmem>>, %arg9: memref<1x1x128xf32, #tpu.memory_space<vmem>>, %arg10: memref<10x18x128xf32, #tpu.memory_space<vmem>>) attributes {dimension_semantics = [#tpu.dimension_semantics<parallel>, #tpu.dimension_semantics<arbitrary>], iteration_bounds = array<i64: 2, 2>, scalar_prefetch = 0 : i64, scratch_operands = 1 : i64, tpu.core_type = #tpu.core_type<tc>, window_params = [{}, {pipeline_mode = #tpu.pipeline_mode<synchronous>, transform_indices = @transform_1, window_bounds = array<i64: 1152, 128>}, {pipeline_mode = #tpu.pipeline_mode<synchronous>, transform_indices = @transform_2, window_bounds = array<i64: 1, 128>}, {pipeline_mode = #tpu.pipeline_mode<synchronous>, transform_indices = @transform_3, window_bounds = array<i64: 1, 128>}, {pipeline_mode = #tpu.pipeline_mode<synchronous>, transform_indices = @transform_4, window_bounds = array<i64: 1, 128>}, {transform_indices = @transform_5, window_bounds = array<i64: 1, 8, 16, 128>}, {transform_indices = @transform_6, window_bounds = array<i64: 1, 1, 128>}, {transform_indices = @transform_7, window_bounds = array<i64: 1, 1, 128>}]} {
    %c8_i32 = arith.constant 8 : i32
    %0 = arith.muli %arg1, %c8_i32 : i32
    "tpu.region"() ({
      %37 = tpu.sem_alloc : memref<!tpu.dma_semaphore, #tpu.memory_space<semaphore_mem>>
      %c0_i32_25 = arith.constant 0 : i32
      %c0_i32_26 = arith.constant 0 : i32
      %38 = tpu.memref_slice %arg2[%arg0, %0, %c0_i32_25, %c0_i32_26] : memref<2x18x18x128xf32, #tpu.memory_space<any>> -> memref<1x10x18x128xf32, #tpu.memory_space<any>>
      %39 = tpu.memref_squeeze %38 : memref<1x10x18x128xf32, #tpu.memory_space<any>> -> memref<10x18x128xf32, #tpu.memory_space<any>>
      tpu.enqueue_dma source(%39 : memref<10x18x128xf32, #tpu.memory_space<any>>) target(%arg10 : memref<10x18x128xf32, #tpu.memory_space<vmem>>) target_semaphore(%37 : memref<!tpu.dma_semaphore, #tpu.memory_space<semaphore_mem>>)
      %c0_i32_27 = arith.constant 0 : i32
      %c0_i32_28 = arith.constant 0 : i32
      %40 = tpu.memref_slice %arg2[%arg0, %0, %c0_i32_27, %c0_i32_28] : memref<2x18x18x128xf32, #tpu.memory_space<any>> -> memref<1x10x18x128xf32, #tpu.memory_space<any>>
      %41 = tpu.memref_squeeze %40 : memref<1x10x18x128xf32, #tpu.memory_space<any>> -> memref<10x18x128xf32, #tpu.memory_space<any>>
      tpu.wait_dma2 semaphore(%37 : memref<!tpu.dma_semaphore, #tpu.memory_space<semaphore_mem>>) src(%41 : memref<10x18x128xf32, #tpu.memory_space<any>>) dst(%arg10 : memref<10x18x128xf32, #tpu.memory_space<vmem>>)
      tpu.yield
    }) : () -> ()
    %c0 = arith.constant 0 : index
    %c0_0 = arith.constant 0 : index
    %c0_1 = arith.constant 0 : index
    %1 = vector.load %arg10[%c0, %c0_0, %c0_1] : memref<10x18x128xf32, #tpu.memory_space<vmem>>, vector<10x18x128xf32>
    %2 = arith.truncf %1 : vector<10x18x128xf32> to vector<10x18x128xbf16>
    %3 = vector.extract_strided_slice %2 {offsets = [0, 0, 0], sizes = [8, 16, 128], strides = [1, 1, 1]} : vector<10x18x128xbf16> to vector<8x16x128xbf16>
    %4 = vector.extract_strided_slice %2 {offsets = [0, 1, 0], sizes = [8, 16, 128], strides = [1, 1, 1]} : vector<10x18x128xbf16> to vector<8x16x128xbf16>
    %5 = vector.extract_strided_slice %2 {offsets = [0, 2, 0], sizes = [8, 16, 128], strides = [1, 1, 1]} : vector<10x18x128xbf16> to vector<8x16x128xbf16>
    %6 = vector.extract_strided_slice %2 {offsets = [1, 0, 0], sizes = [8, 16, 128], strides = [1, 1, 1]} : vector<10x18x128xbf16> to vector<8x16x128xbf16>
    %7 = vector.extract_strided_slice %2 {offsets = [1, 1, 0], sizes = [8, 16, 128], strides = [1, 1, 1]} : vector<10x18x128xbf16> to vector<8x16x128xbf16>
    %8 = vector.extract_strided_slice %2 {offsets = [1, 2, 0], sizes = [8, 16, 128], strides = [1, 1, 1]} : vector<10x18x128xbf16> to vector<8x16x128xbf16>
    %9 = vector.extract_strided_slice %2 {offsets = [2, 0, 0], sizes = [8, 16, 128], strides = [1, 1, 1]} : vector<10x18x128xbf16> to vector<8x16x128xbf16>
    %10 = vector.extract_strided_slice %2 {offsets = [2, 1, 0], sizes = [8, 16, 128], strides = [1, 1, 1]} : vector<10x18x128xbf16> to vector<8x16x128xbf16>
    %11 = vector.extract_strided_slice %2 {offsets = [2, 2, 0], sizes = [8, 16, 128], strides = [1, 1, 1]} : vector<10x18x128xbf16> to vector<8x16x128xbf16>
    %12 = tpu.concatenate %3, %4, %5, %6, %7, %8, %9, %10, %11 in 2 : vector<8x16x128xbf16>, vector<8x16x128xbf16>, vector<8x16x128xbf16>, vector<8x16x128xbf16>, vector<8x16x128xbf16>, vector<8x16x128xbf16>, vector<8x16x128xbf16>, vector<8x16x128xbf16>, vector<8x16x128xbf16> -> vector<8x16x1152xbf16>
    %13 = vector.shape_cast %12 : vector<8x16x1152xbf16> to vector<128x1152xbf16>
    %c0_2 = arith.constant 0 : index
    %c0_3 = arith.constant 0 : index
    %14 = vector.load %arg3[%c0_2, %c0_3] : memref<1152x128xbf16, #tpu.memory_space<vmem>>, vector<1152x128xbf16>
    %cst = arith.constant dense<0.000000e+00> : vector<128x128xf32>
    %15 = tpu.matmul %13, %14, %cst {dimension_numbers = #tpu.dot_dimension_numbers<[1], [0], [0], [1], [0, 0, 1, 1], [], []>} : vector<128x1152xbf16>, vector<1152x128xbf16>, vector<128x128xf32> -> vector<128x128xf32>
    %c0_4 = arith.constant 0 : index
    %c0_5 = arith.constant 0 : index
    %16 = vector.load %arg4[%c0_4, %c0_5] : memref<1x128xf32, #tpu.memory_space<vmem>>, vector<1x128xf32>
    %17 = vector.broadcast %16 : vector<1x128xf32> to vector<128x128xf32>
    %18 = arith.addf %15, %17 : vector<128x128xf32>
    %c0_i32 = arith.constant 0 : i32
    %19 = arith.cmpi eq, %arg1, %c0_i32 : i32
    %20 = arith.extui %19 : i1 to i32
    %c0_i32_6 = arith.constant 0 : i32
    %21 = arith.cmpi ne, %20, %c0_i32_6 : i32
    scf.if %21 {
      %cst_25 = arith.constant 0.000000e+00 : f32
      %37 = vector.broadcast %cst_25 : f32 to vector<1x1x128xf32>
      %c0_26 = arith.constant 0 : index
      %c0_27 = arith.constant 0 : index
      %c0_28 = arith.constant 0 : index
      %38 = vector.load %arg8[%c0_26, %c0_27, %c0_28] : memref<1x1x128xf32, #tpu.memory_space<vmem>>, vector<1x1x128xf32>
      tpu.vector_store %arg8[%c0_26, %c0_27, %c0_28], %37 {strides = array<i32>} : memref<1x1x128xf32, #tpu.memory_space<vmem>>, vector<1x1x128xf32>,
      %cst_29 = arith.constant 0.000000e+00 : f32
      %39 = vector.broadcast %cst_29 : f32 to vector<1x1x128xf32>
      %c0_30 = arith.constant 0 : index
      %c0_31 = arith.constant 0 : index
      %c0_32 = arith.constant 0 : index
      %40 = vector.load %arg9[%c0_30, %c0_31, %c0_32] : memref<1x1x128xf32, #tpu.memory_space<vmem>>, vector<1x1x128xf32>
      tpu.vector_store %arg9[%c0_30, %c0_31, %c0_32], %39 {strides = array<i32>} : memref<1x1x128xf32, #tpu.memory_space<vmem>>, vector<1x1x128xf32>,
    } else {
    }
    %c0_7 = arith.constant 0 : index
    %c0_8 = arith.constant 0 : index
    %c0_9 = arith.constant 0 : index
    %22 = vector.load %arg8[%c0_7, %c0_8, %c0_9] : memref<1x1x128xf32, #tpu.memory_space<vmem>>, vector<1x1x128xf32>
    %cst_10 = arith.constant dense<0.000000e+00> : vector<128xf32>
    %23 = vector.multi_reduction <add>, %18, %cst_10 [0] : vector<128x128xf32> to vector<128xf32>
    %24 = vector.shape_cast %23 : vector<128xf32> to vector<1x128xf32>
    %25 = vector.shape_cast %24 : vector<1x128xf32> to vector<1x1x128xf32>
    %26 = arith.addf %22, %25 : vector<1x1x128xf32>
    %c0_11 = arith.constant 0 : index
    %c0_12 = arith.constant 0 : index
    %c0_13 = arith.constant 0 : index
    %27 = vector.load %arg8[%c0_11, %c0_12, %c0_13] : memref<1x1x128xf32, #tpu.memory_space<vmem>>, vector<1x1x128xf32>
    tpu.vector_store %arg8[%c0_11, %c0_12, %c0_13], %26 {strides = array<i32>} : memref<1x1x128xf32, #tpu.memory_space<vmem>>, vector<1x1x128xf32>,
    %c0_14 = arith.constant 0 : index
    %c0_15 = arith.constant 0 : index
    %c0_16 = arith.constant 0 : index
    %28 = vector.load %arg9[%c0_14, %c0_15, %c0_16] : memref<1x1x128xf32, #tpu.memory_space<vmem>>, vector<1x1x128xf32>
    %29 = arith.mulf %18, %18 : vector<128x128xf32>
    %cst_17 = arith.constant dense<0.000000e+00> : vector<128xf32>
    %30 = vector.multi_reduction <add>, %29, %cst_17 [0] : vector<128x128xf32> to vector<128xf32>
    %31 = vector.shape_cast %30 : vector<128xf32> to vector<1x128xf32>
    %32 = vector.shape_cast %31 : vector<1x128xf32> to vector<1x1x128xf32>
    %33 = arith.addf %28, %32 : vector<1x1x128xf32>
    %c0_18 = arith.constant 0 : index
    %c0_19 = arith.constant 0 : index
    %c0_20 = arith.constant 0 : index
    %34 = vector.load %arg9[%c0_18, %c0_19, %c0_20] : memref<1x1x128xf32, #tpu.memory_space<vmem>>, vector<1x1x128xf32>
    tpu.vector_store %arg9[%c0_18, %c0_19, %c0_20], %33 {strides = array<i32>} : memref<1x1x128xf32, #tpu.memory_space<vmem>>, vector<1x1x128xf32>,
    %35 = vector.shape_cast %18 : vector<128x128xf32> to vector<1x8x16x128xf32>
    %c0_21 = arith.constant 0 : index
    %c0_22 = arith.constant 0 : index
    %c0_23 = arith.constant 0 : index
    %c0_24 = arith.constant 0 : index
    %36 = vector.load %arg7[%c0_21, %c0_22, %c0_23, %c0_24] : memref<1x8x16x128xf32, #tpu.memory_space<vmem>>, vector<1x8x16x128xf32>
    tpu.vector_store %arg7[%c0_21, %c0_22, %c0_23, %c0_24], %35 {strides = array<i32>} : memref<1x8x16x128xf32, #tpu.memory_space<vmem>>, vector<1x8x16x128xf32>,
    return
  }
  func.func @transform_1(%arg0: i32, %arg1: i32) -> (i32, i32) {
    %c0_i32 = arith.constant 0 : i32
    %c0_i32_0 = arith.constant 0 : i32
    %c0_i32_1 = arith.constant 0 : i32
    return %c0_i32, %c0_i32_0 : i32, i32
  }
  func.func @transform_2(%arg0: i32, %arg1: i32) -> (i32, i32) {
    %c0_i32 = arith.constant 0 : i32
    %c0_i32_0 = arith.constant 0 : i32
    %c0_i32_1 = arith.constant 0 : i32
    return %c0_i32, %c0_i32_0 : i32, i32
  }
  func.func @transform_3(%arg0: i32, %arg1: i32) -> (i32, i32) {
    %c0_i32 = arith.constant 0 : i32
    %c0_i32_0 = arith.constant 0 : i32
    %c0_i32_1 = arith.constant 0 : i32
    return %c0_i32, %c0_i32_0 : i32, i32
  }
  func.func @transform_4(%arg0: i32, %arg1: i32) -> (i32, i32) {
    %c0_i32 = arith.constant 0 : i32
    %c0_i32_0 = arith.constant 0 : i32
    %c0_i32_1 = arith.constant 0 : i32
    return %c0_i32, %c0_i32_0 : i32, i32
  }
  func.func @transform_5(%arg0: i32, %arg1: i32) -> (i32, i32, i32, i32) {
    %c0_i32 = arith.constant 0 : i32
    %c0_i32_0 = arith.constant 0 : i32
    %c0_i32_1 = arith.constant 0 : i32
    return %arg0, %arg1, %c0_i32, %c0_i32_0 : i32, i32, i32, i32
  }
  func.func @transform_6(%arg0: i32, %arg1: i32) -> (i32, i32, i32) {
    %c0_i32 = arith.constant 0 : i32
    %c0_i32_0 = arith.constant 0 : i32
    %c0_i32_1 = arith.constant 0 : i32
    return %arg0, %c0_i32, %c0_i32_0 : i32, i32, i32
  }
  func.func @transform_7(%arg0: i32, %arg1: i32) -> (i32, i32, i32) {
    %c0_i32 = arith.constant 0 : i32
    %c0_i32_0 = arith.constant 0 : i32
    %c0_i32_1 = arith.constant 0 : i32
    return %arg0, %c0_i32, %c0_i32_0 : i32, i32, i32
  }
}

module attributes {stable_mosaic.version = 11 : i64} {
  func.func @_conv_kernel(%arg0: i32, %arg1: i32, %arg2: memref<2x18x18x128xf32, #tpu.memory_space<any>>, %arg3: memref<1152x128xbf16, #tpu.memory_space<vmem>>, %arg4: memref<1x128xf32, #tpu.memory_space<vmem>>, %arg5: memref<1x128xf32, #tpu.memory_space<vmem>>, %arg6: memref<1x128xf32, #tpu.memory_space<vmem>>, %arg7: memref<1x8x16x128xf32, #tpu.memory_space<vmem>>, %arg8: memref<1x1x128xf32, #tpu.memory_space<vmem>>, %arg9: memref<1x1x128xf32, #tpu.memory_space<vmem>>, %arg10: memref<10x18x128xf32, #tpu.memory_space<vmem>>) attributes {dimension_semantics = [#tpu.dimension_semantics<parallel>, #tpu.dimension_semantics<arbitrary>], iteration_bounds = array<i64: 2, 2>, scalar_prefetch = 0 : i64, scratch_operands = 1 : i64, tpu.core_type = #tpu.core_type<tc>, window_params = [{}, {pipeline_mode = #tpu.pipeline_mode<synchronous>, transform_indices = @transform_1, window_bounds = array<i64: 1152, 128>}, {pipeline_mode = #tpu.pipeline_mode<synchronous>, transform_indices = @transform_2, window_bounds = array<i64: 1, 128>}, {pipeline_mode = #tpu.pipeline_mode<synchronous>, transform_indices = @transform_3, window_bounds = array<i64: 1, 128>}, {pipeline_mode = #tpu.pipeline_mode<synchronous>, transform_indices = @transform_4, window_bounds = array<i64: 1, 128>}, {transform_indices = @transform_5, window_bounds = array<i64: 1, 8, 16, 128>}, {transform_indices = @transform_6, window_bounds = array<i64: 1, 1, 128>}, {transform_indices = @transform_7, window_bounds = array<i64: 1, 1, 128>}]} {
    %c8_i32 = arith.constant 8 : i32
    %0 = arith.muli %arg1, %c8_i32 : i32
    "tpu.region"() ({
      %67 = tpu.sem_alloc : memref<!tpu.dma_semaphore, #tpu.memory_space<semaphore_mem>>
      %c0_i32_34 = arith.constant 0 : i32
      %c0_i32_35 = arith.constant 0 : i32
      %68 = tpu.memref_slice %arg2[%arg0, %0, %c0_i32_34, %c0_i32_35] : memref<2x18x18x128xf32, #tpu.memory_space<any>> -> memref<1x10x18x128xf32, #tpu.memory_space<any>>
      %69 = tpu.memref_squeeze %68 : memref<1x10x18x128xf32, #tpu.memory_space<any>> -> memref<10x18x128xf32, #tpu.memory_space<any>>
      tpu.enqueue_dma source(%69 : memref<10x18x128xf32, #tpu.memory_space<any>>) target(%arg10 : memref<10x18x128xf32, #tpu.memory_space<vmem>>) target_semaphore(%67 : memref<!tpu.dma_semaphore, #tpu.memory_space<semaphore_mem>>)
      %c0_i32_36 = arith.constant 0 : i32
      %c0_i32_37 = arith.constant 0 : i32
      %70 = tpu.memref_slice %arg2[%arg0, %0, %c0_i32_36, %c0_i32_37] : memref<2x18x18x128xf32, #tpu.memory_space<any>> -> memref<1x10x18x128xf32, #tpu.memory_space<any>>
      %71 = tpu.memref_squeeze %70 : memref<1x10x18x128xf32, #tpu.memory_space<any>> -> memref<10x18x128xf32, #tpu.memory_space<any>>
      tpu.wait_dma2 semaphore(%67 : memref<!tpu.dma_semaphore, #tpu.memory_space<semaphore_mem>>) src(%71 : memref<10x18x128xf32, #tpu.memory_space<any>>) dst(%arg10 : memref<10x18x128xf32, #tpu.memory_space<vmem>>)
      tpu.yield
    }) : () -> ()
    %c0 = arith.constant 0 : index
    %c0_0 = arith.constant 0 : index
    %c0_1 = arith.constant 0 : index
    %1 = vector.load %arg10[%c0, %c0_0, %c0_1] : memref<10x18x128xf32, #tpu.memory_space<vmem>>, vector<10x18x128xf32>
    %c0_2 = arith.constant 0 : index
    %c0_3 = arith.constant 0 : index
    %2 = vector.load %arg5[%c0_2, %c0_3] : memref<1x128xf32, #tpu.memory_space<vmem>>, vector<1x128xf32>
    %3 = vector.shape_cast %2 : vector<1x128xf32> to vector<1x1x128xf32>
    %4 = vector.broadcast %3 : vector<1x1x128xf32> to vector<10x18x128xf32>
    %5 = arith.mulf %1, %4 : vector<10x18x128xf32>
    %c0_4 = arith.constant 0 : index
    %c0_5 = arith.constant 0 : index
    %6 = vector.load %arg6[%c0_4, %c0_5] : memref<1x128xf32, #tpu.memory_space<vmem>>, vector<1x128xf32>
    %7 = vector.shape_cast %6 : vector<1x128xf32> to vector<1x1x128xf32>
    %8 = vector.broadcast %7 : vector<1x1x128xf32> to vector<10x18x128xf32>
    %9 = arith.addf %5, %8 : vector<10x18x128xf32>
    %cst = arith.constant 0.000000e+00 : f32
    %10 = vector.broadcast %cst : f32 to vector<10x18x128xf32>
    %11 = arith.maximumf %9, %10 : vector<10x18x128xf32>
    %12 = tpu.iota {dimensions = array<i32: 0>} : vector<10x18x1xi32>
    %c8_i32_6 = arith.constant 8 : i32
    %13 = arith.muli %arg1, %c8_i32_6 : i32
    %14 = vector.broadcast %13 : i32 to vector<10x18x1xi32>
    %15 = arith.addi %12, %14 : vector<10x18x1xi32>
    %16 = tpu.iota {dimensions = array<i32: 1>} : vector<10x18x1xi32>
    %c1_i32 = arith.constant 1 : i32
    %17 = vector.broadcast %c1_i32 : i32 to vector<10x18x1xi32>
    %18 = arith.cmpi sge, %15, %17 : vector<10x18x1xi32>
    %c16_i32 = arith.constant 16 : i32
    %19 = vector.broadcast %c16_i32 : i32 to vector<10x18x1xi32>
    %20 = arith.cmpi sle, %15, %19 : vector<10x18x1xi32>
    %21 = arith.andi %18, %20 : vector<10x18x1xi1>
    %c1_i32_7 = arith.constant 1 : i32
    %22 = vector.broadcast %c1_i32_7 : i32 to vector<10x18x1xi32>
    %23 = arith.cmpi sge, %16, %22 : vector<10x18x1xi32>
    %24 = arith.andi %21, %23 : vector<10x18x1xi1>
    %c16_i32_8 = arith.constant 16 : i32
    %25 = vector.broadcast %c16_i32_8 : i32 to vector<10x18x1xi32>
    %26 = arith.cmpi sle, %16, %25 : vector<10x18x1xi32>
    %27 = arith.andi %24, %26 : vector<10x18x1xi1>
    %cst_9 = arith.constant 0.000000e+00 : f32
    %28 = vector.shape_cast %27 : vector<10x18x1xi1> to vector<10x18x1xi1>
    %29 = vector.broadcast %28 : vector<10x18x1xi1> to vector<10x18x128xi1>
    %30 = vector.broadcast %cst_9 : f32 to vector<10x18x128xf32>
    %31 = arith.select %29, %11, %30 : vector<10x18x128xi1>, vector<10x18x128xf32>
    %32 = arith.truncf %31 : vector<10x18x128xf32> to vector<10x18x128xbf16>
    %33 = vector.extract_strided_slice %32 {offsets = [0, 0, 0], sizes = [8, 16, 128], strides = [1, 1, 1]} : vector<10x18x128xbf16> to vector<8x16x128xbf16>
    %34 = vector.extract_strided_slice %32 {offsets = [0, 1, 0], sizes = [8, 16, 128], strides = [1, 1, 1]} : vector<10x18x128xbf16> to vector<8x16x128xbf16>
    %35 = vector.extract_strided_slice %32 {offsets = [0, 2, 0], sizes = [8, 16, 128], strides = [1, 1, 1]} : vector<10x18x128xbf16> to vector<8x16x128xbf16>
    %36 = vector.extract_strided_slice %32 {offsets = [1, 0, 0], sizes = [8, 16, 128], strides = [1, 1, 1]} : vector<10x18x128xbf16> to vector<8x16x128xbf16>
    %37 = vector.extract_strided_slice %32 {offsets = [1, 1, 0], sizes = [8, 16, 128], strides = [1, 1, 1]} : vector<10x18x128xbf16> to vector<8x16x128xbf16>
    %38 = vector.extract_strided_slice %32 {offsets = [1, 2, 0], sizes = [8, 16, 128], strides = [1, 1, 1]} : vector<10x18x128xbf16> to vector<8x16x128xbf16>
    %39 = vector.extract_strided_slice %32 {offsets = [2, 0, 0], sizes = [8, 16, 128], strides = [1, 1, 1]} : vector<10x18x128xbf16> to vector<8x16x128xbf16>
    %40 = vector.extract_strided_slice %32 {offsets = [2, 1, 0], sizes = [8, 16, 128], strides = [1, 1, 1]} : vector<10x18x128xbf16> to vector<8x16x128xbf16>
    %41 = vector.extract_strided_slice %32 {offsets = [2, 2, 0], sizes = [8, 16, 128], strides = [1, 1, 1]} : vector<10x18x128xbf16> to vector<8x16x128xbf16>
    %42 = tpu.concatenate %33, %34, %35, %36, %37, %38, %39, %40, %41 in 2 : vector<8x16x128xbf16>, vector<8x16x128xbf16>, vector<8x16x128xbf16>, vector<8x16x128xbf16>, vector<8x16x128xbf16>, vector<8x16x128xbf16>, vector<8x16x128xbf16>, vector<8x16x128xbf16>, vector<8x16x128xbf16> -> vector<8x16x1152xbf16>
    %43 = vector.shape_cast %42 : vector<8x16x1152xbf16> to vector<128x1152xbf16>
    %c0_10 = arith.constant 0 : index
    %c0_11 = arith.constant 0 : index
    %44 = vector.load %arg3[%c0_10, %c0_11] : memref<1152x128xbf16, #tpu.memory_space<vmem>>, vector<1152x128xbf16>
    %cst_12 = arith.constant dense<0.000000e+00> : vector<128x128xf32>
    %45 = tpu.matmul %43, %44, %cst_12 {dimension_numbers = #tpu.dot_dimension_numbers<[1], [0], [0], [1], [0, 0, 1, 1], [], []>} : vector<128x1152xbf16>, vector<1152x128xbf16>, vector<128x128xf32> -> vector<128x128xf32>
    %c0_13 = arith.constant 0 : index
    %c0_14 = arith.constant 0 : index
    %46 = vector.load %arg4[%c0_13, %c0_14] : memref<1x128xf32, #tpu.memory_space<vmem>>, vector<1x128xf32>
    %47 = vector.broadcast %46 : vector<1x128xf32> to vector<128x128xf32>
    %48 = arith.addf %45, %47 : vector<128x128xf32>
    %c0_i32 = arith.constant 0 : i32
    %49 = arith.cmpi eq, %arg1, %c0_i32 : i32
    %50 = arith.extui %49 : i1 to i32
    %c0_i32_15 = arith.constant 0 : i32
    %51 = arith.cmpi ne, %50, %c0_i32_15 : i32
    scf.if %51 {
      %cst_34 = arith.constant 0.000000e+00 : f32
      %67 = vector.broadcast %cst_34 : f32 to vector<1x1x128xf32>
      %c0_35 = arith.constant 0 : index
      %c0_36 = arith.constant 0 : index
      %c0_37 = arith.constant 0 : index
      %68 = vector.load %arg8[%c0_35, %c0_36, %c0_37] : memref<1x1x128xf32, #tpu.memory_space<vmem>>, vector<1x1x128xf32>
      tpu.vector_store %arg8[%c0_35, %c0_36, %c0_37], %67 {strides = array<i32>} : memref<1x1x128xf32, #tpu.memory_space<vmem>>, vector<1x1x128xf32>,
      %cst_38 = arith.constant 0.000000e+00 : f32
      %69 = vector.broadcast %cst_38 : f32 to vector<1x1x128xf32>
      %c0_39 = arith.constant 0 : index
      %c0_40 = arith.constant 0 : index
      %c0_41 = arith.constant 0 : index
      %70 = vector.load %arg9[%c0_39, %c0_40, %c0_41] : memref<1x1x128xf32, #tpu.memory_space<vmem>>, vector<1x1x128xf32>
      tpu.vector_store %arg9[%c0_39, %c0_40, %c0_41], %69 {strides = array<i32>} : memref<1x1x128xf32, #tpu.memory_space<vmem>>, vector<1x1x128xf32>,
    } else {
    }
    %c0_16 = arith.constant 0 : index
    %c0_17 = arith.constant 0 : index
    %c0_18 = arith.constant 0 : index
    %52 = vector.load %arg8[%c0_16, %c0_17, %c0_18] : memref<1x1x128xf32, #tpu.memory_space<vmem>>, vector<1x1x128xf32>
    %cst_19 = arith.constant dense<0.000000e+00> : vector<128xf32>
    %53 = vector.multi_reduction <add>, %48, %cst_19 [0] : vector<128x128xf32> to vector<128xf32>
    %54 = vector.shape_cast %53 : vector<128xf32> to vector<1x128xf32>
    %55 = vector.shape_cast %54 : vector<1x128xf32> to vector<1x1x128xf32>
    %56 = arith.addf %52, %55 : vector<1x1x128xf32>
    %c0_20 = arith.constant 0 : index
    %c0_21 = arith.constant 0 : index
    %c0_22 = arith.constant 0 : index
    %57 = vector.load %arg8[%c0_20, %c0_21, %c0_22] : memref<1x1x128xf32, #tpu.memory_space<vmem>>, vector<1x1x128xf32>
    tpu.vector_store %arg8[%c0_20, %c0_21, %c0_22], %56 {strides = array<i32>} : memref<1x1x128xf32, #tpu.memory_space<vmem>>, vector<1x1x128xf32>,
    %c0_23 = arith.constant 0 : index
    %c0_24 = arith.constant 0 : index
    %c0_25 = arith.constant 0 : index
    %58 = vector.load %arg9[%c0_23, %c0_24, %c0_25] : memref<1x1x128xf32, #tpu.memory_space<vmem>>, vector<1x1x128xf32>
    %59 = arith.mulf %48, %48 : vector<128x128xf32>
    %cst_26 = arith.constant dense<0.000000e+00> : vector<128xf32>
    %60 = vector.multi_reduction <add>, %59, %cst_26 [0] : vector<128x128xf32> to vector<128xf32>
    %61 = vector.shape_cast %60 : vector<128xf32> to vector<1x128xf32>
    %62 = vector.shape_cast %61 : vector<1x128xf32> to vector<1x1x128xf32>
    %63 = arith.addf %58, %62 : vector<1x1x128xf32>
    %c0_27 = arith.constant 0 : index
    %c0_28 = arith.constant 0 : index
    %c0_29 = arith.constant 0 : index
    %64 = vector.load %arg9[%c0_27, %c0_28, %c0_29] : memref<1x1x128xf32, #tpu.memory_space<vmem>>, vector<1x1x128xf32>
    tpu.vector_store %arg9[%c0_27, %c0_28, %c0_29], %63 {strides = array<i32>} : memref<1x1x128xf32, #tpu.memory_space<vmem>>, vector<1x1x128xf32>,
    %65 = vector.shape_cast %48 : vector<128x128xf32> to vector<1x8x16x128xf32>
    %c0_30 = arith.constant 0 : index
    %c0_31 = arith.constant 0 : index
    %c0_32 = arith.constant 0 : index
    %c0_33 = arith.constant 0 : index
    %66 = vector.load %arg7[%c0_30, %c0_31, %c0_32, %c0_33] : memref<1x8x16x128xf32, #tpu.memory_space<vmem>>, vector<1x8x16x128xf32>
    tpu.vector_store %arg7[%c0_30, %c0_31, %c0_32, %c0_33], %65 {strides = array<i32>} : memref<1x8x16x128xf32, #tpu.memory_space<vmem>>, vector<1x8x16x128xf32>,
    return
  }
  func.func @transform_1(%arg0: i32, %arg1: i32) -> (i32, i32) {
    %c0_i32 = arith.constant 0 : i32
    %c0_i32_0 = arith.constant 0 : i32
    %c0_i32_1 = arith.constant 0 : i32
    return %c0_i32, %c0_i32_0 : i32, i32
  }
  func.func @transform_2(%arg0: i32, %arg1: i32) -> (i32, i32) {
    %c0_i32 = arith.constant 0 : i32
    %c0_i32_0 = arith.constant 0 : i32
    %c0_i32_1 = arith.constant 0 : i32
    return %c0_i32, %c0_i32_0 : i32, i32
  }
  func.func @transform_3(%arg0: i32, %arg1: i32) -> (i32, i32) {
    %c0_i32 = arith.constant 0 : i32
    %c0_i32_0 = arith.constant 0 : i32
    %c0_i32_1 = arith.constant 0 : i32
    return %c0_i32, %c0_i32_0 : i32, i32
  }
  func.func @transform_4(%arg0: i32, %arg1: i32) -> (i32, i32) {
    %c0_i32 = arith.constant 0 : i32
    %c0_i32_0 = arith.constant 0 : i32
    %c0_i32_1 = arith.constant 0 : i32
    return %c0_i32, %c0_i32_0 : i32, i32
  }
  func.func @transform_5(%arg0: i32, %arg1: i32) -> (i32, i32, i32, i32) {
    %c0_i32 = arith.constant 0 : i32
    %c0_i32_0 = arith.constant 0 : i32
    %c0_i32_1 = arith.constant 0 : i32
    return %arg0, %arg1, %c0_i32, %c0_i32_0 : i32, i32, i32, i32
  }
  func.func @transform_6(%arg0: i32, %arg1: i32) -> (i32, i32, i32) {
    %c0_i32 = arith.constant 0 : i32
    %c0_i32_0 = arith.constant 0 : i32
    %c0_i32_1 = arith.constant 0 : i32
    return %arg0, %c0_i32, %c0_i32_0 : i32, i32, i32
  }
  func.func @transform_7(%arg0: i32, %arg1: i32) -> (i32, i32, i32) {
    %c0_i32 = arith.constant 0 : i32
    %c0_i32_0 = arith.constant 0 : i32
    %c0_i32_1 = arith.constant 0 : i32
    return %arg0, %c0_i32, %c0_i32_0 : i32, i32, i32
  }
}

module attributes {stable_mosaic.version = 11 : i64} {
  func.func @_bn_relu_kernel(%arg0: i32, %arg1: memref<512x128xf32, #tpu.memory_space<vmem>>, %arg2: memref<1x128xf32, #tpu.memory_space<vmem>>, %arg3: memref<1x128xf32, #tpu.memory_space<vmem>>, %arg4: memref<512x128xf32, #tpu.memory_space<vmem>>) attributes {dimension_semantics = [#tpu.dimension_semantics<parallel>], iteration_bounds = array<i64: 1>, scalar_prefetch = 0 : i64, scratch_operands = 0 : i64, tpu.core_type = #tpu.core_type<tc>, window_params = [{transform_indices = @transform_0, window_bounds = array<i64: 512, 128>}, {pipeline_mode = #tpu.pipeline_mode<synchronous>, transform_indices = @transform_1, window_bounds = array<i64: 1, 128>}, {pipeline_mode = #tpu.pipeline_mode<synchronous>, transform_indices = @transform_2, window_bounds = array<i64: 1, 128>}, {transform_indices = @transform_3, window_bounds = array<i64: 512, 128>}]} {
    %c0 = arith.constant 0 : index
    %c0_0 = arith.constant 0 : index
    %0 = vector.load %arg1[%c0, %c0_0] : memref<512x128xf32, #tpu.memory_space<vmem>>, vector<512x128xf32>
    %c0_1 = arith.constant 0 : index
    %c0_2 = arith.constant 0 : index
    %1 = vector.load %arg2[%c0_1, %c0_2] : memref<1x128xf32, #tpu.memory_space<vmem>>, vector<1x128xf32>
    %2 = vector.broadcast %1 : vector<1x128xf32> to vector<512x128xf32>
    %3 = arith.mulf %0, %2 : vector<512x128xf32>
    %c0_3 = arith.constant 0 : index
    %c0_4 = arith.constant 0 : index
    %4 = vector.load %arg3[%c0_3, %c0_4] : memref<1x128xf32, #tpu.memory_space<vmem>>, vector<1x128xf32>
    %5 = vector.broadcast %4 : vector<1x128xf32> to vector<512x128xf32>
    %6 = arith.addf %3, %5 : vector<512x128xf32>
    %cst = arith.constant 0.000000e+00 : f32
    %7 = vector.broadcast %cst : f32 to vector<512x128xf32>
    %8 = arith.maximumf %6, %7 : vector<512x128xf32>
    %c0_5 = arith.constant 0 : index
    %c0_6 = arith.constant 0 : index
    %9 = vector.load %arg4[%c0_5, %c0_6] : memref<512x128xf32, #tpu.memory_space<vmem>>, vector<512x128xf32>
    tpu.vector_store %arg4[%c0_5, %c0_6], %8 {strides = array<i32>} : memref<512x128xf32, #tpu.memory_space<vmem>>, vector<512x128xf32>,
    return
  }
  func.func @transform_0(%arg0: i32) -> (i32, i32) {
    %c0_i32 = arith.constant 0 : i32
    %c0_i32_0 = arith.constant 0 : i32
    return %arg0, %c0_i32 : i32, i32
  }
  func.func @transform_1(%arg0: i32) -> (i32, i32) {
    %c0_i32 = arith.constant 0 : i32
    %c0_i32_0 = arith.constant 0 : i32
    %c0_i32_1 = arith.constant 0 : i32
    return %c0_i32, %c0_i32_0 : i32, i32
  }
  func.func @transform_2(%arg0: i32) -> (i32, i32) {
    %c0_i32 = arith.constant 0 : i32
    %c0_i32_0 = arith.constant 0 : i32
    %c0_i32_1 = arith.constant 0 : i32
    return %c0_i32, %c0_i32_0 : i32, i32
  }
  func.func @transform_3(%arg0: i32) -> (i32, i32) {
    %c0_i32 = arith.constant 0 : i32
    %c0_i32_0 = arith.constant 0 : i32
    return %arg0, %c0_i32 : i32, i32
  }
}

</mosaic_0001>

<llo_original>
// kernel: conv_block_forward.5
$region0: #{conv_block_forward.5}
  #allocation0 [shape = 'u32[]', space=smem, size = 0x4, offset = 0x4, fixed_abs, tag = 'smem constant byte address 0x4 - core index']
  #allocation1 [shape = 'u32[144,128]{1,0:T(1,128)}', space=vmem, size = 0x12000, scoped, tag = 'internal scratch']
  %s0 = inlined_call_operand.vmem [shape: f32[512,128], index: 0, kind: input, shape index: {}]
  %s1 = inlined_call_operand.vmem [shape: f32[1,128], index: 1, kind: input, shape index: {}]
  %s2 = inlined_call_operand.vmem [shape: f32[1,128], index: 2, kind: input, shape index: {}]
  %s3 = inlined_call_operand.vmem [shape: f32[512,128], index: 3, kind: output, shape index: {}]
  %s4 = sld [smem:[#allocation0]]
  $region22: #{conv_block_forward.5} parent=0
    _
  %s6 = ssub.s32 1, %s4
  %s7 = scalar_select 0, %s6, %s4
  // Predicated region
  $region2: #{conv_block_forward.5} parent=0 // pred_check
    _
  $region3: #{conv_block_forward.5} parent=0 // pred_check_branch
    %9 = sbr.rel (0) target = $region5
  $region4: #{conv_block_forward.5} parent=0 // pred_region
    _
  $region5: #{conv_block_forward.5} parent=0 // pred_fallthru
    _
  // Predicated region
  $region6: #{conv_block_forward.5} parent=0 // pred_check
    _
  $region7: #{conv_block_forward.5} parent=0 // pred_check_branch
    %11 = sbr.rel (0) target = $region9
  $region8: #{conv_block_forward.5} parent=0 // pred_region
    _
  $region9: #{conv_block_forward.5} parent=0 // pred_fallthru
    _
  // Predicated region
  $region10: #{conv_block_forward.5} parent=0 // pred_check
    _
  $region11: #{conv_block_forward.5} parent=0 // pred_check_branch
    %13 = sbr.rel (0) target = $region13
  $region12: #{conv_block_forward.5} parent=0 // pred_region
    _
  $region13: #{conv_block_forward.5} parent=0 // pred_fallthru
    _
  %v14 = vld [vmem:[%s0] sm:$0xff]
  %v15 = vld [vmem:[%s0 + $0x8] sm:$0xff]
  %v16 = vld [vmem:[%s0 + $0x10] sm:$0xff]
  %v17 = vld [vmem:[%s0 + $0x18] sm:$0xff]
  %v18 = vld [vmem:[%s0 + $0x20] sm:$0xff]
  %v19 = vld [vmem:[%s0 + $0x28] sm:$0xff]
  %v20 = vld [vmem:[%s0 + $0x30] sm:$0xff]
  %v21 = vld [vmem:[%s0 + $0x38] sm:$0xff]
  %v22 = vld [vmem:[%s0 + $0x40] sm:$0xff]
  %v23 = vld [vmem:[%s0 + $0x48] sm:$0xff]
  %v24 = vld [vmem:[%s0 + $0x50] sm:$0xff]
  %v25 = vld [vmem:[%s0 + $0x58] sm:$0xff]
  %v26 = vld [vmem:[%s0 + $0x60] sm:$0xff]
  %v27 = vld [vmem:[%s0 + $0x68] sm:$0xff]
  %v28 = vld [vmem:[%s0 + $0x70] sm:$0xff]
  %v29 = vld [vmem:[%s0 + $0x78] sm:$0xff]
  %v30 = vld [vmem:[%s0 + $0x80] sm:$0xff]
  %v31 = vld [vmem:[%s0 + $0x88] sm:$0xff]
  %v32 = vld [vmem:[%s0 + $0x90] sm:$0xff]
  %v33 = vld [vmem:[%s0 + $0x98] sm:$0xff]
  %v34 = vld [vmem:[%s0 + $0xa0] sm:$0xff]
  %v35 = vld [vmem:[%s0 + $0xa8] sm:$0xff]
  %v36 = vld [vmem:[%s0 + $0xb0] sm:$0xff]
  %v37 = vld [vmem:[%s0 + $0xb8] sm:$0xff]
  %v38 = vld [vmem:[%s0 + $0xc0] sm:$0xff]
  %v39 = vld [vmem:[%s0 + $0xc8] sm:$0xff]
  %v40 = vld [vmem:[%s0 + $0xd0] sm:$0xff]
  %v41 = vld [vmem:[%s0 + $0xd8] sm:$0xff]
  %v42 = vld [vmem:[%s0 + $0xe0] sm:$0xff]
  %v43 = vld [vmem:[%s0 + $0xe8] sm:$0xff]
  %v44 = vld [vmem:[%s0 + $0xf0] sm:$0xff]
  %v45 = vld [vmem:[%s0 + $0xf8] sm:$0xff]
  %v46 = vld [vmem:[%s0 + $0x100] sm:$0xff]
  %v47 = vld [vmem:[%s0 + $0x108] sm:$0xff]
  %v48 = vld [vmem:[%s0 + $0x110] sm:$0xff]
  %v49 = vld [vmem:[%s0 + $0x118] sm:$0xff]
  %v50 = vld [vmem:[%s0 + $0x120] sm:$0xff]
  %v51 = vld [vmem:[%s0 + $0x128] sm:$0xff]
  %v52 = vld [vmem:[%s0 + $0x130] sm:$0xff]
  %v53 = vld [vmem:[%s0 + $0x138] sm:$0xff]
  %v54 = vld [vmem:[%s0 + $0x140] sm:$0xff]
  %v55 = vld [vmem:[%s0 + $0x148] sm:$0xff]
  %v56 = vld [vmem:[%s0 + $0x150] sm:$0xff]
  %v57 = vld [vmem:[%s0 + $0x158] sm:$0xff]
  %v58 = vld [vmem:[%s0 + $0x160] sm:$0xff]
  %v59 = vld [vmem:[%s0 + $0x168] sm:$0xff]
  %v60 = vld [vmem:[%s0 + $0x170] sm:$0xff]
  %v61 = vld [vmem:[%s0 + $0x178] sm:$0xff]
  %v62 = vld [vmem:[%s0 + $0x180] sm:$0xff]
  %v63 = vld [vmem:[%s0 + $0x188] sm:$0xff]
  %v64 = vld [vmem:[%s0 + $0x190] sm:$0xff]
  %v65 = vld [vmem:[%s0 + $0x198] sm:$0xff]
  %v66 = vld [vmem:[%s0 + $0x1a0] sm:$0xff]
  %v67 = vld [vmem:[%s0 + $0x1a8] sm:$0xff]
  %v68 = vld [vmem:[%s0 + $0x1b0] sm:$0xff]
  %v69 = vld [vmem:[%s0 + $0x1b8] sm:$0xff]
  %v70 = vld [vmem:[%s0 + $0x1c0] sm:$0xff]
  %v71 = vld [vmem:[%s0 + $0x1c8] sm:$0xff]
  %v72 = vld [vmem:[%s0 + $0x1d0] sm:$0xff]
  %v73 = vld [vmem:[%s0 + $0x1d8] sm:$0xff]
  %v74 = vld [vmem:[%s0 + $0x1e0] sm:$0xff]
  %v75 = vld [vmem:[%s0 + $0x1e8] sm:$0xff]
  %v76 = vld [vmem:[%s0 + $0x1f0] sm:$0xff]
  %v77 = vld [vmem:[%s0 + $0x1f8] sm:$0xff]
  %v78 = vld [vmem:[%s1] sm:$0x1]
  %v80 = vlaneseq
  %v81 = vshrl.u32 %v80, 7
  %v82 = vsub.s32 0, %v81
  %v83 = vrot.slane %v78, %v82
  %v85 = vmul.f32 %v14, %v83
  %v86 = vmul.f32 %v15, %v83
  %v87 = vmul.f32 %v16, %v83
  %v88 = vmul.f32 %v17, %v83
  %v89 = vmul.f32 %v18, %v83
  %v90 = vmul.f32 %v19, %v83
  %v91 = vmul.f32 %v20, %v83
  %v92 = vmul.f32 %v21, %v83
  %v93 = vmul.f32 %v22, %v83
  %v94 = vmul.f32 %v23, %v83
  %v95 = vmul.f32 %v24, %v83
  %v96 = vmul.f32 %v25, %v83
  %v97 = vmul.f32 %v26, %v83
  %v98 = vmul.f32 %v27, %v83
  %v99 = vmul.f32 %v28, %v83
  %v100 = vmul.f32 %v29, %v83
  %v101 = vmul.f32 %v30, %v83
  %v102 = vmul.f32 %v31, %v83
  %v103 = vmul.f32 %v32, %v83
  %v104 = vmul.f32 %v33, %v83
  %v105 = vmul.f32 %v34, %v83
  %v106 = vmul.f32 %v35, %v83
  %v107 = vmul.f32 %v36, %v83
  %v108 = vmul.f32 %v37, %v83
  %v109 = vmul.f32 %v38, %v83
  %v110 = vmul.f32 %v39, %v83
  %v111 = vmul.f32 %v40, %v83
  %v112 = vmul.f32 %v41, %v83
  %v113 = vmul.f32 %v42, %v83
  %v114 = vmul.f32 %v43, %v83
  %v115 = vmul.f32 %v44, %v83
  %v116 = vmul.f32 %v45, %v83
  %v117 = vmul.f32 %v46, %v83
  %v118 = vmul.f32 %v47, %v83
  %v119 = vmul.f32 %v48, %v83
  %v120 = vmul.f32 %v49, %v83
  %v121 = vmul.f32 %v50, %v83
  %v122 = vmul.f32 %v51, %v83
  %v123 = vmul.f32 %v52, %v83
  %v124 = vmul.f32 %v53, %v83
  %v125 = vmul.f32 %v54, %v83
  %v126 = vmul.f32 %v55, %v83
  %v127 = vmul.f32 %v56, %v83
  %v128 = vmul.f32 %v57, %v83
  %v129 = vmul.f32 %v58, %v83
  %v130 = vmul.f32 %v59, %v83
  %v131 = vmul.f32 %v60, %v83
  %v132 = vmul.f32 %v61, %v83
  %v133 = vmul.f32 %v62, %v83
  %v134 = vmul.f32 %v63, %v83
  %v135 = vmul.f32 %v64, %v83
  %v136 = vmul.f32 %v65, %v83
  %v137 = vmul.f32 %v66, %v83
  %v138 = vmul.f32 %v67, %v83
  %v139 = vmul.f32 %v68, %v83
  %v140 = vmul.f32 %v69, %v83
  %v141 = vmul.f32 %v70, %v83
  %v142 = vmul.f32 %v71, %v83
  %v143 = vmul.f32 %v72, %v83
  %v144 = vmul.f32 %v73, %v83
  %v145 = vmul.f32 %v74, %v83
  %v146 = vmul.f32 %v75, %v83
  %v147 = vmul.f32 %v76, %v83
  %v148 = vmul.f32 %v77, %v83
  %v149 = vld [vmem:[%s2] sm:$0x1]
  %v151 = vlaneseq
  %v152 = vshrl.u32 %v151, 7
  %v153 = vsub.s32 0, %v152
  %v154 = vrot.slane %v149, %v153
  %v156 = vadd.f32 %v85, %v154
  %v157 = vadd.f32 %v86, %v154
  %v158 = vadd.f32 %v87, %v154
  %v159 = vadd.f32 %v88, %v154
  %v160 = vadd.f32 %v89, %v154
  %v161 = vadd.f32 %v90, %v154
  %v162 = vadd.f32 %v91, %v154
  %v163 = vadd.f32 %v92, %v154
  %v164 = vadd.f32 %v93, %v154
  %v165 = vadd.f32 %v94, %v154
  %v166 = vadd.f32 %v95, %v154
  %v167 = vadd.f32 %v96, %v154
  %v168 = vadd.f32 %v97, %v154
  %v169 = vadd.f32 %v98, %v154
  %v170 = vadd.f32 %v99, %v154
  %v171 = vadd.f32 %v100, %v154
  %v172 = vadd.f32 %v101, %v154
  %v173 = vadd.f32 %v102, %v154
  %v174 = vadd.f32 %v103, %v154
  %v175 = vadd.f32 %v104, %v154
  %v176 = vadd.f32 %v105, %v154
  %v177 = vadd.f32 %v106, %v154
  %v178 = vadd.f32 %v107, %v154
  %v179 = vadd.f32 %v108, %v154
  %v180 = vadd.f32 %v109, %v154
  %v181 = vadd.f32 %v110, %v154
  %v182 = vadd.f32 %v111, %v154
  %v183 = vadd.f32 %v112, %v154
  %v184 = vadd.f32 %v113, %v154
  %v185 = vadd.f32 %v114, %v154
  %v186 = vadd.f32 %v115, %v154
  %v187 = vadd.f32 %v116, %v154
  %v188 = vadd.f32 %v117, %v154
  %v189 = vadd.f32 %v118, %v154
  %v190 = vadd.f32 %v119, %v154
  %v191 = vadd.f32 %v120, %v154
  %v192 = vadd.f32 %v121, %v154
  %v193 = vadd.f32 %v122, %v154
  %v194 = vadd.f32 %v123, %v154
  %v195 = vadd.f32 %v124, %v154
  %v196 = vadd.f32 %v125, %v154
  %v197 = vadd.f32 %v126, %v154
  %v198 = vadd.f32 %v127, %v154
  %v199 = vadd.f32 %v128, %v154
  %v200 = vadd.f32 %v129, %v154
  %v201 = vadd.f32 %v130, %v154
  %v202 = vadd.f32 %v131, %v154
  %v203 = vadd.f32 %v132, %v154
  %v204 = vadd.f32 %v133, %v154
  %v205 = vadd.f32 %v134, %v154
  %v206 = vadd.f32 %v135, %v154
  %v207 = vadd.f32 %v136, %v154
  %v208 = vadd.f32 %v137, %v154
  %v209 = vadd.f32 %v138, %v154
  %v210 = vadd.f32 %v139, %v154
  %v211 = vadd.f32 %v140, %v154
  %v212 = vadd.f32 %v141, %v154
  %v213 = vadd.f32 %v142, %v154
  %v214 = vadd.f32 %v143, %v154
  %v215 = vadd.f32 %v144, %v154
  %v216 = vadd.f32 %v145, %v154
  %v217 = vadd.f32 %v146, %v154
  %v218 = vadd.f32 %v147, %v154
  %v219 = vadd.f32 %v148, %v154
  %v220 = vmax.f32 %v156, 0.0
  %v221 = vmax.f32 %v157, 0.0
  %v222 = vmax.f32 %v158, 0.0
  %v223 = vmax.f32 %v159, 0.0
  %v224 = vmax.f32 %v160, 0.0
  %v225 = vmax.f32 %v161, 0.0
  %v226 = vmax.f32 %v162, 0.0
  %v227 = vmax.f32 %v163, 0.0
  %v228 = vmax.f32 %v164, 0.0
  %v229 = vmax.f32 %v165, 0.0
  %v230 = vmax.f32 %v166, 0.0
  %v231 = vmax.f32 %v167, 0.0
  %v232 = vmax.f32 %v168, 0.0
  %v233 = vmax.f32 %v169, 0.0
  %v234 = vmax.f32 %v170, 0.0
  %v235 = vmax.f32 %v171, 0.0
  %v236 = vmax.f32 %v172, 0.0
  %v237 = vmax.f32 %v173, 0.0
  %v238 = vmax.f32 %v174, 0.0
  %v239 = vmax.f32 %v175, 0.0
  %v240 = vmax.f32 %v176, 0.0
  %v241 = vmax.f32 %v177, 0.0
  %v242 = vmax.f32 %v178, 0.0
  %v243 = vmax.f32 %v179, 0.0
  %v244 = vmax.f32 %v180, 0.0
  %v245 = vmax.f32 %v181, 0.0
  %v246 = vmax.f32 %v182, 0.0
  %v247 = vmax.f32 %v183, 0.0
  %v248 = vmax.f32 %v184, 0.0
  %v249 = vmax.f32 %v185, 0.0
  %v250 = vmax.f32 %v186, 0.0
  %v251 = vmax.f32 %v187, 0.0
  %v252 = vmax.f32 %v188, 0.0
  %v253 = vmax.f32 %v189, 0.0
  %v254 = vmax.f32 %v190, 0.0
  %v255 = vmax.f32 %v191, 0.0
  %v256 = vmax.f32 %v192, 0.0
  %v257 = vmax.f32 %v193, 0.0
  %v258 = vmax.f32 %v194, 0.0
  %v259 = vmax.f32 %v195, 0.0
  %v260 = vmax.f32 %v196, 0.0
  %v261 = vmax.f32 %v197, 0.0
  %v262 = vmax.f32 %v198, 0.0
  %v263 = vmax.f32 %v199, 0.0
  %v264 = vmax.f32 %v200, 0.0
  %v265 = vmax.f32 %v201, 0.0
  %v266 = vmax.f32 %v202, 0.0
  %v267 = vmax.f32 %v203, 0.0
  %v268 = vmax.f32 %v204, 0.0
  %v269 = vmax.f32 %v205, 0.0
  %v270 = vmax.f32 %v206, 0.0
  %v271 = vmax.f32 %v207, 0.0
  %v272 = vmax.f32 %v208, 0.0
  %v273 = vmax.f32 %v209, 0.0
  %v274 = vmax.f32 %v210, 0.0
  %v275 = vmax.f32 %v211, 0.0
  %v276 = vmax.f32 %v212, 0.0
  %v277 = vmax.f32 %v213, 0.0
  %v278 = vmax.f32 %v214, 0.0
  %v279 = vmax.f32 %v215, 0.0
  %v280 = vmax.f32 %v216, 0.0
  %v281 = vmax.f32 %v217, 0.0
  %v282 = vmax.f32 %v218, 0.0
  %v283 = vmax.f32 %v219, 0.0
  %284 = vst [vmem:[%s3] sm:$0xff] %v220
  %285 = vst [vmem:[%s3 + $0x8] sm:$0xff] %v221
  %286 = vst [vmem:[%s3 + $0x10] sm:$0xff] %v222
  %287 = vst [vmem:[%s3 + $0x18] sm:$0xff] %v223
  %288 = vst [vmem:[%s3 + $0x20] sm:$0xff] %v224
  %289 = vst [vmem:[%s3 + $0x28] sm:$0xff] %v225
  %290 = vst [vmem:[%s3 + $0x30] sm:$0xff] %v226
  %291 = vst [vmem:[%s3 + $0x38] sm:$0xff] %v227
  %292 = vst [vmem:[%s3 + $0x40] sm:$0xff] %v228
  %293 = vst [vmem:[%s3 + $0x48] sm:$0xff] %v229
  %294 = vst [vmem:[%s3 + $0x50] sm:$0xff] %v230
  %295 = vst [vmem:[%s3 + $0x58] sm:$0xff] %v231
  %296 = vst [vmem:[%s3 + $0x60] sm:$0xff] %v232
  %297 = vst [vmem:[%s3 + $0x68] sm:$0xff] %v233
  %298 = vst [vmem:[%s3 + $0x70] sm:$0xff] %v234
  %299 = vst [vmem:[%s3 + $0x78] sm:$0xff] %v235
  %300 = vst [vmem:[%s3 + $0x80] sm:$0xff] %v236
  %301 = vst [vmem:[%s3 + $0x88] sm:$0xff] %v237
  %302 = vst [vmem:[%s3 + $0x90] sm:$0xff] %v238
  %303 = vst [vmem:[%s3 + $0x98] sm:$0xff] %v239
  %304 = vst [vmem:[%s3 + $0xa0] sm:$0xff] %v240
  %305 = vst [vmem:[%s3 + $0xa8] sm:$0xff] %v241
  %306 = vst [vmem:[%s3 + $0xb0] sm:$0xff] %v242
  %307 = vst [vmem:[%s3 + $0xb8] sm:$0xff] %v243
  %308 = vst [vmem:[%s3 + $0xc0] sm:$0xff] %v244
  %309 = vst [vmem:[%s3 + $0xc8] sm:$0xff] %v245
  %310 = vst [vmem:[%s3 + $0xd0] sm:$0xff] %v246
  %311 = vst [vmem:[%s3 + $0xd8] sm:$0xff] %v247
  %312 = vst [vmem:[%s3 + $0xe0] sm:$0xff] %v248
  %313 = vst [vmem:[%s3 + $0xe8] sm:$0xff] %v249
  %314 = vst [vmem:[%s3 + $0xf0] sm:$0xff] %v250
  %315 = vst [vmem:[%s3 + $0xf8] sm:$0xff] %v251
  %316 = vst [vmem:[%s3 + $0x100] sm:$0xff] %v252
  %317 = vst [vmem:[%s3 + $0x108] sm:$0xff] %v253
  %318 = vst [vmem:[%s3 + $0x110] sm:$0xff] %v254
  %319 = vst [vmem:[%s3 + $0x118] sm:$0xff] %v255
  %320 = vst [vmem:[%s3 + $0x120] sm:$0xff] %v256
  %321 = vst [vmem:[%s3 + $0x128] sm:$0xff] %v257
  %322 = vst [vmem:[%s3 + $0x130] sm:$0xff] %v258
  %323 = vst [vmem:[%s3 + $0x138] sm:$0xff] %v259
  %324 = vst [vmem:[%s3 + $0x140] sm:$0xff] %v260
  %325 = vst [vmem:[%s3 + $0x148] sm:$0xff] %v261
  %326 = vst [vmem:[%s3 + $0x150] sm:$0xff] %v262
  %327 = vst [vmem:[%s3 + $0x158] sm:$0xff] %v263
  %328 = vst [vmem:[%s3 + $0x160] sm:$0xff] %v264
  %329 = vst [vmem:[%s3 + $0x168] sm:$0xff] %v265
  %330 = vst [vmem:[%s3 + $0x170] sm:$0xff] %v266
  %331 = vst [vmem:[%s3 + $0x178] sm:$0xff] %v267
  %332 = vst [vmem:[%s3 + $0x180] sm:$0xff] %v268
  %333 = vst [vmem:[%s3 + $0x188] sm:$0xff] %v269
  %334 = vst [vmem:[%s3 + $0x190] sm:$0xff] %v270
  %335 = vst [vmem:[%s3 + $0x198] sm:$0xff] %v271
  %336 = vst [vmem:[%s3 + $0x1a0] sm:$0xff] %v272
  %337 = vst [vmem:[%s3 + $0x1a8] sm:$0xff] %v273
  %338 = vst [vmem:[%s3 + $0x1b0] sm:$0xff] %v274
  %339 = vst [vmem:[%s3 + $0x1b8] sm:$0xff] %v275
  %340 = vst [vmem:[%s3 + $0x1c0] sm:$0xff] %v276
  %341 = vst [vmem:[%s3 + $0x1c8] sm:$0xff] %v277
  %342 = vst [vmem:[%s3 + $0x1d0] sm:$0xff] %v278
  %343 = vst [vmem:[%s3 + $0x1d8] sm:$0xff] %v279
  %344 = vst [vmem:[%s3 + $0x1e0] sm:$0xff] %v280
  %345 = vst [vmem:[%s3 + $0x1e8] sm:$0xff] %v281
  %346 = vst [vmem:[%s3 + $0x1f0] sm:$0xff] %v282
  %347 = vst [vmem:[%s3 + $0x1f8] sm:$0xff] %v283
  // Predicated region
  $region14: #{conv_block_forward.5} parent=0 // pred_check
    _
  $region15: #{conv_block_forward.5} parent=0 // pred_check_branch
    %349 = sbr.rel (0) target = $region17
  $region16: #{conv_block_forward.5} parent=0 // pred_region
    _
  $region17: #{conv_block_forward.5} parent=0 // pred_fallthru
    _
  // Predicated region
  $region18: #{conv_block_forward.5} parent=0 // pred_check
    _
  $region19: #{conv_block_forward.5} parent=0 // pred_check_branch
    %351 = sbr.rel (0) target = $region21
  $region20: #{conv_block_forward.5} parent=0 // pred_region
    _
  $region21: #{conv_block_forward.5} parent=0 // pred_fallthru
    _

// kernel: conv_block_forward.3
$region0: #{conv_block_forward.3}
  #allocation0 [shape = 'u32[]', space=smem, size = 0x4, offset = 0x4, fixed_abs, tag = 'smem constant byte address 0x4 - core index']
  #allocation1 [shape = 'u32[144,128]{1,0:T(1,128)}', space=vmem, size = 0x12000, scoped, tag = 'internal scratch']
  #allocation2 [shape = 'f32[10,18,128]{2,1,0:T(8,128)}', space=vmem, size = 0x1e000, scoped, tag = 'scratch operand']
  #allocation4 [shape = 's32[]', space=sflag, size = 0x4, offset = 0, fixed_abs, tag = 'sflag constant byte address 0x0 - dummy sync flag']
  %s0 = inlined_call_operand.vmem [shape: f32[2,18,18,128], index: 0, kind: input, shape index: {}]
  %s1 = inlined_call_operand.vmem [shape: bf16[1152,128], index: 1, kind: input, shape index: {}]
  %s2 = inlined_call_operand.vmem [shape: f32[1,128], index: 2, kind: input, shape index: {}]
  %s3 = inlined_call_operand.vmem [shape: f32[1,128], index: 3, kind: input, shape index: {}]
  %s4 = inlined_call_operand.vmem [shape: f32[1,128], index: 4, kind: input, shape index: {}]
  %s5 = inlined_call_operand.vmem [shape: f32[2,16,16,128], index: 5, kind: output, shape index: {0}]
  %s6 = inlined_call_operand.vmem [shape: f32[2,1,128], index: 6, kind: output, shape index: {1}]
  %s7 = inlined_call_operand.vmem [shape: f32[2,1,128], index: 7, kind: output, shape index: {2}]
  %8 = xla_tuple %s5, %s6, %s7
  %s9 = sld [smem:[#allocation0]]
  $region107: #{conv_block_forward.3} parent=0
    _
  %s11 = ssub.s32 1, %s9
  %s12 = scalar_select 0, %s11, %s9
  loop: start=0, step=1, limit=6
  $region2: #{conv_block_forward.3} parent=0 // loop_pre_header
    _
  $region3: #{conv_block_forward.3} parent=0 // loop_header
    %s14 = sphi 0, %s18
    %p15 = scmp.ge.s32.totalorder %s14, 6
    %s21 = sphi 0, %s33
    %s22 = sphi 0, %s29
    %s23 = sphi 0, %s21
    %s24 = sphi 0, %s22
    %s25 = sphi 0, %s23
    %s26 = sphi 0, %s24
    %s34 = sphi 0, %s34
    %s36 = sphi 0, %s34
    %s37 = sphi 0, %s36
    %s51 = sphi 0, %s37
    %s55 = sphi 0, %s55
    %s57 = sphi 0, %s55
    %s58 = sphi 0, %s57
    %s72 = sphi 0, %s58
    %s76 = sphi 0, %s76
    %s78 = sphi 0, %s76
    %s79 = sphi 0, %s78
    %s93 = sphi 0, %s79
    %s97 = sphi 0, %s97
    %s99 = sphi 0, %s97
    %s100 = sphi 0, %s99
    %s114 = sphi 0, %s100
    %s122 = sphi 0, %s124
    %s125 = sphi 0, %s122
    %s126 = sphi 0, %s125
    %s142 = sphi 0, %s126
    %s148 = sphi 0, %s150
    %s151 = sphi 0, %s148
    %s152 = sphi 0, %s151
    %s168 = sphi 0, %s152
    %s174 = sphi 0, %s176
    %s177 = sphi 0, %s174
    %s178 = sphi 0, %s177
    %s194 = sphi 0, %s178
  $region4: #{conv_block_forward.3} parent=0 // loop_header_branch
    %17 = sbr.rel (%p15) target = $region8
  $region5: #{conv_block_forward.3} parent=0 // loop_body
    %s19 = ssub.s32 %s14, 1
    %s20 = ssub.s32 %s14, 2
    %s27 = sadd.s32 1, %s22
    %p28 = scmp.ge.s32.totalorder %s27, 2
    %s29 = scalar_select %p28, 0, %s27
    %s30 = sadd.s32 1, %s21
    %s31 = scalar_select %p28, %s30, %s21
    %p32 = scmp.ge.s32.totalorder %s31, 2
    %s33 = scalar_select %p32, 0, %s31
    %s35 = sadd.s32 %s34, 1
    %p38 = scmp.eq.s32.totalorder %s14, 3
    %p39 = scmp.ne.s32.totalorder %s34, %s36
    %p40 = scmp.eq.s32.totalorder %s14, 0
    %p41 = por %p39, %p40
    %p42 = scmp.ne.s32.totalorder %s34, %s36
    %p43 = scmp.eq.s32.totalorder %s19, 3
    %p44 = por %p42, %p43
    %p45 = scmp.ne.s32.totalorder %s36, %s37
    %p46 = scmp.eq.s32.totalorder %s19, 0
    %p47 = por %p45, %p46
    %p48 = scmp.ne.s32.totalorder %s36, %s37
    %p49 = scmp.eq.s32.totalorder %s20, 3
    %p50 = por %p48, %p49
    %p52 = scmp.ne.s32.totalorder %s37, %s51
    %p53 = scmp.eq.s32.totalorder %s20, 0
    %p54 = por %p52, %p53
    %s56 = sadd.s32 %s55, 1
    %p59 = scmp.eq.s32.totalorder %s14, 3
    %p60 = scmp.ne.s32.totalorder %s55, %s57
    %p61 = scmp.eq.s32.totalorder %s14, 0
    %p62 = por %p60, %p61
    %p63 = scmp.ne.s32.totalorder %s55, %s57
    %p64 = scmp.eq.s32.totalorder %s19, 3
    %p65 = por %p63, %p64
    %p66 = scmp.ne.s32.totalorder %s57, %s58
    %p67 = scmp.eq.s32.totalorder %s19, 0
    %p68 = por %p66, %p67
    %p69 = scmp.ne.s32.totalorder %s57, %s58
    %p70 = scmp.eq.s32.totalorder %s20, 3
    %p71 = por %p69, %p70
    %p73 = scmp.ne.s32.totalorder %s58, %s72
    %p74 = scmp.eq.s32.totalorder %s20, 0
    %p75 = por %p73, %p74
    %s77 = sadd.s32 %s76, 1
    %p80 = scmp.eq.s32.totalorder %s14, 3
    %p81 = scmp.ne.s32.totalorder %s76, %s78
    %p82 = scmp.eq.s32.totalorder %s14, 0
    %p83 = por %p81, %p82
    %p84 = scmp.ne.s32.totalorder %s76, %s78
    %p85 = scmp.eq.s32.totalorder %s19, 3
    %p86 = por %p84, %p85
    %p87 = scmp.ne.s32.totalorder %s78, %s79
    %p88 = scmp.eq.s32.totalorder %s19, 0
    %p89 = por %p87, %p88
    %p90 = scmp.ne.s32.totalorder %s78, %s79
    %p91 = scmp.eq.s32.totalorder %s20, 3
    %p92 = por %p90, %p91
    %p94 = scmp.ne.s32.totalorder %s79, %s93
    %p95 = scmp.eq.s32.totalorder %s20, 0
    %p96 = por %p94, %p95
    %s98 = sadd.s32 %s97, 1
    %p101 = scmp.eq.s32.totalorder %s14, 3
    %p102 = scmp.ne.s32.totalorder %s97, %s99
    %p103 = scmp.eq.s32.totalorder %s14, 0
    %p104 = por %p102, %p103
    %p105 = scmp.ne.s32.totalorder %s97, %s99
    %p106 = scmp.eq.s32.totalorder %s19, 3
    %p107 = por %p105, %p106
    %p108 = scmp.ne.s32.totalorder %s99, %s100
    %p109 = scmp.eq.s32.totalorder %s19, 0
    %p110 = por %p108, %p109
    %p111 = scmp.ne.s32.totalorder %s99, %s100
    %p112 = scmp.eq.s32.totalorder %s20, 3
    %p113 = por %p111, %p112
    %p115 = scmp.ne.s32.totalorder %s100, %s114
    %p116 = scmp.eq.s32.totalorder %s20, 0
    %p117 = por %p115, %p116
    %s118 = ssub.s32 %s21, %s33
    %s119 = ssub.s32 %s22, %s29
    %s120 = sor.u32 %s118, %s119
    %p121 = scmp.eq.s32.totalorder %s120, 0
    %s123 = sadd.s32 %s122, 1
    %s124 = scalar_select %p121, %s122, %s123
    %p127 = pneg %p121
    %p128 = scmp.eq.s32.totalorder %s14, 3
    %p129 = por %p127, %p128
    %p130 = scmp.ne.s32.totalorder %s122, %s125
    %p131 = scmp.eq.s32.totalorder %s14, 0
    %p132 = por %p130, %p131
    %p133 = scmp.ne.s32.totalorder %s122, %s125
    %p134 = scmp.eq.s32.totalorder %s19, 3
    %p135 = por %p133, %p134
    %p136 = scmp.ne.s32.totalorder %s125, %s126
    %p137 = scmp.eq.s32.totalorder %s19, 0
    %p138 = por %p136, %p137
    %p139 = scmp.ne.s32.totalorder %s125, %s126
    %p140 = scmp.eq.s32.totalorder %s20, 3
    %p141 = por %p139, %p140
    %p143 = scmp.ne.s32.totalorder %s126, %s142
    %p144 = scmp.eq.s32.totalorder %s20, 0
    %p145 = por %p143, %p144
    %s146 = ssub.s32 %s21, %s33
    %p147 = scmp.eq.s32.totalorder %s146, 0
    %s149 = sadd.s32 %s148, 1
    %s150 = scalar_select %p147, %s148, %s149
    %p153 = pneg %p147
    %p154 = scmp.eq.s32.totalorder %s14, 3
    %p155 = por %p153, %p154
    %p156 = scmp.ne.s32.totalorder %s148, %s151
    %p157 = scmp.eq.s32.totalorder %s14, 0
    %p158 = por %p156, %p157
    %p159 = scmp.ne.s32.totalorder %s148, %s151
    %p160 = scmp.eq.s32.totalorder %s19, 3
    %p161 = por %p159, %p160
    %p162 = scmp.ne.s32.totalorder %s151, %s152
    %p163 = scmp.eq.s32.totalorder %s19, 0
    %p164 = por %p162, %p163
    %p165 = scmp.ne.s32.totalorder %s151, %s152
    %p166 = scmp.eq.s32.totalorder %s20, 3
    %p167 = por %p165, %p166
    %p169 = scmp.ne.s32.totalorder %s152, %s168
    %p170 = scmp.eq.s32.totalorder %s20, 0
    %p171 = por %p169, %p170
    %s172 = ssub.s32 %s21, %s33
    %p173 = scmp.eq.s32.totalorder %s172, 0
    %s175 = sadd.s32 %s174, 1
    %s176 = scalar_select %p173, %s174, %s175
    %p179 = pneg %p173
    %p180 = scmp.eq.s32.totalorder %s14, 3
    %p181 = por %p179, %p180
    %p182 = scmp.ne.s32.totalorder %s174, %s177
    %p183 = scmp.eq.s32.totalorder %s14, 0
    %p184 = por %p182, %p183
    %p185 = scmp.ne.s32.totalorder %s174, %s177
    %p186 = scmp.eq.s32.totalorder %s19, 3
    %p187 = por %p185, %p186
    %p188 = scmp.ne.s32.totalorder %s177, %s178
    %p189 = scmp.eq.s32.totalorder %s19, 0
    %p190 = por %p188, %p189
    %p191 = scmp.ne.s32.totalorder %s177, %s178
    %p192 = scmp.eq.s32.totalorder %s20, 3
    %p193 = por %p191, %p192
    %p195 = scmp.ne.s32.totalorder %s178, %s194
    %p196 = scmp.eq.s32.totalorder %s20, 0
    %p197 = por %p195, %p196
    %p198 = scmp.le.s32.totalorder 1, %s14
    %p199 = scmp.lt.s32.totalorder %s14, 5
    %p200 = pnand %p198, %p199
    %p201 = pneg %p200
    // Predicated region
    $region9: #{conv_block_forward.3} parent=5 // pred_check
      _
    $region10: #{conv_block_forward.3} parent=5 // pred_check_branch
      %203 = sbr.rel (%p200) target = $region12
    $region11: #{conv_block_forward.3} parent=5 // pred_region
      %s204 = ssub.s32 %s14, 1
      // Predicated region
      $region13: #{conv_block_forward.3} parent=11 // pred_check
        %p205 = pneg %p47
      $region14: #{conv_block_forward.3} parent=11 // pred_check_branch
        %207 = sbr.rel (%p205) target = $region16
      $region15: #{conv_block_forward.3} parent=11 // pred_region
        _
      $region16: #{conv_block_forward.3} parent=11 // pred_fallthru
        _
      // Predicated region
      $region17: #{conv_block_forward.3} parent=11 // pred_check
        %p208 = pneg %p68
      $region18: #{conv_block_forward.3} parent=11 // pred_check_branch
        %210 = sbr.rel (%p208) target = $region20
      $region19: #{conv_block_forward.3} parent=11 // pred_region
        _
      $region20: #{conv_block_forward.3} parent=11 // pred_fallthru
        _
      // Predicated region
      $region21: #{conv_block_forward.3} parent=11 // pred_check
        %p211 = pneg %p89
      $region22: #{conv_block_forward.3} parent=11 // pred_check_branch
        %213 = sbr.rel (%p211) target = $region24
      $region23: #{conv_block_forward.3} parent=11 // pred_region
        _
      $region24: #{conv_block_forward.3} parent=11 // pred_fallthru
        _
      // Predicated region
      $region25: #{conv_block_forward.3} parent=11 // pred_check
        %p214 = pneg %p110
      $region26: #{conv_block_forward.3} parent=11 // pred_check_branch
        %216 = sbr.rel (%p214) target = $region28
      $region27: #{conv_block_forward.3} parent=11 // pred_region
        _
      $region28: #{conv_block_forward.3} parent=11 // pred_fallthru
        _
    $region12: #{conv_block_forward.3} parent=5 // pred_fallthru
      _
    %p217 = scmp.lt.s32.totalorder %s14, 4
    // Predicated region
    $region29: #{conv_block_forward.3} parent=5 // pred_check
      %p218 = pneg %p217
    $region30: #{conv_block_forward.3} parent=5 // pred_check_branch
      %220 = sbr.rel (%p218) target = $region32
    $region31: #{conv_block_forward.3} parent=5 // pred_region
      _
    $region32: #{conv_block_forward.3} parent=5 // pred_fallthru
      _
    %p221 = scmp.le.s32.totalorder 1, %s14
    %p222 = scmp.lt.s32.totalorder %s14, 5
    %p223 = pnand %p221, %p222
    %p224 = pneg %p223
    // Predicated region
    $region33: #{conv_block_forward.3} parent=5 // pred_check
      _
    $region34: #{conv_block_forward.3} parent=5 // pred_check_branch
      %226 = sbr.rel (%p223) target = $region36
    $region35: #{conv_block_forward.3} parent=5 // pred_region
      %s227 = ssub.s32 %s14, 1
      %p228 = pneg %p47
      %p229 = pneg %p44
      %p230 = pneg %p68
      %p231 = pneg %p65
      %p232 = pneg %p89
      %p233 = pneg %p86
      %p234 = pneg %p110
      %p235 = pneg %p107
      %p236 = pneg %p138
      %p237 = pneg %p135
      %s238 = smul.u32 8, %s24
      %p239 = scmp.lt.s32.totalorder %s23, 1
      %s240 = scalar_select %p239, %s23, 1
      %p241 = scmp.lt.s32.totalorder %s238, 15
      %s242 = scalar_select %p241, %s238, 15
      %s243 = smul.addr %s242, 2
      %s244 = smul.addr %s240, 32
      %s245 = sadd.s32 %s243, %s244
      %s246 = smul.addr %s245, 8
      %s247 = scalar_lea.vmem %s5, %s246
      %p248 = pneg %p164
      %p249 = pneg %p161
      %p250 = scmp.lt.s32.totalorder %s23, 1
      %s251 = scalar_select %p250, %s23, 1
      %s252 = scalar_lea.vmem %s6, %s251
      %p253 = pneg %p190
      %p254 = pneg %p187
      %p255 = scmp.lt.s32.totalorder %s23, 1
      %s256 = scalar_select %p255, %s23, 1
      %s257 = scalar_lea.vmem %s7, %s256
      %s258 = smul.u32 8, %s24
      %p259 = scmp.lt.s32.totalorder %s23, 1
      %s260 = scalar_select %p259, %s23, 1
      %p261 = scmp.lt.s32.totalorder %s258, 15
      %s262 = scalar_select %p261, %s258, 15
      %s263 = smul.addr %s262, 2
      %s264 = smul.addr %s260, 32
      %s265 = sadd.s32 %s263, %s264
      %s266 = smul.addr %s265, 8
      %s267 = scalar_lea.vmem %s5, %s266
      %s268 = smul.u32 8, %s24
      %p269 = scmp.lt.s32.totalorder %s23, 1
      %s270 = scalar_select %p269, %s23, 1
      %s271 = scalar_lea.vmem %s6, %s270
      %p272 = scmp.lt.s32.totalorder %s23, 1
      %s273 = scalar_select %p272, %s23, 1
      %s274 = scalar_lea.vmem %s7, %s273
      %s276 = smul.u32 %s24, 8
      $region37: #{conv_block_forward.3} parent=35
        #allocation3 [shape = 's32[1]{0}', space=sflag, size = 0x4, scoped, tag = 'scoped memory for conv_block_forward.3']
        %s277 = smul.u32 %s276, 24
        %s278 = smul.u32 %s23, 432
        %s279 = sadd.s32 %s277, %s278
        %s280 = scalar_lea.vmem %s0, %s279
        %p282 = scmp.lt.u32.totalorder 18, 8
        %p283 = pneg %p282
        // Predicated region
        $region38: #{conv_block_forward.3} parent=37 // pred_check
          _
        $region39: #{conv_block_forward.3} parent=37 // pred_check_branch
          %285 = sbr.rel (%p282) target = $region41
        $region40: #{conv_block_forward.3} parent=37 // pred_region
          %s318 = sand.u32 18, 7
          %p319 = scmp.eq.s32.totalorder %s318, 0
          %p320 = pneg %p319
          // Predicated region
          $region53: #{conv_block_forward.3} parent=40 // pred_check
            _
          $region54: #{conv_block_forward.3} parent=40 // pred_check_branch
            %322 = sbr.rel (%p319) target = $region56
          $region55: #{conv_block_forward.3} parent=40 // pred_region
            %s323 = sand.u32 18, 7
            %s324 = ssub.s32 18, %s323
            %s325 = scalar_lea.vmem %s280, %s324
            %s326 = ssub.s32 18, %s323
            %s327 = scalar_lea.vmem [#allocation2], %s326
            loop: start=0, step=1, limit=1
            $region57: #{conv_block_forward.3} parent=55 // loop_pre_header
              _
            $region58: #{conv_block_forward.3} parent=55 // loop_header
              %s329 = sphi 0, %s333
              %p330 = scmp.ge.s32.totalorder %s329, 1
              %s334 = sphi %s280, %s280
              %s335 = sphi [#allocation2], [#allocation2]
            $region59: #{conv_block_forward.3} parent=55 // loop_header_branch
              %332 = sbr.rel (%p330) target = $region63
            $region60: #{conv_block_forward.3} parent=55 // loop_body
              %v336 = vld [vmem:[%s334] sm:$0xff]
              %337 = vst [vmem:[%s335] sm:$0xff] %v336
              %v338 = vld [vmem:[%s334 + $0x8] sm:$0xff]
              %339 = vst [vmem:[%s335 + $0x8] sm:$0xff] %v338
              %v340 = vld [vmem:[%s334 + $0x18] sm:$0xff]
              %341 = vst [vmem:[%s335 + $0x18] sm:$0xff] %v340
              %v342 = vld [vmem:[%s334 + $0x20] sm:$0xff]
              %343 = vst [vmem:[%s335 + $0x20] sm:$0xff] %v342
              %v344 = vld [vmem:[%s334 + $0x30] sm:$0xff]
              %345 = vst [vmem:[%s335 + $0x30] sm:$0xff] %v344
              %v346 = vld [vmem:[%s334 + $0x38] sm:$0xff]
              %347 = vst [vmem:[%s335 + $0x38] sm:$0xff] %v346
              %v348 = vld [vmem:[%s334 + $0x48] sm:$0xff]
              %349 = vst [vmem:[%s335 + $0x48] sm:$0xff] %v348
              %v350 = vld [vmem:[%s334 + $0x50] sm:$0xff]
              %351 = vst [vmem:[%s335 + $0x50] sm:$0xff] %v350
              %v352 = vld [vmem:[%s334 + $0x60] sm:$0xff]
              %353 = vst [vmem:[%s335 + $0x60] sm:$0xff] %v352
              %v354 = vld [vmem:[%s334 + $0x68] sm:$0xff]
              %355 = vst [vmem:[%s335 + $0x68] sm:$0xff] %v354
              %v356 = vld [vmem:[%s334 + $0x78] sm:$0xff]
              %357 = vst [vmem:[%s335 + $0x78] sm:$0xff] %v356
              %v358 = vld [vmem:[%s334 + $0x80] sm:$0xff]
              %359 = vst [vmem:[%s335 + $0x80] sm:$0xff] %v358
              %v360 = vld [vmem:[%s334 + $0x90] sm:$0xff]
              %361 = vst [vmem:[%s335 + $0x90] sm:$0xff] %v360
              %v362 = vld [vmem:[%s334 + $0x98] sm:$0xff]
              %363 = vst [vmem:[%s335 + $0x98] sm:$0xff] %v362
              %v364 = vld [vmem:[%s334 + $0xa8] sm:$0xff]
              %365 = vst [vmem:[%s335 + $0xa8] sm:$0xff] %v364
              %v366 = vld [vmem:[%s334 + $0xb0] sm:$0xff]
              %367 = vst [vmem:[%s335 + $0xb0] sm:$0xff] %v366
              %v368 = vld [vmem:[%s334 + $0xc0] sm:$0xff]
              %369 = vst [vmem:[%s335 + $0xc0] sm:$0xff] %v368
              %v370 = vld [vmem:[%s334 + $0xc8] sm:$0xff]
              %371 = vst [vmem:[%s335 + $0xc8] sm:$0xff] %v370
              %v372 = vld [vmem:[%s334 + $0xd8] sm:$0xff]
              %373 = vst [vmem:[%s335 + $0xd8] sm:$0xff] %v372
              %v374 = vld [vmem:[%s334 + $0xe0] sm:$0xff]
              %375 = vst [vmem:[%s335 + $0xe0] sm:$0xff] %v374
            $region61: #{conv_block_forward.3} parent=55 // loop_footer
              %s333 = sadd.s32 1, %s329
            $region62: #{conv_block_forward.3} parent=55 // loop_footer_branch
              %328 = sbr.rel target = $region58
            $region63: #{conv_block_forward.3} parent=55 // loop_exit
              _
            %s376 = sshllo.u32 0, %s323
            loop: start=0, step=1, limit=1
            $region64: #{conv_block_forward.3} parent=55 // loop_pre_header
              _
            $region65: #{conv_block_forward.3} parent=55 // loop_header
              %s378 = sphi 0, %s382
              %p379 = scmp.ge.s32.totalorder %s378, 1
              %s383 = sphi %s325, %s325
              %s384 = sphi %s327, %s327
            $region66: #{conv_block_forward.3} parent=55 // loop_header_branch
              %381 = sbr.rel (%p379) target = $region70
            $region67: #{conv_block_forward.3} parent=55 // loop_body
              %v385 = vld [vmem:[%s383] sm:%s376]
              %386 = vst [vmem:[%s384] sm:%s376] %v385
              %v387 = vld [vmem:[%s383 + $0x18] sm:%s376]
              %388 = vst [vmem:[%s384 + $0x18] sm:%s376] %v387
              %v389 = vld [vmem:[%s383 + $0x30] sm:%s376]
              %390 = vst [vmem:[%s384 + $0x30] sm:%s376] %v389
              %v391 = vld [vmem:[%s383 + $0x48] sm:%s376]
              %392 = vst [vmem:[%s384 + $0x48] sm:%s376] %v391
              %v393 = vld [vmem:[%s383 + $0x60] sm:%s376]
              %394 = vst [vmem:[%s384 + $0x60] sm:%s376] %v393
              %v395 = vld [vmem:[%s383 + $0x78] sm:%s376]
              %396 = vst [vmem:[%s384 + $0x78] sm:%s376] %v395
              %v397 = vld [vmem:[%s383 + $0x90] sm:%s376]
              %398 = vst [vmem:[%s384 + $0x90] sm:%s376] %v397
              %v399 = vld [vmem:[%s383 + $0xa8] sm:%s376]
              %400 = vst [vmem:[%s384 + $0xa8] sm:%s376] %v399
              %v401 = vld [vmem:[%s383 + $0xc0] sm:%s376]
              %402 = vst [vmem:[%s384 + $0xc0] sm:%s376] %v401
              %v403 = vld [vmem:[%s383 + $0xd8] sm:%s376]
              %404 = vst [vmem:[%s384 + $0xd8] sm:%s376] %v403
            $region68: #{conv_block_forward.3} parent=55 // loop_footer
              %s382 = sadd.s32 1, %s378
            $region69: #{conv_block_forward.3} parent=55 // loop_footer_branch
              %377 = sbr.rel target = $region65
            $region70: #{conv_block_forward.3} parent=55 // loop_exit
              _
          $region56: #{conv_block_forward.3} parent=40 // pred_fallthru
            _
        $region41: #{conv_block_forward.3} parent=37 // pred_fallthru
          _
        // Predicated region
        $region42: #{conv_block_forward.3} parent=37 // pred_check
          %p286 = pneg %p282
        $region43: #{conv_block_forward.3} parent=37 // pred_check_branch
          %288 = sbr.rel (%p286) target = $region45
        $region44: #{conv_block_forward.3} parent=37 // pred_region
          %s289 = sshllo.u32 0, 18
          loop: start=0, step=1, limit=1
          $region46: #{conv_block_forward.3} parent=44 // loop_pre_header
            _
          $region47: #{conv_block_forward.3} parent=44 // loop_header
            %s291 = sphi 0, %s295
            %p292 = scmp.ge.s32.totalorder %s291, 1
            %s296 = sphi %s280, %s280
            %s297 = sphi [#allocation2], [#allocation2]
          $region48: #{conv_block_forward.3} parent=44 // loop_header_branch
            %294 = sbr.rel (%p292) target = $region52
          $region49: #{conv_block_forward.3} parent=44 // loop_body
            %v298 = vld [vmem:[%s296] sm:%s289]
            %299 = vst [vmem:[%s297] sm:%s289] %v298
            %v300 = vld [vmem:[%s296 + $0x18] sm:%s289]
            %301 = vst [vmem:[%s297 + $0x18] sm:%s289] %v300
            %v302 = vld [vmem:[%s296 + $0x30] sm:%s289]
            %303 = vst [vmem:[%s297 + $0x30] sm:%s289] %v302
            %v304 = vld [vmem:[%s296 + $0x48] sm:%s289]
            %305 = vst [vmem:[%s297 + $0x48] sm:%s289] %v304
            %v306 = vld [vmem:[%s296 + $0x60] sm:%s289]
            %307 = vst [vmem:[%s297 + $0x60] sm:%s289] %v306
            %v308 = vld [vmem:[%s296 + $0x78] sm:%s289]
            %309 = vst [vmem:[%s297 + $0x78] sm:%s289] %v308
            %v310 = vld [vmem:[%s296 + $0x90] sm:%s289]
            %311 = vst [vmem:[%s297 + $0x90] sm:%s289] %v310
            %v312 = vld [vmem:[%s296 + $0xa8] sm:%s289]
            %313 = vst [vmem:[%s297 + $0xa8] sm:%s289] %v312
            %v314 = vld [vmem:[%s296 + $0xc0] sm:%s289]
            %315 = vst [vmem:[%s297 + $0xc0] sm:%s289] %v314
            %v316 = vld [vmem:[%s296 + $0xd8] sm:%s289]
            %317 = vst [vmem:[%s297 + $0xd8] sm:%s289] %v316
          $region50: #{conv_block_forward.3} parent=44 // loop_footer
            %s295 = sadd.s32 1, %s291
          $region51: #{conv_block_forward.3} parent=44 // loop_footer_branch
            %290 = sbr.rel target = $region47
          $region52: #{conv_block_forward.3} parent=44 // loop_exit
            _
        $region45: #{conv_block_forward.3} parent=37 // pred_fallthru
          _
        // Predicated region
        $region71: #{conv_block_forward.3} parent=37 // pred_check
          _
        $region72: #{conv_block_forward.3} parent=37 // pred_check_branch
          %407 = sbr.rel (0) target = $region74
        $region73: #{conv_block_forward.3} parent=37 // pred_region
          %408 = vsyncadd [#allocation3], 2880
        $region74: #{conv_block_forward.3} parent=37 // pred_fallthru
          _
        %s409 = smul.u32 10, 18
        %s410 = smul.u32 %s409, 1
        %s411 = sshll.u32 %s410, 4
        %412 = dma.done [#allocation3], %s411
      %v413 = vld [vmem:[#allocation2] sm:$0xff]
      %v414 = vld [vmem:[#allocation2 + $0x8] sm:$0xff]
      %v415 = vld [vmem:[#allocation2 + $0x10] sm:$0x3]
      %v416 = vld [vmem:[#allocation2 + $0x18] sm:$0xff]
      %v417 = vld [vmem:[#allocation2 + $0x20] sm:$0xff]
      %v418 = vld [vmem:[#allocation2 + $0x28] sm:$0x3]
      %v419 = vld [vmem:[#allocation2 + $0x30] sm:$0xff]
      %v420 = vld [vmem:[#allocation2 + $0x38] sm:$0xff]
      %v421 = vld [vmem:[#allocation2 + $0x40] sm:$0x3]
      %v422 = vld [vmem:[#allocation2 + $0x48] sm:$0xff]
      %v423 = vld [vmem:[#allocation2 + $0x50] sm:$0xff]
      %v424 = vld [vmem:[#allocation2 + $0x58] sm:$0x3]
      %v425 = vld [vmem:[#allocation2 + $0x60] sm:$0xff]
      %v426 = vld [vmem:[#allocation2 + $0x68] sm:$0xff]
      %v427 = vld [vmem:[#allocation2 + $0x70] sm:$0x3]
      %v428 = vld [vmem:[#allocation2 + $0x78] sm:$0xff]
      %v429 = vld [vmem:[#allocation2 + $0x80] sm:$0xff]
      %v430 = vld [vmem:[#allocation2 + $0x88] sm:$0x3]
      %v431 = vld [vmem:[#allocation2 + $0x90] sm:$0xff]
      %v432 = vld [vmem:[#allocation2 + $0x98] sm:$0xff]
      %v433 = vld [vmem:[#allocation2 + $0xa0] sm:$0x3]
      %v434 = vld [vmem:[#allocation2 + $0xa8] sm:$0xff]
      %v435 = vld [vmem:[#allocation2 + $0xb0] sm:$0xff]
      %v436 = vld [vmem:[#allocation2 + $0xb8] sm:$0x3]
      %v437 = vld [vmem:[#allocation2 + $0xc0] sm:$0xff]
      %v438 = vld [vmem:[#allocation2 + $0xc8] sm:$0xff]
      %v439 = vld [vmem:[#allocation2 + $0xd0] sm:$0x3]
      %v440 = vld [vmem:[#allocation2 + $0xd8] sm:$0xff]
      %v441 = vld [vmem:[#allocation2 + $0xe0] sm:$0xff]
      %v442 = vld [vmem:[#allocation2 + $0xe8] sm:$0x3]
      %v443 = vpack.c.bf16 %v414, %v413
      %v444 = vpack.c.bf16 %v415, %v415
      %v445 = vpack.c.bf16 %v417, %v416
      %v446 = vpack.c.bf16 %v418, %v418
      %v447 = vpack.c.bf16 %v420, %v419
      %v448 = vpack.c.bf16 %v421, %v421
      %v449 = vpack.c.bf16 %v423, %v422
      %v450 = vpack.c.bf16 %v424, %v424
      %v451 = vpack.c.bf16 %v426, %v425
      %v452 = vpack.c.bf16 %v427, %v427
      %v453 = vpack.c.bf16 %v429, %v428
      %v454 = vpack.c.bf16 %v430, %v430
      %v455 = vpack.c.bf16 %v432, %v431
      %v456 = vpack.c.bf16 %v433, %v433
      %v457 = vpack.c.bf16 %v435, %v434
      %v458 = vpack.c.bf16 %v436, %v436
      %v459 = vpack.c.bf16 %v438, %v437
      %v460 = vpack.c.bf16 %v439, %v439
      %v461 = vpack.c.bf16 %v441, %v440
      %v462 = vpack.c.bf16 %v442, %v442
      %vm463 = vsmask.f32 7424
      %v465 = vshrl.u32 %v443, 16
      %v467 = vshll.u32 %v443, 16
      %v469 = vrot.slane %v467, 1
      %v470 = vor.u32 %v465, %v469
      %v472 = vshll.u32 %v444, 16
      %v474 = vrot.slane %v472, 1
      %v475 = vsel %vm463, %v470, %v474
      %v477 = vshrl.u32 %v445, 16
      %v479 = vshll.u32 %v445, 16
      %v481 = vrot.slane %v479, 1
      %v482 = vor.u32 %v477, %v481
      %v484 = vshll.u32 %v446, 16
      %v486 = vrot.slane %v484, 1
      %v487 = vsel %vm463, %v482, %v486
      %v489 = vshrl.u32 %v447, 16
      %v491 = vshll.u32 %v447, 16
      %v493 = vrot.slane %v491, 1
      %v494 = vor.u32 %v489, %v493
      %v496 = vshll.u32 %v448, 16
      %v498 = vrot.slane %v496, 1
      %v499 = vsel %vm463, %v494, %v498
      %v501 = vshrl.u32 %v449, 16
      %v503 = vshll.u32 %v449, 16
      %v505 = vrot.slane %v503, 1
      %v506 = vor.u32 %v501, %v505
      %v508 = vshll.u32 %v450, 16
      %v510 = vrot.slane %v508, 1
      %v511 = vsel %vm463, %v506, %v510
      %v513 = vshrl.u32 %v451, 16
      %v515 = vshll.u32 %v451, 16
      %v517 = vrot.slane %v515, 1
      %v518 = vor.u32 %v513, %v517
      %v520 = vshll.u32 %v452, 16
      %v522 = vrot.slane %v520, 1
      %v523 = vsel %vm463, %v518, %v522
      %v525 = vshrl.u32 %v453, 16
      %v527 = vshll.u32 %v453, 16
      %v529 = vrot.slane %v527, 1
      %v530 = vor.u32 %v525, %v529
      %v532 = vshll.u32 %v454, 16
      %v534 = vrot.slane %v532, 1
      %v535 = vsel %vm463, %v530, %v534
      %v537 = vshrl.u32 %v455, 16
      %v539 = vshll.u32 %v455, 16
      %v541 = vrot.slane %v539, 1
      %v542 = vor.u32 %v537, %v541
      %v544 = vshll.u32 %v456, 16
      %v546 = vrot.slane %v544, 1
      %v547 = vsel %vm463, %v542, %v546
      %v549 = vshrl.u32 %v457, 16
      %v551 = vshll.u32 %v457, 16
      %v553 = vrot.slane %v551, 1
      %v554 = vor.u32 %v549, %v553
      %v556 = vshll.u32 %v458, 16
      %v558 = vrot.slane %v556, 1
      %v559 = vsel %vm463, %v554, %v558
      %vm584 = vcmask 1046528
      %v585 = vrot.slane %v443, 1
      %v586 = vrot.slane %v444, 1
      %v587 = vsel %vm584, %v585, %v586
      %v588 = vrot.slane %v445, 1
      %v589 = vrot.slane %v446, 1
      %v590 = vsel %vm584, %v588, %v589
      %v591 = vrot.slane %v447, 1
      %v592 = vrot.slane %v448, 1
      %v593 = vsel %vm584, %v591, %v592
      %v594 = vrot.slane %v449, 1
      %v595 = vrot.slane %v450, 1
      %v596 = vsel %vm584, %v594, %v595
      %v597 = vrot.slane %v451, 1
      %v598 = vrot.slane %v452, 1
      %v599 = vsel %vm584, %v597, %v598
      %v600 = vrot.slane %v453, 1
      %v601 = vrot.slane %v454, 1
      %v602 = vsel %vm584, %v600, %v601
      %v603 = vrot.slane %v455, 1
      %v604 = vrot.slane %v456, 1
      %v605 = vsel %vm584, %v603, %v604
      %v606 = vrot.slane %v457, 1
      %v607 = vrot.slane %v458, 1
      %v608 = vsel %vm584, %v606, %v607
      %v618 = vshrl.u32 %v459, 16
      %v620 = vshll.u32 %v459, 16
      %v622 = vrot.slane %v620, 1
      %v623 = vor.u32 %v618, %v622
      %v625 = vshll.u32 %v460, 16
      %v627 = vrot.slane %v625, 1
      %v628 = vsel %vm463, %v623, %v627
      %v632 = vrot.slane %v459, 1
      %v633 = vrot.slane %v460, 1
      %v634 = vsel %vm584, %v632, %v633
      %v637 = vshrl.u32 %v461, 16
      %v639 = vshll.u32 %v461, 16
      %v641 = vrot.slane %v639, 1
      %v642 = vor.u32 %v637, %v641
      %v644 = vshll.u32 %v462, 16
      %v646 = vrot.slane %v644, 1
      %v647 = vsel %vm463, %v642, %v646
      %v651 = vrot.slane %v461, 1
      %v652 = vrot.slane %v462, 1
      %v653 = vsel %vm584, %v651, %v652
      %v655 = vld [vmem:[%s1] sm:$0xf]
      %v656 = vld [vmem:[%s1 + $0x4] sm:$0xf]
      %v657 = vld [vmem:[%s1 + $0x8] sm:$0xf]
      %v658 = vld [vmem:[%s1 + $0xc] sm:$0xf]
      %v659 = vld [vmem:[%s1 + $0x10] sm:$0xf]
      %v660 = vld [vmem:[%s1 + $0x14] sm:$0xf]
      %v661 = vld [vmem:[%s1 + $0x18] sm:$0xf]
      %v662 = vld [vmem:[%s1 + $0x1c] sm:$0xf]
      %v663 = vld [vmem:[%s1 + $0x20] sm:$0xf]
      %v664 = vld [vmem:[%s1 + $0x24] sm:$0xf]
      %v665 = vld [vmem:[%s1 + $0x28] sm:$0xf]
      %v666 = vld [vmem:[%s1 + $0x2c] sm:$0xf]
      %v667 = vld [vmem:[%s1 + $0x30] sm:$0xf]
      %v668 = vld [vmem:[%s1 + $0x34] sm:$0xf]
      %v669 = vld [vmem:[%s1 + $0x38] sm:$0xf]
      %v670 = vld [vmem:[%s1 + $0x3c] sm:$0xf]
      %v671 = vld [vmem:[%s1 + $0x40] sm:$0xf]
      %v672 = vld [vmem:[%s1 + $0x44] sm:$0xf]
      %v673 = vld [vmem:[%s1 + $0x48] sm:$0xf]
      %v674 = vld [vmem:[%s1 + $0x4c] sm:$0xf]
      %v675 = vld [vmem:[%s1 + $0x50] sm:$0xf]
      %v676 = vld [vmem:[%s1 + $0x54] sm:$0xf]
      %v677 = vld [vmem:[%s1 + $0x58] sm:$0xf]
      %v678 = vld [vmem:[%s1 + $0x5c] sm:$0xf]
      %v679 = vld [vmem:[%s1 + $0x60] sm:$0xf]
      %v680 = vld [vmem:[%s1 + $0x64] sm:$0xf]
      %v681 = vld [vmem:[%s1 + $0x68] sm:$0xf]
      %v682 = vld [vmem:[%s1 + $0x6c] sm:$0xf]
      %v683 = vld [vmem:[%s1 + $0x70] sm:$0xf]
      %v684 = vld [vmem:[%s1 + $0x74] sm:$0xf]
      %v685 = vld [vmem:[%s1 + $0x78] sm:$0xf]
      %v686 = vld [vmem:[%s1 + $0x7c] sm:$0xf]
      %v687 = vld [vmem:[%s1 + $0x80] sm:$0xf]
      %v688 = vld [vmem:[%s1 + $0x84] sm:$0xf]
      %v689 = vld [vmem:[%s1 + $0x88] sm:$0xf]
      %v690 = vld [vmem:[%s1 + $0x8c] sm:$0xf]
      %v691 = vld [vmem:[%s1 + $0x90] sm:$0xf]
      %v692 = vld [vmem:[%s1 + $0x94] sm:$0xf]
      %v693 = vld [vmem:[%s1 + $0x98] sm:$0xf]
      %v694 = vld [vmem:[%s1 + $0x9c] sm:$0xf]
      %v695 = vld [vmem:[%s1 + $0xa0] sm:$0xf]
      %v696 = vld [vmem:[%s1 + $0xa4] sm:$0xf]
      %v697 = vld [vmem:[%s1 + $0xa8] sm:$0xf]
      %v698 = vld [vmem:[%s1 + $0xac] sm:$0xf]
      %v699 = vld [vmem:[%s1 + $0xb0] sm:$0xf]
      %v700 = vld [vmem:[%s1 + $0xb4] sm:$0xf]
      %v701 = vld [vmem:[%s1 + $0xb8] sm:$0xf]
      %v702 = vld [vmem:[%s1 + $0xbc] sm:$0xf]
      %v703 = vld [vmem:[%s1 + $0xc0] sm:$0xf]
      %v704 = vld [vmem:[%s1 + $0xc4] sm:$0xf]
      %v705 = vld [vmem:[%s1 + $0xc8] sm:$0xf]
      %v706 = vld [vmem:[%s1 + $0xcc] sm:$0xf]
      %v707 = vld [vmem:[%s1 + $0xd0] sm:$0xf]
      %v708 = vld [vmem:[%s1 + $0xd4] sm:$0xf]
      %v709 = vld [vmem:[%s1 + $0xd8] sm:$0xf]
      %v710 = vld [vmem:[%s1 + $0xdc] sm:$0xf]
      %v711 = vld [vmem:[%s1 + $0xe0] sm:$0xf]
      %v712 = vld [vmem:[%s1 + $0xe4] sm:$0xf]
      %v713 = vld [vmem:[%s1 + $0xe8] sm:$0xf]
      %v714 = vld [vmem:[%s1 + $0xec] sm:$0xf]
      %v715 = vld [vmem:[%s1 + $0xf0] sm:$0xf]
      %v716 = vld [vmem:[%s1 + $0xf4] sm:$0xf]
      %v717 = vld [vmem:[%s1 + $0xf8] sm:$0xf]
      %v718 = vld [vmem:[%s1 + $0xfc] sm:$0xf]
      %v719 = vld [vmem:[%s1 + $0x100] sm:$0xf]
      %v720 = vld [vmem:[%s1 + $0x104] sm:$0xf]
      %v721 = vld [vmem:[%s1 + $0x108] sm:$0xf]
      %v722 = vld [vmem:[%s1 + $0x10c] sm:$0xf]
      %v723 = vld [vmem:[%s1 + $0x110] sm:$0xf]
      %v724 = vld [vmem:[%s1 + $0x114] sm:$0xf]
      %v725 = vld [vmem:[%s1 + $0x118] sm:$0xf]
      %v726 = vld [vmem:[%s1 + $0x11c] sm:$0xf]
      %v727 = vld [vmem:[%s1 + $0x120] sm:$0xf]
      %v728 = vld [vmem:[%s1 + $0x124] sm:$0xf]
      %v729 = vld [vmem:[%s1 + $0x128] sm:$0xf]
      %v730 = vld [vmem:[%s1 + $0x12c] sm:$0xf]
      %v731 = vld [vmem:[%s1 + $0x130] sm:$0xf]
      %v732 = vld [vmem:[%s1 + $0x134] sm:$0xf]
      %v733 = vld [vmem:[%s1 + $0x138] sm:$0xf]
      %v734 = vld [vmem:[%s1 + $0x13c] sm:$0xf]
      %v735 = vld [vmem:[%s1 + $0x140] sm:$0xf]
      %v736 = vld [vmem:[%s1 + $0x144] sm:$0xf]
      %v737 = vld [vmem:[%s1 + $0x148] sm:$0xf]
      %v738 = vld [vmem:[%s1 + $0x14c] sm:$0xf]
      %v739 = vld [vmem:[%s1 + $0x150] sm:$0xf]
      %v740 = vld [vmem:[%s1 + $0x154] sm:$0xf]
      %v741 = vld [vmem:[%s1 + $0x158] sm:$0xf]
      %v742 = vld [vmem:[%s1 + $0x15c] sm:$0xf]
      %v743 = vld [vmem:[%s1 + $0x160] sm:$0xf]
      %v744 = vld [vmem:[%s1 + $0x164] sm:$0xf]
      %v745 = vld [vmem:[%s1 + $0x168] sm:$0xf]
      %v746 = vld [vmem:[%s1 + $0x16c] sm:$0xf]
      %v747 = vld [vmem:[%s1 + $0x170] sm:$0xf]
      %v748 = vld [vmem:[%s1 + $0x174] sm:$0xf]
      %v749 = vld [vmem:[%s1 + $0x178] sm:$0xf]
      %v750 = vld [vmem:[%s1 + $0x17c] sm:$0xf]
      %v751 = vld [vmem:[%s1 + $0x180] sm:$0xf]
      %v752 = vld [vmem:[%s1 + $0x184] sm:$0xf]
      %v753 = vld [vmem:[%s1 + $0x188] sm:$0xf]
      %v754 = vld [vmem:[%s1 + $0x18c] sm:$0xf]
      %v755 = vld [vmem:[%s1 + $0x190] sm:$0xf]
      %v756 = vld [vmem:[%s1 + $0x194] sm:$0xf]
      %v757 = vld [vmem:[%s1 + $0x198] sm:$0xf]
      %v758 = vld [vmem:[%s1 + $0x19c] sm:$0xf]
      %v759 = vld [vmem:[%s1 + $0x1a0] sm:$0xf]
      %v760 = vld [vmem:[%s1 + $0x1a4] sm:$0xf]
      %v761 = vld [vmem:[%s1 + $0x1a8] sm:$0xf]
      %v762 = vld [vmem:[%s1 + $0x1ac] sm:$0xf]
      %v763 = vld [vmem:[%s1 + $0x1b0] sm:$0xf]
      %v764 = vld [vmem:[%s1 + $0x1b4] sm:$0xf]
      %v765 = vld [vmem:[%s1 + $0x1b8] sm:$0xf]
      %v766 = vld [vmem:[%s1 + $0x1bc] sm:$0xf]
      %v767 = vld [vmem:[%s1 + $0x1c0] sm:$0xf]
      %v768 = vld [vmem:[%s1 + $0x1c4] sm:$0xf]
      %v769 = vld [vmem:[%s1 + $0x1c8] sm:$0xf]
      %v770 = vld [vmem:[%s1 + $0x1cc] sm:$0xf]
      %v771 = vld [vmem:[%s1 + $0x1d0] sm:$0xf]
      %v772 = vld [vmem:[%s1 + $0x1d4] sm:$0xf]
      %v773 = vld [vmem:[%s1 + $0x1d8] sm:$0xf]
      %v774 = vld [vmem:[%s1 + $0x1dc] sm:$0xf]
      %v775 = vld [vmem:[%s1 + $0x1e0] sm:$0xf]
      %v776 = vld [vmem:[%s1 + $0x1e4] sm:$0xf]
      %v777 = vld [vmem:[%s1 + $0x1e8] sm:$0xf]
      %v778 = vld [vmem:[%s1 + $0x1ec] sm:$0xf]
      %v779 = vld [vmem:[%s1 + $0x1f0] sm:$0xf]
      %v780 = vld [vmem:[%s1 + $0x1f4] sm:$0xf]
      %v781 = vld [vmem:[%s1 + $0x1f8] sm:$0xf]
      %v782 = vld [vmem:[%s1 + $0x1fc] sm:$0xf]
      %v783 = vld [vmem:[%s1 + $0x200] sm:$0xf]
      %v784 = vld [vmem:[%s1 + $0x204] sm:$0xf]
      %v785 = vld [vmem:[%s1 + $0x208] sm:$0xf]
      %v786 = vld [vmem:[%s1 + $0x20c] sm:$0xf]
      %v787 = vld [vmem:[%s1 + $0x210] sm:$0xf]
      %v788 = vld [vmem:[%s1 + $0x214] sm:$0xf]
      %v789 = vld [vmem:[%s1 + $0x218] sm:$0xf]
      %v790 = vld [vmem:[%s1 + $0x21c] sm:$0xf]
      %v791 = vld [vmem:[%s1 + $0x220] sm:$0xf]
      %v792 = vld [vmem:[%s1 + $0x224] sm:$0xf]
      %v793 = vld [vmem:[%s1 + $0x228] sm:$0xf]
      %v794 = vld [vmem:[%s1 + $0x22c] sm:$0xf]
      %v795 = vld [vmem:[%s1 + $0x230] sm:$0xf]
      %v796 = vld [vmem:[%s1 + $0x234] sm:$0xf]
      %v797 = vld [vmem:[%s1 + $0x238] sm:$0xf]
      %v798 = vld [vmem:[%s1 + $0x23c] sm:$0xf]
      %v799 = vld [vmem:[%s2] sm:$0x1]
      %v801 = vlaneseq
      %v802 = vshrl.u32 %v801, 7
      %v803 = vsub.s32 0, %v802
      %v804 = vrot.slane %v799, %v803
      %v950 = vunpack.c.l.b16 %v655
      %v951 = vunpack.c.l.b16 %v656
      %v952 = vunpack.c.l.b16 %v657
      %v953 = vunpack.c.l.b16 %v658
      %v954 = vunpack.c.l.b16 %v659
      %v955 = vunpack.c.l.b16 %v660
      %v956 = vunpack.c.l.b16 %v661
      %v957 = vunpack.c.l.b16 %v662
      %v958 = vunpack.c.l.b16 %v663
      %v959 = vunpack.c.l.b16 %v664
      %v960 = vunpack.c.l.b16 %v665
      %v961 = vunpack.c.l.b16 %v666
      %v962 = vunpack.c.l.b16 %v667
      %v963 = vunpack.c.l.b16 %v668
      %v964 = vunpack.c.l.b16 %v669
      %v965 = vunpack.c.l.b16 %v670
      %v966 = vunpack.c.l.b16 %v671
      %v967 = vunpack.c.l.b16 %v672
      %v968 = vunpack.c.l.b16 %v673
      %v969 = vunpack.c.l.b16 %v674
      %v970 = vunpack.c.l.b16 %v675
      %v971 = vunpack.c.l.b16 %v676
      %v972 = vunpack.c.l.b16 %v677
      %v973 = vunpack.c.l.b16 %v678
      %v974 = vunpack.c.l.b16 %v679
      %v975 = vunpack.c.l.b16 %v680
      %v976 = vunpack.c.l.b16 %v681
      %v977 = vunpack.c.l.b16 %v682
      %v978 = vunpack.c.l.b16 %v683
      %v979 = vunpack.c.l.b16 %v684
      %v980 = vunpack.c.l.b16 %v685
      %v981 = vunpack.c.l.b16 %v686
      %v982 = vunpack.c.l.b16 %v687
      %v983 = vunpack.c.l.b16 %v688
      %v984 = vunpack.c.l.b16 %v689
      %v985 = vunpack.c.l.b16 %v690
      %v986 = vunpack.c.l.b16 %v691
      %v987 = vunpack.c.l.b16 %v692
      %v988 = vunpack.c.l.b16 %v693
      %v989 = vunpack.c.l.b16 %v694
      %v990 = vunpack.c.l.b16 %v695
      %v991 = vunpack.c.l.b16 %v696
      %v992 = vunpack.c.l.b16 %v697
      %v993 = vunpack.c.l.b16 %v698
      %v994 = vunpack.c.l.b16 %v699
      %v995 = vunpack.c.l.b16 %v700
      %v996 = vunpack.c.l.b16 %v701
      %v997 = vunpack.c.l.b16 %v702
      %v998 = vunpack.c.l.b16 %v703
      %v999 = vunpack.c.l.b16 %v704
      %v1000 = vunpack.c.l.b16 %v705
      %v1001 = vunpack.c.l.b16 %v706
      %v1002 = vunpack.c.l.b16 %v707
      %v1003 = vunpack.c.l.b16 %v708
      %v1004 = vunpack.c.l.b16 %v709
      %v1005 = vunpack.c.l.b16 %v710
      %v1006 = vunpack.c.l.b16 %v711
      %v1007 = vunpack.c.l.b16 %v712
      %v1008 = vunpack.c.l.b16 %v713
      %v1009 = vunpack.c.l.b16 %v714
      %v1010 = vunpack.c.l.b16 %v715
      %v1011 = vunpack.c.l.b16 %v716
      %v1012 = vunpack.c.l.b16 %v717
      %v1013 = vunpack.c.l.b16 %v718
      %v1014 = vunpack.c.l.b16 %v719
      %v1015 = vunpack.c.l.b16 %v720
      %v1016 = vunpack.c.l.b16 %v721
      %v1017 = vunpack.c.l.b16 %v722
      %v1018 = vunpack.c.l.b16 %v723
      %v1019 = vunpack.c.l.b16 %v724
      %v1020 = vunpack.c.l.b16 %v725
      %v1021 = vunpack.c.l.b16 %v726
      %v1022 = vunpack.c.l.b16 %v727
      %v1023 = vunpack.c.l.b16 %v728
      %v1024 = vunpack.c.l.b16 %v729
      %v1025 = vunpack.c.l.b16 %v730
      %v1026 = vunpack.c.l.b16 %v731
      %v1027 = vunpack.c.l.b16 %v732
      %v1028 = vunpack.c.l.b16 %v733
      %v1029 = vunpack.c.l.b16 %v734
      %v1030 = vunpack.c.l.b16 %v735
      %v1031 = vunpack.c.l.b16 %v736
      %v1032 = vunpack.c.l.b16 %v737
      %v1033 = vunpack.c.l.b16 %v738
      %v1034 = vunpack.c.l.b16 %v739
      %v1035 = vunpack.c.l.b16 %v740
      %v1036 = vunpack.c.l.b16 %v741
      %v1037 = vunpack.c.l.b16 %v742
      %v1038 = vunpack.c.l.b16 %v743
      %v1039 = vunpack.c.l.b16 %v744
      %v1040 = vunpack.c.l.b16 %v745
      %v1041 = vunpack.c.l.b16 %v746
      %v1042 = vunpack.c.l.b16 %v747
      %v1043 = vunpack.c.l.b16 %v748
      %v1044 = vunpack.c.l.b16 %v749
      %v1045 = vunpack.c.l.b16 %v750
      %v1046 = vunpack.c.l.b16 %v751
      %v1047 = vunpack.c.l.b16 %v752
      %v1048 = vunpack.c.l.b16 %v753
      %v1049 = vunpack.c.l.b16 %v754
      %v1050 = vunpack.c.l.b16 %v755
      %v1051 = vunpack.c.l.b16 %v756
      %v1052 = vunpack.c.l.b16 %v757
      %v1053 = vunpack.c.l.b16 %v758
      %v1054 = vunpack.c.l.b16 %v759
      %v1055 = vunpack.c.l.b16 %v760
      %v1056 = vunpack.c.l.b16 %v761
      %v1057 = vunpack.c.l.b16 %v762
      %v1058 = vunpack.c.l.b16 %v763
      %v1059 = vunpack.c.l.b16 %v764
      %v1060 = vunpack.c.l.b16 %v765
      %v1061 = vunpack.c.l.b16 %v766
      %v1062 = vunpack.c.l.b16 %v767
      %v1063 = vunpack.c.l.b16 %v768
      %v1064 = vunpack.c.l.b16 %v769
      %v1065 = vunpack.c.l.b16 %v770
      %v1066 = vunpack.c.l.b16 %v771
      %v1067 = vunpack.c.l.b16 %v772
      %v1068 = vunpack.c.l.b16 %v773
      %v1069 = vunpack.c.l.b16 %v774
      %v1070 = vunpack.c.l.b16 %v775
      %v1071 = vunpack.c.l.b16 %v776
      %v1072 = vunpack.c.l.b16 %v777
      %v1073 = vunpack.c.l.b16 %v778
      %v1074 = vunpack.c.l.b16 %v779
      %v1075 = vunpack.c.l.b16 %v780
      %v1076 = vunpack.c.l.b16 %v781
      %v1077 = vunpack.c.l.b16 %v782
      %v1078 = vunpack.c.l.b16 %v783
      %v1079 = vunpack.c.l.b16 %v784
      %v1080 = vunpack.c.l.b16 %v785
      %v1081 = vunpack.c.l.b16 %v786
      %v1082 = vunpack.c.l.b16 %v787
      %v1083 = vunpack.c.l.b16 %v788
      %v1084 = vunpack.c.l.b16 %v789
      %v1085 = vunpack.c.l.b16 %v790
      %v1086 = vunpack.c.l.b16 %v791
      %v1087 = vunpack.c.l.b16 %v792
      %v1088 = vunpack.c.l.b16 %v793
      %v1089 = vunpack.c.l.b16 %v794
      %v1090 = vunpack.c.l.b16 %v795
      %v1091 = vunpack.c.l.b16 %v796
      %v1092 = vunpack.c.l.b16 %v797
      %v1093 = vunpack.c.l.b16 %v798
      %v1094 = vpack.c.b16 %v951, %v950
      %v1095 = vpack.c.b16 %v953, %v952
      %v1096 = vpack.c.b16 %v955, %v954
      %v1097 = vpack.c.b16 %v957, %v956
      %v1098 = vpack.c.b16 %v959, %v958
      %v1099 = vpack.c.b16 %v961, %v960
      %v1100 = vpack.c.b16 %v963, %v962
      %v1101 = vpack.c.b16 %v965, %v964
      %v1102 = vpack.c.b16 %v967, %v966
      %v1103 = vpack.c.b16 %v969, %v968
      %v1104 = vpack.c.b16 %v971, %v970
      %v1105 = vpack.c.b16 %v973, %v972
      %v1106 = vpack.c.b16 %v975, %v974
      %v1107 = vpack.c.b16 %v977, %v976
      %v1108 = vpack.c.b16 %v979, %v978
      %v1109 = vpack.c.b16 %v981, %v980
      %v1110 = vpack.c.b16 %v983, %v982
      %v1111 = vpack.c.b16 %v985, %v984
      %v1112 = vpack.c.b16 %v987, %v986
      %v1113 = vpack.c.b16 %v989, %v988
      %v1114 = vpack.c.b16 %v991, %v990
      %v1115 = vpack.c.b16 %v993, %v992
      %v1116 = vpack.c.b16 %v995, %v994
      %v1117 = vpack.c.b16 %v997, %v996
      %v1118 = vpack.c.b16 %v999, %v998
      %v1119 = vpack.c.b16 %v1001, %v1000
      %v1120 = vpack.c.b16 %v1003, %v1002
      %v1121 = vpack.c.b16 %v1005, %v1004
      %v1122 = vpack.c.b16 %v1007, %v1006
      %v1123 = vpack.c.b16 %v1009, %v1008
      %v1124 = vpack.c.b16 %v1011, %v1010
      %v1125 = vpack.c.b16 %v1013, %v1012
      %v1126 = vpack.c.b16 %v1015, %v1014
      %v1127 = vpack.c.b16 %v1017, %v1016
      %v1128 = vpack.c.b16 %v1019, %v1018
      %v1129 = vpack.c.b16 %v1021, %v1020
      %v1130 = vpack.c.b16 %v1023, %v1022
      %v1131 = vpack.c.b16 %v1025, %v1024
      %v1132 = vpack.c.b16 %v1027, %v1026
      %v1133 = vpack.c.b16 %v1029, %v1028
      %v1134 = vpack.c.b16 %v1031, %v1030
      %v1135 = vpack.c.b16 %v1033, %v1032
      %v1136 = vpack.c.b16 %v1035, %v1034
      %v1137 = vpack.c.b16 %v1037, %v1036
      %v1138 = vpack.c.b16 %v1039, %v1038
      %v1139 = vpack.c.b16 %v1041, %v1040
      %v1140 = vpack.c.b16 %v1043, %v1042
      %v1141 = vpack.c.b16 %v1045, %v1044
      %v1142 = vpack.c.b16 %v1047, %v1046
      %v1143 = vpack.c.b16 %v1049, %v1048
      %v1144 = vpack.c.b16 %v1051, %v1050
      %v1145 = vpack.c.b16 %v1053, %v1052
      %v1146 = vpack.c.b16 %v1055, %v1054
      %v1147 = vpack.c.b16 %v1057, %v1056
      %v1148 = vpack.c.b16 %v1059, %v1058
      %v1149 = vpack.c.b16 %v1061, %v1060
      %v1150 = vpack.c.b16 %v1063, %v1062
      %v1151 = vpack.c.b16 %v1065, %v1064
      %v1152 = vpack.c.b16 %v1067, %v1066
      %v1153 = vpack.c.b16 %v1069, %v1068
      %v1154 = vpack.c.b16 %v1071, %v1070
      %v1155 = vpack.c.b16 %v1073, %v1072
      %v1156 = vpack.c.b16 %v1075, %v1074
      %v1157 = vpack.c.b16 %v1077, %v1076
      %v1158 = vpack.c.b16 %v1079, %v1078
      %v1159 = vpack.c.b16 %v1081, %v1080
      %v1160 = vpack.c.b16 %v1083, %v1082
      %v1161 = vpack.c.b16 %v1085, %v1084
      %v1162 = vpack.c.b16 %v1087, %v1086
      %v1163 = vpack.c.b16 %v1089, %v1088
      %v1164 = vpack.c.b16 %v1091, %v1090
      %v1165 = vpack.c.b16 %v1093, %v1092
      %1238 = vmatprep.subr.bf16.mxu0 0
      %1239 = vmatpush1.bf16.msra.mxu0 %v1094
      %1240 = vmatprep.subr.bf16.mxu0 0
      %1241 = vmatpush1.bf16.msra.mxu0 %v1095
      %1242 = vmatprep.subr.bf16.mxu0 0
      %1243 = vmatpush1.bf16.msra.mxu0 %v1096
      %1244 = vmatprep.subr.bf16.mxu0 0
      %1245 = vmatpush1.bf16.msra.mxu0 %v1097
      %1246 = vmatprep.subr.bf16.mxu0 0
      %1247 = vmatpush1.bf16.msra.mxu0 %v1098
      %1248 = vmatprep.subr.bf16.mxu0 0
      %1249 = vmatpush1.bf16.msra.mxu0 %v1099
      %1250 = vmatprep.subr.bf16.mxu0 0
      %1251 = vmatpush1.bf16.msra.mxu0 %v1100
      %1252 = vmatprep.subr.bf16.mxu0 0
      %1253 = vmatpush1.bf16.msra.mxu0 %v1101
      %1254 = vmatprep.subr.bf16.mxu0 0
      %1255 = vmatpush1.bf16.msra.mxu0 %v1102
      %1256 = vmatprep.subr.bf16.mxu0 0
      %1257 = vmatpush1.bf16.msra.mxu0 %v1103
      %1258 = vmatprep.subr.bf16.mxu0 0
      %1259 = vmatpush1.bf16.msra.mxu0 %v1104
      %1260 = vmatprep.subr.bf16.mxu0 0
      %1261 = vmatpush1.bf16.msra.mxu0 %v1105
      %1262 = vmatprep.subr.bf16.mxu0 0
      %1263 = vmatpush1.bf16.msra.mxu0 %v1106
      %1264 = vmatprep.subr.bf16.mxu0 0
      %1265 = vmatpush1.bf16.msra.mxu0 %v1107
      %1266 = vmatprep.subr.bf16.mxu0 0
      %1267 = vmatpush1.bf16.msra.mxu0 %v1108
      %1268 = vmatprep.subr.bf16.mxu0 0
      %1269 = vmatpush1.bf16.msra.mxu0 %v1109
      %1270 = vmatprep.mubr.bf16.mxu0 %v475
      %1271 = vmatmul.mubr.bf16.gmra.mrb[0].mxu0 %v443
      %v1272 = vpop.f32.mrb[0].mxu0
      %v1273 = vadd.f32 %v804, %v1272
      %v1274 = vpop.f32.mrb[0].mxu0
      %v1275 = vpop.f32.mrb[0].mxu0
      %v1276 = vadd.f32 %v804, %v1275
      %v1277 = vpop.f32.mrb[0].mxu0
      %1278 = vmatprep.mubr.bf16.mxu0 %v487
      %1279 = vmatmul.mubr.bf16.gmra.mrb[0].mxu0 %v445
      %v1280 = vpop.f32.mrb[0].mxu0
      %v1281 = vadd.f32 %v804, %v1280
      %v1282 = vpop.f32.mrb[0].mxu0
      %v1283 = vpop.f32.mrb[0].mxu0
      %v1284 = vadd.f32 %v804, %v1283
      %v1285 = vpop.f32.mrb[0].mxu0
      %1286 = vmatprep.mubr.bf16.mxu0 %v499
      %1287 = vmatmul.mubr.bf16.gmra.mrb[0].mxu0 %v447
      %v1288 = vpop.f32.mrb[0].mxu0
      %v1289 = vadd.f32 %v804, %v1288
      %v1290 = vpop.f32.mrb[0].mxu0
      %v1291 = vpop.f32.mrb[0].mxu0
      %v1292 = vadd.f32 %v804, %v1291
      %v1293 = vpop.f32.mrb[0].mxu0
      %1294 = vmatprep.mubr.bf16.mxu0 %v511
      %1295 = vmatmul.mubr.bf16.gmra.mrb[0].mxu0 %v449
      %v1296 = vpop.f32.mrb[0].mxu0
      %v1297 = vadd.f32 %v804, %v1296
      %v1298 = vpop.f32.mrb[0].mxu0
      %v1299 = vpop.f32.mrb[0].mxu0
      %v1300 = vadd.f32 %v804, %v1299
      %v1301 = vpop.f32.mrb[0].mxu0
      %1302 = vmatprep.mubr.bf16.mxu0 %v523
      %1303 = vmatmul.mubr.bf16.gmra.mrb[0].mxu0 %v451
      %v1304 = vpop.f32.mrb[0].mxu0
      %v1305 = vadd.f32 %v804, %v1304
      %v1306 = vpop.f32.mrb[0].mxu0
      %v1307 = vpop.f32.mrb[0].mxu0
      %v1308 = vadd.f32 %v804, %v1307
      %v1309 = vpop.f32.mrb[0].mxu0
      %1310 = vmatprep.mubr.bf16.mxu0 %v535
      %1311 = vmatmul.mubr.bf16.gmra.mrb[0].mxu0 %v453
      %v1312 = vpop.f32.mrb[0].mxu0
      %v1313 = vadd.f32 %v804, %v1312
      %v1314 = vpop.f32.mrb[0].mxu0
      %v1315 = vpop.f32.mrb[0].mxu0
      %v1316 = vadd.f32 %v804, %v1315
      %v1317 = vpop.f32.mrb[0].mxu0
      %1318 = vmatprep.mubr.bf16.mxu0 %v547
      %1319 = vmatmul.mubr.bf16.gmra.mrb[0].mxu0 %v455
      %v1320 = vpop.f32.mrb[0].mxu0
      %v1321 = vadd.f32 %v804, %v1320
      %v1322 = vpop.f32.mrb[0].mxu0
      %v1323 = vpop.f32.mrb[0].mxu0
      %v1324 = vadd.f32 %v804, %v1323
      %v1325 = vpop.f32.mrb[0].mxu0
      %1326 = vmatprep.mubr.bf16.mxu0 %v559
      %1327 = vmatmul.mubr.bf16.gmra.mrb[0].mxu0 %v457
      %v1328 = vpop.f32.mrb[0].mxu0
      %v1329 = vadd.f32 %v804, %v1328
      %v1330 = vpop.f32.mrb[0].mxu0
      %v1331 = vpop.f32.mrb[0].mxu0
      %v1332 = vadd.f32 %v804, %v1331
      %v1333 = vpop.f32.mrb[0].mxu0
      %1334 = vdwg.mxu0
      %1335 = vmatprep.subr.bf16.mxu0 0
      %1336 = vmatpush1.bf16.msra.mxu0 %v1110
      %1337 = vmatprep.subr.bf16.mxu0 0
      %1338 = vmatpush1.bf16.msra.mxu0 %v1111
      %1339 = vmatprep.subr.bf16.mxu0 0
      %1340 = vmatpush1.bf16.msra.mxu0 %v1112
      %1341 = vmatprep.subr.bf16.mxu0 0
      %1342 = vmatpush1.bf16.msra.mxu0 %v1113
      %1343 = vmatprep.subr.bf16.mxu0 0
      %1344 = vmatpush1.bf16.msra.mxu0 %v1114
      %1345 = vmatprep.subr.bf16.mxu0 0
      %1346 = vmatpush1.bf16.msra.mxu0 %v1115
      %1347 = vmatprep.subr.bf16.mxu0 0
      %1348 = vmatpush1.bf16.msra.mxu0 %v1116
      %1349 = vmatprep.subr.bf16.mxu0 0
      %1350 = vmatpush1.bf16.msra.mxu0 %v1117
      %1351 = vmatprep.subr.bf16.mxu0 0
      %1352 = vmatpush1.bf16.msra.mxu0 %v1118
      %1353 = vmatprep.subr.bf16.mxu0 0
      %1354 = vmatpush1.bf16.msra.mxu0 %v1119
      %1355 = vmatprep.subr.bf16.mxu0 0
      %1356 = vmatpush1.bf16.msra.mxu0 %v1120
      %1357 = vmatprep.subr.bf16.mxu0 0
      %1358 = vmatpush1.bf16.msra.mxu0 %v1121
      %1359 = vmatprep.subr.bf16.mxu0 0
      %1360 = vmatpush1.bf16.msra.mxu0 %v1122
      %1361 = vmatprep.subr.bf16.mxu0 0
      %1362 = vmatpush1.bf16.msra.mxu0 %v1123
      %1363 = vmatprep.subr.bf16.mxu0 0
      %1364 = vmatpush1.bf16.msra.mxu0 %v1124
      %1365 = vmatprep.subr.bf16.mxu0 0
      %1366 = vmatpush1.bf16.msra.mxu0 %v1125
      %1367 = vmatprep.mubr.bf16.mxu0 %v445
      %1368 = vmatmul.mubr.bf16.gmra.mrb[0].mxu0 %v587
      %v1369 = vpop.f32.mrb[0].mxu0
      %v1370 = vadd.f32 %v1273, %v1369
      %v1371 = vpop.f32.mrb[0].mxu0
      %v1372 = vpop.f32.mrb[0].mxu0
      %v1373 = vadd.f32 %v1276, %v1372
      %v1374 = vpop.f32.mrb[0].mxu0
      %1375 = vmatprep.mubr.bf16.mxu0 %v447
      %1376 = vmatmul.mubr.bf16.gmra.mrb[0].mxu0 %v590
      %v1377 = vpop.f32.mrb[0].mxu0
      %v1378 = vadd.f32 %v1281, %v1377
      %v1379 = vpop.f32.mrb[0].mxu0
      %v1380 = vpop.f32.mrb[0].mxu0
      %v1381 = vadd.f32 %v1284, %v1380
      %v1382 = vpop.f32.mrb[0].mxu0
      %1383 = vmatprep.mubr.bf16.mxu0 %v449
      %1384 = vmatmul.mubr.bf16.gmra.mrb[0].mxu0 %v593
      %v1385 = vpop.f32.mrb[0].mxu0
      %v1386 = vadd.f32 %v1289, %v1385
      %v1387 = vpop.f32.mrb[0].mxu0
      %v1388 = vpop.f32.mrb[0].mxu0
      %v1389 = vadd.f32 %v1292, %v1388
      %v1390 = vpop.f32.mrb[0].mxu0
      %1391 = vmatprep.mubr.bf16.mxu0 %v451
      %1392 = vmatmul.mubr.bf16.gmra.mrb[0].mxu0 %v596
      %v1393 = vpop.f32.mrb[0].mxu0
      %v1394 = vadd.f32 %v1297, %v1393
      %v1395 = vpop.f32.mrb[0].mxu0
      %v1396 = vpop.f32.mrb[0].mxu0
      %v1397 = vadd.f32 %v1300, %v1396
      %v1398 = vpop.f32.mrb[0].mxu0
      %1399 = vmatprep.mubr.bf16.mxu0 %v453
      %1400 = vmatmul.mubr.bf16.gmra.mrb[0].mxu0 %v599
      %v1401 = vpop.f32.mrb[0].mxu0
      %v1402 = vadd.f32 %v1305, %v1401
      %v1403 = vpop.f32.mrb[0].mxu0
      %v1404 = vpop.f32.mrb[0].mxu0
      %v1405 = vadd.f32 %v1308, %v1404
      %v1406 = vpop.f32.mrb[0].mxu0
      %1407 = vmatprep.mubr.bf16.mxu0 %v455
      %1408 = vmatmul.mubr.bf16.gmra.mrb[0].mxu0 %v602
      %v1409 = vpop.f32.mrb[0].mxu0
      %v1410 = vadd.f32 %v1313, %v1409
      %v1411 = vpop.f32.mrb[0].mxu0
      %v1412 = vpop.f32.mrb[0].mxu0
      %v1413 = vadd.f32 %v1316, %v1412
      %v1414 = vpop.f32.mrb[0].mxu0
      %1415 = vmatprep.mubr.bf16.mxu0 %v457
      %1416 = vmatmul.mubr.bf16.gmra.mrb[0].mxu0 %v605
      %v1417 = vpop.f32.mrb[0].mxu0
      %v1418 = vadd.f32 %v1321, %v1417
      %v1419 = vpop.f32.mrb[0].mxu0
      %v1420 = vpop.f32.mrb[0].mxu0
      %v1421 = vadd.f32 %v1324, %v1420
      %v1422 = vpop.f32.mrb[0].mxu0
      %1423 = vmatprep.mubr.bf16.mxu0 %v459
      %1424 = vmatmul.mubr.bf16.gmra.mrb[0].mxu0 %v608
      %v1425 = vpop.f32.mrb[0].mxu0
      %v1426 = vadd.f32 %v1329, %v1425
      %v1427 = vpop.f32.mrb[0].mxu0
      %v1428 = vpop.f32.mrb[0].mxu0
      %v1429 = vadd.f32 %v1332, %v1428
      %v1430 = vpop.f32.mrb[0].mxu0
      %1431 = vdwg.mxu0
      %1432 = vmatprep.subr.bf16.mxu0 0
      %1433 = vmatpush1.bf16.msra.mxu0 %v1126
      %1434 = vmatprep.subr.bf16.mxu0 0
      %1435 = vmatpush1.bf16.msra.mxu0 %v1127
      %1436 = vmatprep.subr.bf16.mxu0 0
      %1437 = vmatpush1.bf16.msra.mxu0 %v1128
      %1438 = vmatprep.subr.bf16.mxu0 0
      %1439 = vmatpush1.bf16.msra.mxu0 %v1129
      %1440 = vmatprep.subr.bf16.mxu0 0
      %1441 = vmatpush1.bf16.msra.mxu0 %v1130
      %1442 = vmatprep.subr.bf16.mxu0 0
      %1443 = vmatpush1.bf16.msra.mxu0 %v1131
      %1444 = vmatprep.subr.bf16.mxu0 0
      %1445 = vmatpush1.bf16.msra.mxu0 %v1132
      %1446 = vmatprep.subr.bf16.mxu0 0
      %1447 = vmatpush1.bf16.msra.mxu0 %v1133
      %1448 = vmatprep.subr.bf16.mxu0 0
      %1449 = vmatpush1.bf16.msra.mxu0 %v1134
      %1450 = vmatprep.subr.bf16.mxu0 0
      %1451 = vmatpush1.bf16.msra.mxu0 %v1135
      %1452 = vmatprep.subr.bf16.mxu0 0
      %1453 = vmatpush1.bf16.msra.mxu0 %v1136
      %1454 = vmatprep.subr.bf16.mxu0 0
      %1455 = vmatpush1.bf16.msra.mxu0 %v1137
      %1456 = vmatprep.subr.bf16.mxu0 0
      %1457 = vmatpush1.bf16.msra.mxu0 %v1138
      %1458 = vmatprep.subr.bf16.mxu0 0
      %1459 = vmatpush1.bf16.msra.mxu0 %v1139
      %1460 = vmatprep.subr.bf16.mxu0 0
      %1461 = vmatpush1.bf16.msra.mxu0 %v1140
      %1462 = vmatprep.subr.bf16.mxu0 0
      %1463 = vmatpush1.bf16.msra.mxu0 %v1141
      %1464 = vmatprep.mubr.bf16.mxu0 %v590
      %1465 = vmatmul.mubr.bf16.gmra.mrb[0].mxu0 %v487
      %v1466 = vpop.f32.mrb[0].mxu0
      %v1467 = vadd.f32 %v1370, %v1466
      %v1468 = vpop.f32.mrb[0].mxu0
      %v1469 = vpop.f32.mrb[0].mxu0
      %v1470 = vadd.f32 %v1373, %v1469
      %v1471 = vpop.f32.mrb[0].mxu0
      %1472 = vmatprep.mubr.bf16.mxu0 %v593
      %1473 = vmatmul.mubr.bf16.gmra.mrb[0].mxu0 %v499
      %v1474 = vpop.f32.mrb[0].mxu0
      %v1475 = vadd.f32 %v1378, %v1474
      %v1476 = vpop.f32.mrb[0].mxu0
      %v1477 = vpop.f32.mrb[0].mxu0
      %v1478 = vadd.f32 %v1381, %v1477
      %v1479 = vpop.f32.mrb[0].mxu0
      %1480 = vmatprep.mubr.bf16.mxu0 %v596
      %1481 = vmatmul.mubr.bf16.gmra.mrb[0].mxu0 %v511
      %v1482 = vpop.f32.mrb[0].mxu0
      %v1483 = vadd.f32 %v1386, %v1482
      %v1484 = vpop.f32.mrb[0].mxu0
      %v1485 = vpop.f32.mrb[0].mxu0
      %v1486 = vadd.f32 %v1389, %v1485
      %v1487 = vpop.f32.mrb[0].mxu0
      %1488 = vmatprep.mubr.bf16.mxu0 %v599
      %1489 = vmatmul.mubr.bf16.gmra.mrb[0].mxu0 %v523
      %v1490 = vpop.f32.mrb[0].mxu0
      %v1491 = vadd.f32 %v1394, %v1490
      %v1492 = vpop.f32.mrb[0].mxu0
      %v1493 = vpop.f32.mrb[0].mxu0
      %v1494 = vadd.f32 %v1397, %v1493
      %v1495 = vpop.f32.mrb[0].mxu0
      %1496 = vmatprep.mubr.bf16.mxu0 %v602
      %1497 = vmatmul.mubr.bf16.gmra.mrb[0].mxu0 %v535
      %v1498 = vpop.f32.mrb[0].mxu0
      %v1499 = vadd.f32 %v1402, %v1498
      %v1500 = vpop.f32.mrb[0].mxu0
      %v1501 = vpop.f32.mrb[0].mxu0
      %v1502 = vadd.f32 %v1405, %v1501
      %v1503 = vpop.f32.mrb[0].mxu0
      %1504 = vmatprep.mubr.bf16.mxu0 %v605
      %1505 = vmatmul.mubr.bf16.gmra.mrb[0].mxu0 %v547
      %v1506 = vpop.f32.mrb[0].mxu0
      %v1507 = vadd.f32 %v1410, %v1506
      %v1508 = vpop.f32.mrb[0].mxu0
      %v1509 = vpop.f32.mrb[0].mxu0
      %v1510 = vadd.f32 %v1413, %v1509
      %v1511 = vpop.f32.mrb[0].mxu0
      %1512 = vmatprep.mubr.bf16.mxu0 %v608
      %1513 = vmatmul.mubr.bf16.gmra.mrb[0].mxu0 %v559
      %v1514 = vpop.f32.mrb[0].mxu0
      %v1515 = vadd.f32 %v1418, %v1514
      %v1516 = vpop.f32.mrb[0].mxu0
      %v1517 = vpop.f32.mrb[0].mxu0
      %v1518 = vadd.f32 %v1421, %v1517
      %v1519 = vpop.f32.mrb[0].mxu0
      %1520 = vmatprep.mubr.bf16.mxu0 %v634
      %1521 = vmatmul.mubr.bf16.gmra.mrb[0].mxu0 %v628
      %v1522 = vpop.f32.mrb[0].mxu0
      %v1523 = vadd.f32 %v1426, %v1522
      %v1524 = vpop.f32.mrb[0].mxu0
      %v1525 = vpop.f32.mrb[0].mxu0
      %v1526 = vadd.f32 %v1429, %v1525
      %v1527 = vpop.f32.mrb[0].mxu0
      %1528 = vdwg.mxu0
      %1529 = vmatprep.subr.bf16.mxu0 0
      %1530 = vmatpush1.bf16.msra.mxu0 %v1142
      %1531 = vmatprep.subr.bf16.mxu0 0
      %1532 = vmatpush1.bf16.msra.mxu0 %v1143
      %1533 = vmatprep.subr.bf16.mxu0 0
      %1534 = vmatpush1.bf16.msra.mxu0 %v1144
      %1535 = vmatprep.subr.bf16.mxu0 0
      %1536 = vmatpush1.bf16.msra.mxu0 %v1145
      %1537 = vmatprep.subr.bf16.mxu0 0
      %1538 = vmatpush1.bf16.msra.mxu0 %v1146
      %1539 = vmatprep.subr.bf16.mxu0 0
      %1540 = vmatpush1.bf16.msra.mxu0 %v1147
      %1541 = vmatprep.subr.bf16.mxu0 0
      %1542 = vmatpush1.bf16.msra.mxu0 %v1148
      %1543 = vmatprep.subr.bf16.mxu0 0
      %1544 = vmatpush1.bf16.msra.mxu0 %v1149
      %1545 = vmatprep.subr.bf16.mxu0 0
      %1546 = vmatpush1.bf16.msra.mxu0 %v1150
      %1547 = vmatprep.subr.bf16.mxu0 0
      %1548 = vmatpush1.bf16.msra.mxu0 %v1151
      %1549 = vmatprep.subr.bf16.mxu0 0
      %1550 = vmatpush1.bf16.msra.mxu0 %v1152
      %1551 = vmatprep.subr.bf16.mxu0 0
      %1552 = vmatpush1.bf16.msra.mxu0 %v1153
      %1553 = vmatprep.subr.bf16.mxu0 0
      %1554 = vmatpush1.bf16.msra.mxu0 %v1154
      %1555 = vmatprep.subr.bf16.mxu0 0
      %1556 = vmatpush1.bf16.msra.mxu0 %v1155
      %1557 = vmatprep.subr.bf16.mxu0 0
      %1558 = vmatpush1.bf16.msra.mxu0 %v1156
      %1559 = vmatprep.subr.bf16.mxu0 0
      %1560 = vmatpush1.bf16.msra.mxu0 %v1157
      %1561 = vmatprep.mubr.bf16.mxu0 %v499
      %1562 = vmatmul.mubr.bf16.gmra.mrb[0].mxu0 %v447
      %v1563 = vpop.f32.mrb[0].mxu0
      %v1564 = vadd.f32 %v1467, %v1563
      %v1565 = vpop.f32.mrb[0].mxu0
      %v1566 = vpop.f32.mrb[0].mxu0
      %v1567 = vadd.f32 %v1470, %v1566
      %v1568 = vpop.f32.mrb[0].mxu0
      %1569 = vmatprep.mubr.bf16.mxu0 %v511
      %1570 = vmatmul.mubr.bf16.gmra.mrb[0].mxu0 %v449
      %v1571 = vpop.f32.mrb[0].mxu0
      %v1572 = vadd.f32 %v1475, %v1571
      %v1573 = vpop.f32.mrb[0].mxu0
      %v1574 = vpop.f32.mrb[0].mxu0
      %v1575 = vadd.f32 %v1478, %v1574
      %v1576 = vpop.f32.mrb[0].mxu0
      %1577 = vmatprep.mubr.bf16.mxu0 %v523
      %1578 = vmatmul.mubr.bf16.gmra.mrb[0].mxu0 %v451
      %v1579 = vpop.f32.mrb[0].mxu0
      %v1580 = vadd.f32 %v1483, %v1579
      %v1581 = vpop.f32.mrb[0].mxu0
      %v1582 = vpop.f32.mrb[0].mxu0
      %v1583 = vadd.f32 %v1486, %v1582
      %v1584 = vpop.f32.mrb[0].mxu0
      %1585 = vmatprep.mubr.bf16.mxu0 %v535
      %1586 = vmatmul.mubr.bf16.gmra.mrb[0].mxu0 %v453
      %v1587 = vpop.f32.mrb[0].mxu0
      %v1588 = vadd.f32 %v1491, %v1587
      %v1589 = vpop.f32.mrb[0].mxu0
      %v1590 = vpop.f32.mrb[0].mxu0
      %v1591 = vadd.f32 %v1494, %v1590
      %v1592 = vpop.f32.mrb[0].mxu0
      %1593 = vmatprep.mubr.bf16.mxu0 %v547
      %1594 = vmatmul.mubr.bf16.gmra.mrb[0].mxu0 %v455
      %v1595 = vpop.f32.mrb[0].mxu0
      %v1596 = vadd.f32 %v1499, %v1595
      %v1597 = vpop.f32.mrb[0].mxu0
      %v1598 = vpop.f32.mrb[0].mxu0
      %v1599 = vadd.f32 %v1502, %v1598
      %v1600 = vpop.f32.mrb[0].mxu0
      %1601 = vmatprep.mubr.bf16.mxu0 %v559
      %1602 = vmatmul.mubr.bf16.gmra.mrb[0].mxu0 %v457
      %v1603 = vpop.f32.mrb[0].mxu0
      %v1604 = vadd.f32 %v1507, %v1603
      %v1605 = vpop.f32.mrb[0].mxu0
      %v1606 = vpop.f32.mrb[0].mxu0
      %v1607 = vadd.f32 %v1510, %v1606
      %v1608 = vpop.f32.mrb[0].mxu0
      %1609 = vmatprep.mubr.bf16.mxu0 %v628
      %1610 = vmatmul.mubr.bf16.gmra.mrb[0].mxu0 %v459
      %v1611 = vpop.f32.mrb[0].mxu0
      %v1612 = vadd.f32 %v1515, %v1611
      %v1613 = vpop.f32.mrb[0].mxu0
      %v1614 = vpop.f32.mrb[0].mxu0
      %v1615 = vadd.f32 %v1518, %v1614
      %v1616 = vpop.f32.mrb[0].mxu0
      %1617 = vmatprep.mubr.bf16.mxu0 %v647
      %1618 = vmatmul.mubr.bf16.gmra.mrb[0].mxu0 %v461
      %v1619 = vpop.f32.mrb[0].mxu0
      %v1620 = vadd.f32 %v1523, %v1619
      %v1621 = vpop.f32.mrb[0].mxu0
      %v1622 = vpop.f32.mrb[0].mxu0
      %v1623 = vadd.f32 %v1526, %v1622
      %v1624 = vpop.f32.mrb[0].mxu0
      %1625 = vdwg.mxu0
      %1626 = vmatprep.subr.bf16.mxu0 0
      %1627 = vmatpush1.bf16.msra.mxu0 %v1158
      %1628 = vmatprep.subr.bf16.mxu0 0
      %1629 = vmatpush1.bf16.msra.mxu0 %v1159
      %1630 = vmatprep.subr.bf16.mxu0 0
      %1631 = vmatpush1.bf16.msra.mxu0 %v1160
      %1632 = vmatprep.subr.bf16.mxu0 0
      %1633 = vmatpush1.bf16.msra.mxu0 %v1161
      %1634 = vmatprep.subr.bf16.mxu0 0
      %1635 = vmatpush1.bf16.msra.mxu0 %v1162
      %1636 = vmatprep.subr.bf16.mxu0 0
      %1637 = vmatpush1.bf16.msra.mxu0 %v1163
      %1638 = vmatprep.subr.bf16.mxu0 0
      %1639 = vmatpush1.bf16.msra.mxu0 %v1164
      %1640 = vmatprep.subr.bf16.mxu0 0
      %1641 = vmatpush1.bf16.msra.mxu0 %v1165
      %1642 = vmatprep.subr.bf16.mxu0 0
      %1643 = vmatpush1.bf16.msra.mxu0 0
      %1644 = vmatprep.subr.bf16.mxu0 0
      %1645 = vmatpush1.bf16.msra.mxu0 0
      %1646 = vmatprep.subr.bf16.mxu0 0
      %1647 = vmatpush1.bf16.msra.mxu0 0
      %1648 = vmatprep.subr.bf16.mxu0 0
      %1649 = vmatpush1.bf16.msra.mxu0 0
      %1650 = vmatprep.subr.bf16.mxu0 0
      %1651 = vmatpush1.bf16.msra.mxu0 0
      %1652 = vmatprep.subr.bf16.mxu0 0
      %1653 = vmatpush1.bf16.msra.mxu0 0
      %1654 = vmatprep.subr.bf16.mxu0 0
      %1655 = vmatpush1.bf16.msra.mxu0 0
      %1656 = vmatprep.subr.bf16.mxu0 0
      %1657 = vmatpush1.bf16.msra.mxu0 0
      %1658 = vmatprep.mubr.bf16.mxu0 0
      %1659 = vmatmul.mubr.bf16.gmra.mrb[0].mxu0 %v593
      %v1660 = vpop.f32.mrb[0].mxu0
      %v1661 = vadd.f32 %v1564, %v1660
      %v1662 = vpop.f32.mrb[0].mxu0
      %v1663 = vpop.f32.mrb[0].mxu0
      %v1664 = vadd.f32 %v1567, %v1663
      %v1665 = vpop.f32.mrb[0].mxu0
      %1666 = vmatprep.mubr.bf16.mxu0 0
      %1667 = vmatmul.mubr.bf16.gmra.mrb[0].mxu0 %v596
      %v1668 = vpop.f32.mrb[0].mxu0
      %v1669 = vadd.f32 %v1572, %v1668
      %v1670 = vpop.f32.mrb[0].mxu0
      %v1671 = vpop.f32.mrb[0].mxu0
      %v1672 = vadd.f32 %v1575, %v1671
      %v1673 = vpop.f32.mrb[0].mxu0
      %1674 = vmatprep.mubr.bf16.mxu0 0
      %1675 = vmatmul.mubr.bf16.gmra.mrb[0].mxu0 %v599
      %v1676 = vpop.f32.mrb[0].mxu0
      %v1677 = vadd.f32 %v1580, %v1676
      %v1678 = vpop.f32.mrb[0].mxu0
      %v1679 = vpop.f32.mrb[0].mxu0
      %v1680 = vadd.f32 %v1583, %v1679
      %v1681 = vpop.f32.mrb[0].mxu0
      %1682 = vmatprep.mubr.bf16.mxu0 0
      %1683 = vmatmul.mubr.bf16.gmra.mrb[0].mxu0 %v602
      %v1684 = vpop.f32.mrb[0].mxu0
      %v1685 = vadd.f32 %v1588, %v1684
      %v1686 = vpop.f32.mrb[0].mxu0
      %v1687 = vpop.f32.mrb[0].mxu0
      %v1688 = vadd.f32 %v1591, %v1687
      %v1689 = vpop.f32.mrb[0].mxu0
      %1690 = vmatprep.mubr.bf16.mxu0 0
      %1691 = vmatmul.mubr.bf16.gmra.mrb[0].mxu0 %v605
      %v1692 = vpop.f32.mrb[0].mxu0
      %v1693 = vadd.f32 %v1596, %v1692
      %v1694 = vpop.f32.mrb[0].mxu0
      %v1695 = vpop.f32.mrb[0].mxu0
      %v1696 = vadd.f32 %v1599, %v1695
      %v1697 = vpop.f32.mrb[0].mxu0
      %1698 = vmatprep.mubr.bf16.mxu0 0
      %1699 = vmatmul.mubr.bf16.gmra.mrb[0].mxu0 %v608
      %v1700 = vpop.f32.mrb[0].mxu0
      %v1701 = vadd.f32 %v1604, %v1700
      %v1702 = vpop.f32.mrb[0].mxu0
      %v1703 = vpop.f32.mrb[0].mxu0
      %v1704 = vadd.f32 %v1607, %v1703
      %v1705 = vpop.f32.mrb[0].mxu0
      %1706 = vmatprep.mubr.bf16.mxu0 0
      %1707 = vmatmul.mubr.bf16.gmra.mrb[0].mxu0 %v634
      %v1708 = vpop.f32.mrb[0].mxu0
      %v1709 = vadd.f32 %v1612, %v1708
      %v1710 = vpop.f32.mrb[0].mxu0
      %v1711 = vpop.f32.mrb[0].mxu0
      %v1712 = vadd.f32 %v1615, %v1711
      %v1713 = vpop.f32.mrb[0].mxu0
      %1714 = vmatprep.mubr.bf16.mxu0 0
      %1715 = vmatmul.mubr.bf16.gmra.mrb[0].mxu0 %v653
      %v1716 = vpop.f32.mrb[0].mxu0
      %v1717 = vadd.f32 %v1620, %v1716
      %v1718 = vpop.f32.mrb[0].mxu0
      %v1719 = vpop.f32.mrb[0].mxu0
      %v1720 = vadd.f32 %v1623, %v1719
      %v1721 = vpop.f32.mrb[0].mxu0
      %1722 = vdwg.mxu0
      %p1723 = scmp.eq.s32.totalorder %s24, 0
      // Predicated region
      $region75: #{conv_block_forward.3} parent=35 // pred_check
        %p1724 = pneg %p1723
      $region76: #{conv_block_forward.3} parent=35 // pred_check_branch
        %1726 = sbr.rel (%p1724) target = $region78
      $region77: #{conv_block_forward.3} parent=35 // pred_region
        %1727 = vst [vmem:[%s271] sm:$0x1] 0.0
        %1728 = vst [vmem:[%s274] sm:$0x1] 0.0
      $region78: #{conv_block_forward.3} parent=35 // pred_fallthru
        _
      %v1729 = vld [vmem:[%s271] sm:$0x1]
      %v1730 = vadd.f32 %v1661, %v1664
      %v1731 = vadd.f32 %v1730, %v1669
      %v1732 = vadd.f32 %v1731, %v1672
      %v1733 = vadd.f32 %v1732, %v1677
      %v1734 = vadd.f32 %v1733, %v1680
      %v1735 = vadd.f32 %v1734, %v1685
      %v1736 = vadd.f32 %v1735, %v1688
      %v1737 = vadd.f32 %v1736, %v1693
      %v1738 = vadd.f32 %v1737, %v1696
      %v1739 = vadd.f32 %v1738, %v1701
      %v1740 = vadd.f32 %v1739, %v1704
      %v1741 = vadd.f32 %v1740, %v1709
      %v1742 = vadd.f32 %v1741, %v1712
      %v1743 = vadd.f32 %v1742, %v1717
      %v1744 = vadd.f32 %v1743, %v1720
      %v1745 = vrot.slane %v1744, 4
      %v1746 = vadd.f32 %v1744, %v1745
      %v1747 = vrot.slane %v1746, 2
      %v1748 = vadd.f32 %v1746, %v1747
      %v1749 = vrot.slane %v1748, 1
      %v1750 = vadd.f32 %v1748, %v1749
      %v1751 = vadd.f32 %v1729, %v1750
      %1752 = vst [vmem:[%s271] sm:$0x1] %v1751
      %v1753 = vld [vmem:[%s274] sm:$0x1]
      %v1754 = vmul.f32 %v1661, %v1661
      %v1755 = vmul.f32 %v1664, %v1664
      %v1756 = vmul.f32 %v1669, %v1669
      %v1757 = vmul.f32 %v1672, %v1672
      %v1758 = vmul.f32 %v1677, %v1677
      %v1759 = vmul.f32 %v1680, %v1680
      %v1760 = vmul.f32 %v1685, %v1685
      %v1761 = vmul.f32 %v1688, %v1688
      %v1762 = vmul.f32 %v1693, %v1693
      %v1763 = vmul.f32 %v1696, %v1696
      %v1764 = vmul.f32 %v1701, %v1701
      %v1765 = vmul.f32 %v1704, %v1704
      %v1766 = vmul.f32 %v1709, %v1709
      %v1767 = vmul.f32 %v1712, %v1712
      %v1768 = vmul.f32 %v1717, %v1717
      %v1769 = vmul.f32 %v1720, %v1720
      %v1770 = vadd.f32 %v1754, %v1755
      %v1771 = vadd.f32 %v1770, %v1756
      %v1772 = vadd.f32 %v1771, %v1757
      %v1773 = vadd.f32 %v1772, %v1758
      %v1774 = vadd.f32 %v1773, %v1759
      %v1775 = vadd.f32 %v1774, %v1760
      %v1776 = vadd.f32 %v1775, %v1761
      %v1777 = vadd.f32 %v1776, %v1762
      %v1778 = vadd.f32 %v1777, %v1763
      %v1779 = vadd.f32 %v1778, %v1764
      %v1780 = vadd.f32 %v1779, %v1765
      %v1781 = vadd.f32 %v1780, %v1766
      %v1782 = vadd.f32 %v1781, %v1767
      %v1783 = vadd.f32 %v1782, %v1768
      %v1784 = vadd.f32 %v1783, %v1769
      %v1785 = vrot.slane %v1784, 4
      %v1786 = vadd.f32 %v1784, %v1785
      %v1787 = vrot.slane %v1786, 2
      %v1788 = vadd.f32 %v1786, %v1787
      %v1789 = vrot.slane %v1788, 1
      %v1790 = vadd.f32 %v1788, %v1789
      %v1791 = vadd.f32 %v1753, %v1790
      %1792 = vst [vmem:[%s274] sm:$0x1] %v1791
      %1793 = vst [vmem:[%s267] sm:$0xff] %v1661
      %1794 = vst [vmem:[%s267 + $0x8] sm:$0xff] %v1664
      %1795 = vst [vmem:[%s267 + $0x10] sm:$0xff] %v1669
      %1796 = vst [vmem:[%s267 + $0x18] sm:$0xff] %v1672
      %1797 = vst [vmem:[%s267 + $0x20] sm:$0xff] %v1677
      %1798 = vst [vmem:[%s267 + $0x28] sm:$0xff] %v1680
      %1799 = vst [vmem:[%s267 + $0x30] sm:$0xff] %v1685
      %1800 = vst [vmem:[%s267 + $0x38] sm:$0xff] %v1688
      %1801 = vst [vmem:[%s267 + $0x40] sm:$0xff] %v1693
      %1802 = vst [vmem:[%s267 + $0x48] sm:$0xff] %v1696
      %1803 = vst [vmem:[%s267 + $0x50] sm:$0xff] %v1701
      %1804 = vst [vmem:[%s267 + $0x58] sm:$0xff] %v1704
      %1805 = vst [vmem:[%s267 + $0x60] sm:$0xff] %v1709
      %1806 = vst [vmem:[%s267 + $0x68] sm:$0xff] %v1712
      %1807 = vst [vmem:[%s267 + $0x70] sm:$0xff] %v1717
      %1808 = vst [vmem:[%s267 + $0x78] sm:$0xff] %v1720
      %s1809 = smul.u32 8, %s24
      %p1810 = scmp.lt.s32.totalorder %s23, 1
      %s1811 = scalar_select %p1810, %s23, 1
      %p1812 = scmp.lt.s32.totalorder %s1809, 15
      %s1813 = scalar_select %p1812, %s1809, 15
      %s1814 = smul.addr %s1813, 2
      %s1815 = smul.addr %s1811, 32
      %s1816 = sadd.s32 %s1814, %s1815
      %s1817 = smul.addr %s1816, 8
      %s1818 = scalar_lea.vmem %s5, %s1817
      %p1819 = scmp.lt.s32.totalorder %s23, 1
      %s1820 = scalar_select %p1819, %s23, 1
      %s1821 = scalar_lea.vmem %s6, %s1820
      %p1822 = scmp.lt.s32.totalorder %s23, 1
      %s1823 = scalar_select %p1822, %s23, 1
      %s1824 = scalar_lea.vmem %s7, %s1823
      // Predicated region
      $region79: #{conv_block_forward.3} parent=35 // pred_check
        %p1825 = pneg %p135
      $region80: #{conv_block_forward.3} parent=35 // pred_check_branch
        %1827 = sbr.rel (%p1825) target = $region82
      $region81: #{conv_block_forward.3} parent=35 // pred_region
        %s1828 = smul.u32 8, %s24
      $region82: #{conv_block_forward.3} parent=35 // pred_fallthru
        _
      // Predicated region
      $region83: #{conv_block_forward.3} parent=35 // pred_check
        %p1829 = pneg %p161
      $region84: #{conv_block_forward.3} parent=35 // pred_check_branch
        %1831 = sbr.rel (%p1829) target = $region86
      $region85: #{conv_block_forward.3} parent=35 // pred_region
        _
      $region86: #{conv_block_forward.3} parent=35 // pred_fallthru
        _
      // Predicated region
      $region87: #{conv_block_forward.3} parent=35 // pred_check
        %p1832 = pneg %p187
      $region88: #{conv_block_forward.3} parent=35 // pred_check_branch
        %1834 = sbr.rel (%p1832) target = $region90
      $region89: #{conv_block_forward.3} parent=35 // pred_region
        _
      $region90: #{conv_block_forward.3} parent=35 // pred_fallthru
        _
    $region36: #{conv_block_forward.3} parent=5 // pred_fallthru
      _
    %p1835 = scmp.le.s32.totalorder 2, %s14
    // Predicated region
    $region91: #{conv_block_forward.3} parent=5 // pred_check
      %p1836 = pneg %p1835
    $region92: #{conv_block_forward.3} parent=5 // pred_check_branch
      %1838 = sbr.rel (%p1836) target = $region94
    $region93: #{conv_block_forward.3} parent=5 // pred_region
      %s1839 = ssub.s32 %s14, 2
      // Predicated region
      $region95: #{conv_block_forward.3} parent=93 // pred_check
        %p1840 = pneg %p141
      $region96: #{conv_block_forward.3} parent=93 // pred_check_branch
        %1842 = sbr.rel (%p1840) target = $region98
      $region97: #{conv_block_forward.3} parent=93 // pred_region
        %s1843 = smul.u32 8, %s26
        %p1844 = scmp.lt.s32.totalorder %s25, 1
        %s1845 = scalar_select %p1844, %s25, 1
        %p1846 = scmp.lt.s32.totalorder %s1843, 15
        %s1847 = scalar_select %p1846, %s1843, 15
        %s1848 = smul.addr %s1847, 2
        %s1849 = smul.addr %s1845, 32
        %s1850 = sadd.s32 %s1848, %s1849
        %s1851 = smul.addr %s1850, 8
        %s1852 = scalar_lea.vmem %s5, %s1851
      $region98: #{conv_block_forward.3} parent=93 // pred_fallthru
        _
      // Predicated region
      $region99: #{conv_block_forward.3} parent=93 // pred_check
        %p1853 = pneg %p167
      $region100: #{conv_block_forward.3} parent=93 // pred_check_branch
        %1855 = sbr.rel (%p1853) target = $region102
      $region101: #{conv_block_forward.3} parent=93 // pred_region
        %p1856 = scmp.lt.s32.totalorder %s25, 1
        %s1857 = scalar_select %p1856, %s25, 1
        %s1858 = scalar_lea.vmem %s6, %s1857
      $region102: #{conv_block_forward.3} parent=93 // pred_fallthru
        _
      // Predicated region
      $region103: #{conv_block_forward.3} parent=93 // pred_check
        %p1859 = pneg %p193
      $region104: #{conv_block_forward.3} parent=93 // pred_check_branch
        %1861 = sbr.rel (%p1859) target = $region106
      $region105: #{conv_block_forward.3} parent=93 // pred_region
        %p1862 = scmp.lt.s32.totalorder %s25, 1
        %s1863 = scalar_select %p1862, %s25, 1
        %s1864 = scalar_lea.vmem %s7, %s1863
      $region106: #{conv_block_forward.3} parent=93 // pred_fallthru
        _
    $region94: #{conv_block_forward.3} parent=5 // pred_fallthru
      _
  $region6: #{conv_block_forward.3} parent=0 // loop_footer
    %s18 = sadd.s32 1, %s14
  $region7: #{conv_block_forward.3} parent=0 // loop_footer_branch
    %13 = sbr.rel target = $region3
  $region8: #{conv_block_forward.3} parent=0 // loop_exit
    _

// kernel: conv_block_forward.4
$region0: #{conv_block_forward.4}
  #allocation0 [shape = 'u32[]', space=smem, size = 0x4, offset = 0x4, fixed_abs, tag = 'smem constant byte address 0x4 - core index']
  #allocation1 [shape = 'u32[144,128]{1,0:T(1,128)}', space=vmem, size = 0x12000, scoped, tag = 'internal scratch']
  #allocation2 [shape = 'f32[10,18,128]{2,1,0:T(8,128)}', space=vmem, size = 0x1e000, scoped, tag = 'scratch operand']
  #allocation4 [shape = 's32[]', space=sflag, size = 0x4, offset = 0, fixed_abs, tag = 'sflag constant byte address 0x0 - dummy sync flag']
  %s0 = inlined_call_operand.vmem [shape: f32[2,18,18,128], index: 0, kind: input, shape index: {}]
  %s1 = inlined_call_operand.vmem [shape: bf16[1152,128], index: 1, kind: input, shape index: {}]
  %s2 = inlined_call_operand.vmem [shape: f32[1,128], index: 2, kind: input, shape index: {}]
  %s3 = inlined_call_operand.vmem [shape: f32[1,128], index: 3, kind: input, shape index: {}]
  %s4 = inlined_call_operand.vmem [shape: f32[1,128], index: 4, kind: input, shape index: {}]
  %s5 = inlined_call_operand.vmem [shape: f32[2,16,16,128], index: 5, kind: output, shape index: {0}]
  %s6 = inlined_call_operand.vmem [shape: f32[2,1,128], index: 6, kind: output, shape index: {1}]
  %s7 = inlined_call_operand.vmem [shape: f32[2,1,128], index: 7, kind: output, shape index: {2}]
  %8 = xla_tuple %s5, %s6, %s7
  %s9 = sld [smem:[#allocation0]]
  $region107: #{conv_block_forward.4} parent=0
    _
  %s11 = ssub.s32 1, %s9
  %s12 = scalar_select 0, %s11, %s9
  loop: start=0, step=1, limit=6
  $region2: #{conv_block_forward.4} parent=0 // loop_pre_header
    _
  $region3: #{conv_block_forward.4} parent=0 // loop_header
    %s14 = sphi 0, %s18
    %p15 = scmp.ge.s32.totalorder %s14, 6
    %s21 = sphi 0, %s33
    %s22 = sphi 0, %s29
    %s23 = sphi 0, %s21
    %s24 = sphi 0, %s22
    %s25 = sphi 0, %s23
    %s26 = sphi 0, %s24
    %s34 = sphi 0, %s34
    %s36 = sphi 0, %s34
    %s37 = sphi 0, %s36
    %s51 = sphi 0, %s37
    %s55 = sphi 0, %s55
    %s57 = sphi 0, %s55
    %s58 = sphi 0, %s57
    %s72 = sphi 0, %s58
    %s76 = sphi 0, %s76
    %s78 = sphi 0, %s76
    %s79 = sphi 0, %s78
    %s93 = sphi 0, %s79
    %s97 = sphi 0, %s97
    %s99 = sphi 0, %s97
    %s100 = sphi 0, %s99
    %s114 = sphi 0, %s100
    %s122 = sphi 0, %s124
    %s125 = sphi 0, %s122
    %s126 = sphi 0, %s125
    %s142 = sphi 0, %s126
    %s148 = sphi 0, %s150
    %s151 = sphi 0, %s148
    %s152 = sphi 0, %s151
    %s168 = sphi 0, %s152
    %s174 = sphi 0, %s176
    %s177 = sphi 0, %s174
    %s178 = sphi 0, %s177
    %s194 = sphi 0, %s178
  $region4: #{conv_block_forward.4} parent=0 // loop_header_branch
    %17 = sbr.rel (%p15) target = $region8
  $region5: #{conv_block_forward.4} parent=0 // loop_body
    %s19 = ssub.s32 %s14, 1
    %s20 = ssub.s32 %s14, 2
    %s27 = sadd.s32 1, %s22
    %p28 = scmp.ge.s32.totalorder %s27, 2
    %s29 = scalar_select %p28, 0, %s27
    %s30 = sadd.s32 1, %s21
    %s31 = scalar_select %p28, %s30, %s21
    %p32 = scmp.ge.s32.totalorder %s31, 2
    %s33 = scalar_select %p32, 0, %s31
    %s35 = sadd.s32 %s34, 1
    %p38 = scmp.eq.s32.totalorder %s14, 3
    %p39 = scmp.ne.s32.totalorder %s34, %s36
    %p40 = scmp.eq.s32.totalorder %s14, 0
    %p41 = por %p39, %p40
    %p42 = scmp.ne.s32.totalorder %s34, %s36
    %p43 = scmp.eq.s32.totalorder %s19, 3
    %p44 = por %p42, %p43
    %p45 = scmp.ne.s32.totalorder %s36, %s37
    %p46 = scmp.eq.s32.totalorder %s19, 0
    %p47 = por %p45, %p46
    %p48 = scmp.ne.s32.totalorder %s36, %s37
    %p49 = scmp.eq.s32.totalorder %s20, 3
    %p50 = por %p48, %p49
    %p52 = scmp.ne.s32.totalorder %s37, %s51
    %p53 = scmp.eq.s32.totalorder %s20, 0
    %p54 = por %p52, %p53
    %s56 = sadd.s32 %s55, 1
    %p59 = scmp.eq.s32.totalorder %s14, 3
    %p60 = scmp.ne.s32.totalorder %s55, %s57
    %p61 = scmp.eq.s32.totalorder %s14, 0
    %p62 = por %p60, %p61
    %p63 = scmp.ne.s32.totalorder %s55, %s57
    %p64 = scmp.eq.s32.totalorder %s19, 3
    %p65 = por %p63, %p64
    %p66 = scmp.ne.s32.totalorder %s57, %s58
    %p67 = scmp.eq.s32.totalorder %s19, 0
    %p68 = por %p66, %p67
    %p69 = scmp.ne.s32.totalorder %s57, %s58
    %p70 = scmp.eq.s32.totalorder %s20, 3
    %p71 = por %p69, %p70
    %p73 = scmp.ne.s32.totalorder %s58, %s72
    %p74 = scmp.eq.s32.totalorder %s20, 0
    %p75 = por %p73, %p74
    %s77 = sadd.s32 %s76, 1
    %p80 = scmp.eq.s32.totalorder %s14, 3
    %p81 = scmp.ne.s32.totalorder %s76, %s78
    %p82 = scmp.eq.s32.totalorder %s14, 0
    %p83 = por %p81, %p82
    %p84 = scmp.ne.s32.totalorder %s76, %s78
    %p85 = scmp.eq.s32.totalorder %s19, 3
    %p86 = por %p84, %p85
    %p87 = scmp.ne.s32.totalorder %s78, %s79
    %p88 = scmp.eq.s32.totalorder %s19, 0
    %p89 = por %p87, %p88
    %p90 = scmp.ne.s32.totalorder %s78, %s79
    %p91 = scmp.eq.s32.totalorder %s20, 3
    %p92 = por %p90, %p91
    %p94 = scmp.ne.s32.totalorder %s79, %s93
    %p95 = scmp.eq.s32.totalorder %s20, 0
    %p96 = por %p94, %p95
    %s98 = sadd.s32 %s97, 1
    %p101 = scmp.eq.s32.totalorder %s14, 3
    %p102 = scmp.ne.s32.totalorder %s97, %s99
    %p103 = scmp.eq.s32.totalorder %s14, 0
    %p104 = por %p102, %p103
    %p105 = scmp.ne.s32.totalorder %s97, %s99
    %p106 = scmp.eq.s32.totalorder %s19, 3
    %p107 = por %p105, %p106
    %p108 = scmp.ne.s32.totalorder %s99, %s100
    %p109 = scmp.eq.s32.totalorder %s19, 0
    %p110 = por %p108, %p109
    %p111 = scmp.ne.s32.totalorder %s99, %s100
    %p112 = scmp.eq.s32.totalorder %s20, 3
    %p113 = por %p111, %p112
    %p115 = scmp.ne.s32.totalorder %s100, %s114
    %p116 = scmp.eq.s32.totalorder %s20, 0
    %p117 = por %p115, %p116
    %s118 = ssub.s32 %s21, %s33
    %s119 = ssub.s32 %s22, %s29
    %s120 = sor.u32 %s118, %s119
    %p121 = scmp.eq.s32.totalorder %s120, 0
    %s123 = sadd.s32 %s122, 1
    %s124 = scalar_select %p121, %s122, %s123
    %p127 = pneg %p121
    %p128 = scmp.eq.s32.totalorder %s14, 3
    %p129 = por %p127, %p128
    %p130 = scmp.ne.s32.totalorder %s122, %s125
    %p131 = scmp.eq.s32.totalorder %s14, 0
    %p132 = por %p130, %p131
    %p133 = scmp.ne.s32.totalorder %s122, %s125
    %p134 = scmp.eq.s32.totalorder %s19, 3
    %p135 = por %p133, %p134
    %p136 = scmp.ne.s32.totalorder %s125, %s126
    %p137 = scmp.eq.s32.totalorder %s19, 0
    %p138 = por %p136, %p137
    %p139 = scmp.ne.s32.totalorder %s125, %s126
    %p140 = scmp.eq.s32.totalorder %s20, 3
    %p141 = por %p139, %p140
    %p143 = scmp.ne.s32.totalorder %s126, %s142
    %p144 = scmp.eq.s32.totalorder %s20, 0
    %p145 = por %p143, %p144
    %s146 = ssub.s32 %s21, %s33
    %p147 = scmp.eq.s32.totalorder %s146, 0
    %s149 = sadd.s32 %s148, 1
    %s150 = scalar_select %p147, %s148, %s149
    %p153 = pneg %p147
    %p154 = scmp.eq.s32.totalorder %s14, 3
    %p155 = por %p153, %p154
    %p156 = scmp.ne.s32.totalorder %s148, %s151
    %p157 = scmp.eq.s32.totalorder %s14, 0
    %p158 = por %p156, %p157
    %p159 = scmp.ne.s32.totalorder %s148, %s151
    %p160 = scmp.eq.s32.totalorder %s19, 3
    %p161 = por %p159, %p160
    %p162 = scmp.ne.s32.totalorder %s151, %s152
    %p163 = scmp.eq.s32.totalorder %s19, 0
    %p164 = por %p162, %p163
    %p165 = scmp.ne.s32.totalorder %s151, %s152
    %p166 = scmp.eq.s32.totalorder %s20, 3
    %p167 = por %p165, %p166
    %p169 = scmp.ne.s32.totalorder %s152, %s168
    %p170 = scmp.eq.s32.totalorder %s20, 0
    %p171 = por %p169, %p170
    %s172 = ssub.s32 %s21, %s33
    %p173 = scmp.eq.s32.totalorder %s172, 0
    %s175 = sadd.s32 %s174, 1
    %s176 = scalar_select %p173, %s174, %s175
    %p179 = pneg %p173
    %p180 = scmp.eq.s32.totalorder %s14, 3
    %p181 = por %p179, %p180
    %p182 = scmp.ne.s32.totalorder %s174, %s177
    %p183 = scmp.eq.s32.totalorder %s14, 0
    %p184 = por %p182, %p183
    %p185 = scmp.ne.s32.totalorder %s174, %s177
    %p186 = scmp.eq.s32.totalorder %s19, 3
    %p187 = por %p185, %p186
    %p188 = scmp.ne.s32.totalorder %s177, %s178
    %p189 = scmp.eq.s32.totalorder %s19, 0
    %p190 = por %p188, %p189
    %p191 = scmp.ne.s32.totalorder %s177, %s178
    %p192 = scmp.eq.s32.totalorder %s20, 3
    %p193 = por %p191, %p192
    %p195 = scmp.ne.s32.totalorder %s178, %s194
    %p196 = scmp.eq.s32.totalorder %s20, 0
    %p197 = por %p195, %p196
    %p198 = scmp.le.s32.totalorder 1, %s14
    %p199 = scmp.lt.s32.totalorder %s14, 5
    %p200 = pnand %p198, %p199
    %p201 = pneg %p200
    // Predicated region
    $region9: #{conv_block_forward.4} parent=5 // pred_check
      _
    $region10: #{conv_block_forward.4} parent=5 // pred_check_branch
      %203 = sbr.rel (%p200) target = $region12
    $region11: #{conv_block_forward.4} parent=5 // pred_region
      %s204 = ssub.s32 %s14, 1
      // Predicated region
      $region13: #{conv_block_forward.4} parent=11 // pred_check
        %p205 = pneg %p47
      $region14: #{conv_block_forward.4} parent=11 // pred_check_branch
        %207 = sbr.rel (%p205) target = $region16
      $region15: #{conv_block_forward.4} parent=11 // pred_region
        _
      $region16: #{conv_block_forward.4} parent=11 // pred_fallthru
        _
      // Predicated region
      $region17: #{conv_block_forward.4} parent=11 // pred_check
        %p208 = pneg %p68
      $region18: #{conv_block_forward.4} parent=11 // pred_check_branch
        %210 = sbr.rel (%p208) target = $region20
      $region19: #{conv_block_forward.4} parent=11 // pred_region
        _
      $region20: #{conv_block_forward.4} parent=11 // pred_fallthru
        _
      // Predicated region
      $region21: #{conv_block_forward.4} parent=11 // pred_check
        %p211 = pneg %p89
      $region22: #{conv_block_forward.4} parent=11 // pred_check_branch
        %213 = sbr.rel (%p211) target = $region24
      $region23: #{conv_block_forward.4} parent=11 // pred_region
        _
      $region24: #{conv_block_forward.4} parent=11 // pred_fallthru
        _
      // Predicated region
      $region25: #{conv_block_forward.4} parent=11 // pred_check
        %p214 = pneg %p110
      $region26: #{conv_block_forward.4} parent=11 // pred_check_branch
        %216 = sbr.rel (%p214) target = $region28
      $region27: #{conv_block_forward.4} parent=11 // pred_region
        _
      $region28: #{conv_block_forward.4} parent=11 // pred_fallthru
        _
    $region12: #{conv_block_forward.4} parent=5 // pred_fallthru
      _
    %p217 = scmp.lt.s32.totalorder %s14, 4
    // Predicated region
    $region29: #{conv_block_forward.4} parent=5 // pred_check
      %p218 = pneg %p217
    $region30: #{conv_block_forward.4} parent=5 // pred_check_branch
      %220 = sbr.rel (%p218) target = $region32
    $region31: #{conv_block_forward.4} parent=5 // pred_region
      _
    $region32: #{conv_block_forward.4} parent=5 // pred_fallthru
      _
    %p221 = scmp.le.s32.totalorder 1, %s14
    %p222 = scmp.lt.s32.totalorder %s14, 5
    %p223 = pnand %p221, %p222
    %p224 = pneg %p223
    // Predicated region
    $region33: #{conv_block_forward.4} parent=5 // pred_check
      _
    $region34: #{conv_block_forward.4} parent=5 // pred_check_branch
      %226 = sbr.rel (%p223) target = $region36
    $region35: #{conv_block_forward.4} parent=5 // pred_region
      %s227 = ssub.s32 %s14, 1
      %p228 = pneg %p47
      %p229 = pneg %p44
      %p230 = pneg %p68
      %p231 = pneg %p65
      %p232 = pneg %p89
      %p233 = pneg %p86
      %p234 = pneg %p110
      %p235 = pneg %p107
      %p236 = pneg %p138
      %p237 = pneg %p135
      %s238 = smul.u32 8, %s24
      %p239 = scmp.lt.s32.totalorder %s23, 1
      %s240 = scalar_select %p239, %s23, 1
      %p241 = scmp.lt.s32.totalorder %s238, 15
      %s242 = scalar_select %p241, %s238, 15
      %s243 = smul.addr %s242, 2
      %s244 = smul.addr %s240, 32
      %s245 = sadd.s32 %s243, %s244
      %s246 = smul.addr %s245, 8
      %s247 = scalar_lea.vmem %s5, %s246
      %p248 = pneg %p164
      %p249 = pneg %p161
      %p250 = scmp.lt.s32.totalorder %s23, 1
      %s251 = scalar_select %p250, %s23, 1
      %s252 = scalar_lea.vmem %s6, %s251
      %p253 = pneg %p190
      %p254 = pneg %p187
      %p255 = scmp.lt.s32.totalorder %s23, 1
      %s256 = scalar_select %p255, %s23, 1
      %s257 = scalar_lea.vmem %s7, %s256
      %s258 = smul.u32 8, %s24
      %p259 = scmp.lt.s32.totalorder %s23, 1
      %s260 = scalar_select %p259, %s23, 1
      %p261 = scmp.lt.s32.totalorder %s258, 15
      %s262 = scalar_select %p261, %s258, 15
      %s263 = smul.addr %s262, 2
      %s264 = smul.addr %s260, 32
      %s265 = sadd.s32 %s263, %s264
      %s266 = smul.addr %s265, 8
      %s267 = scalar_lea.vmem %s5, %s266
      %s268 = smul.u32 8, %s24
      %p269 = scmp.lt.s32.totalorder %s23, 1
      %s270 = scalar_select %p269, %s23, 1
      %s271 = scalar_lea.vmem %s6, %s270
      %p272 = scmp.lt.s32.totalorder %s23, 1
      %s273 = scalar_select %p272, %s23, 1
      %s274 = scalar_lea.vmem %s7, %s273
      %s276 = smul.u32 %s24, 8
      $region37: #{conv_block_forward.4} parent=35
        #allocation3 [shape = 's32[1]{0}', space=sflag, size = 0x4, scoped, tag = 'scoped memory for conv_block_forward.4']
        %s277 = smul.u32 %s276, 24
        %s278 = smul.u32 %s23, 432
        %s279 = sadd.s32 %s277, %s278
        %s280 = scalar_lea.vmem %s0, %s279
        %p282 = scmp.lt.u32.totalorder 18, 8
        %p283 = pneg %p282
        // Predicated region
        $region38: #{conv_block_forward.4} parent=37 // pred_check
          _
        $region39: #{conv_block_forward.4} parent=37 // pred_check_branch
          %285 = sbr.rel (%p282) target = $region41
        $region40: #{conv_block_forward.4} parent=37 // pred_region
          %s318 = sand.u32 18, 7
          %p319 = scmp.eq.s32.totalorder %s318, 0
          %p320 = pneg %p319
          // Predicated region
          $region53: #{conv_block_forward.4} parent=40 // pred_check
            _
          $region54: #{conv_block_forward.4} parent=40 // pred_check_branch
            %322 = sbr.rel (%p319) target = $region56
          $region55: #{conv_block_forward.4} parent=40 // pred_region
            %s323 = sand.u32 18, 7
            %s324 = ssub.s32 18, %s323
            %s325 = scalar_lea.vmem %s280, %s324
            %s326 = ssub.s32 18, %s323
            %s327 = scalar_lea.vmem [#allocation2], %s326
            loop: start=0, step=1, limit=1
            $region57: #{conv_block_forward.4} parent=55 // loop_pre_header
              _
            $region58: #{conv_block_forward.4} parent=55 // loop_header
              %s329 = sphi 0, %s333
              %p330 = scmp.ge.s32.totalorder %s329, 1
              %s334 = sphi %s280, %s280
              %s335 = sphi [#allocation2], [#allocation2]
            $region59: #{conv_block_forward.4} parent=55 // loop_header_branch
              %332 = sbr.rel (%p330) target = $region63
            $region60: #{conv_block_forward.4} parent=55 // loop_body
              %v336 = vld [vmem:[%s334] sm:$0xff]
              %337 = vst [vmem:[%s335] sm:$0xff] %v336
              %v338 = vld [vmem:[%s334 + $0x8] sm:$0xff]
              %339 = vst [vmem:[%s335 + $0x8] sm:$0xff] %v338
              %v340 = vld [vmem:[%s334 + $0x18] sm:$0xff]
              %341 = vst [vmem:[%s335 + $0x18] sm:$0xff] %v340
              %v342 = vld [vmem:[%s334 + $0x20] sm:$0xff]
              %343 = vst [vmem:[%s335 + $0x20] sm:$0xff] %v342
              %v344 = vld [vmem:[%s334 + $0x30] sm:$0xff]
              %345 = vst [vmem:[%s335 + $0x30] sm:$0xff] %v344
              %v346 = vld [vmem:[%s334 + $0x38] sm:$0xff]
              %347 = vst [vmem:[%s335 + $0x38] sm:$0xff] %v346
              %v348 = vld [vmem:[%s334 + $0x48] sm:$0xff]
              %349 = vst [vmem:[%s335 + $0x48] sm:$0xff] %v348
              %v350 = vld [vmem:[%s334 + $0x50] sm:$0xff]
              %351 = vst [vmem:[%s335 + $0x50] sm:$0xff] %v350
              %v352 = vld [vmem:[%s334 + $0x60] sm:$0xff]
              %353 = vst [vmem:[%s335 + $0x60] sm:$0xff] %v352
              %v354 = vld [vmem:[%s334 + $0x68] sm:$0xff]
              %355 = vst [vmem:[%s335 + $0x68] sm:$0xff] %v354
              %v356 = vld [vmem:[%s334 + $0x78] sm:$0xff]
              %357 = vst [vmem:[%s335 + $0x78] sm:$0xff] %v356
              %v358 = vld [vmem:[%s334 + $0x80] sm:$0xff]
              %359 = vst [vmem:[%s335 + $0x80] sm:$0xff] %v358
              %v360 = vld [vmem:[%s334 + $0x90] sm:$0xff]
              %361 = vst [vmem:[%s335 + $0x90] sm:$0xff] %v360
              %v362 = vld [vmem:[%s334 + $0x98] sm:$0xff]
              %363 = vst [vmem:[%s335 + $0x98] sm:$0xff] %v362
              %v364 = vld [vmem:[%s334 + $0xa8] sm:$0xff]
              %365 = vst [vmem:[%s335 + $0xa8] sm:$0xff] %v364
              %v366 = vld [vmem:[%s334 + $0xb0] sm:$0xff]
              %367 = vst [vmem:[%s335 + $0xb0] sm:$0xff] %v366
              %v368 = vld [vmem:[%s334 + $0xc0] sm:$0xff]
              %369 = vst [vmem:[%s335 + $0xc0] sm:$0xff] %v368
              %v370 = vld [vmem:[%s334 + $0xc8] sm:$0xff]
              %371 = vst [vmem:[%s335 + $0xc8] sm:$0xff] %v370
              %v372 = vld [vmem:[%s334 + $0xd8] sm:$0xff]
              %373 = vst [vmem:[%s335 + $0xd8] sm:$0xff] %v372
              %v374 = vld [vmem:[%s334 + $0xe0] sm:$0xff]
              %375 = vst [vmem:[%s335 + $0xe0] sm:$0xff] %v374
            $region61: #{conv_block_forward.4} parent=55 // loop_footer
              %s333 = sadd.s32 1, %s329
            $region62: #{conv_block_forward.4} parent=55 // loop_footer_branch
              %328 = sbr.rel target = $region58
            $region63: #{conv_block_forward.4} parent=55 // loop_exit
              _
            %s376 = sshllo.u32 0, %s323
            loop: start=0, step=1, limit=1
            $region64: #{conv_block_forward.4} parent=55 // loop_pre_header
              _
            $region65: #{conv_block_forward.4} parent=55 // loop_header
              %s378 = sphi 0, %s382
              %p379 = scmp.ge.s32.totalorder %s378, 1
              %s383 = sphi %s325, %s325
              %s384 = sphi %s327, %s327
            $region66: #{conv_block_forward.4} parent=55 // loop_header_branch
              %381 = sbr.rel (%p379) target = $region70
            $region67: #{conv_block_forward.4} parent=55 // loop_body
              %v385 = vld [vmem:[%s383] sm:%s376]
              %386 = vst [vmem:[%s384] sm:%s376] %v385
              %v387 = vld [vmem:[%s383 + $0x18] sm:%s376]
              %388 = vst [vmem:[%s384 + $0x18] sm:%s376] %v387
              %v389 = vld [vmem:[%s383 + $0x30] sm:%s376]
              %390 = vst [vmem:[%s384 + $0x30] sm:%s376] %v389
              %v391 = vld [vmem:[%s383 + $0x48] sm:%s376]
              %392 = vst [vmem:[%s384 + $0x48] sm:%s376] %v391
              %v393 = vld [vmem:[%s383 + $0x60] sm:%s376]
              %394 = vst [vmem:[%s384 + $0x60] sm:%s376] %v393
              %v395 = vld [vmem:[%s383 + $0x78] sm:%s376]
              %396 = vst [vmem:[%s384 + $0x78] sm:%s376] %v395
              %v397 = vld [vmem:[%s383 + $0x90] sm:%s376]
              %398 = vst [vmem:[%s384 + $0x90] sm:%s376] %v397
              %v399 = vld [vmem:[%s383 + $0xa8] sm:%s376]
              %400 = vst [vmem:[%s384 + $0xa8] sm:%s376] %v399
              %v401 = vld [vmem:[%s383 + $0xc0] sm:%s376]
              %402 = vst [vmem:[%s384 + $0xc0] sm:%s376] %v401
              %v403 = vld [vmem:[%s383 + $0xd8] sm:%s376]
              %404 = vst [vmem:[%s384 + $0xd8] sm:%s376] %v403
            $region68: #{conv_block_forward.4} parent=55 // loop_footer
              %s382 = sadd.s32 1, %s378
            $region69: #{conv_block_forward.4} parent=55 // loop_footer_branch
              %377 = sbr.rel target = $region65
            $region70: #{conv_block_forward.4} parent=55 // loop_exit
              _
          $region56: #{conv_block_forward.4} parent=40 // pred_fallthru
            _
        $region41: #{conv_block_forward.4} parent=37 // pred_fallthru
          _
        // Predicated region
        $region42: #{conv_block_forward.4} parent=37 // pred_check
          %p286 = pneg %p282
        $region43: #{conv_block_forward.4} parent=37 // pred_check_branch
          %288 = sbr.rel (%p286) target = $region45
        $region44: #{conv_block_forward.4} parent=37 // pred_region
          %s289 = sshllo.u32 0, 18
          loop: start=0, step=1, limit=1
          $region46: #{conv_block_forward.4} parent=44 // loop_pre_header
            _
          $region47: #{conv_block_forward.4} parent=44 // loop_header
            %s291 = sphi 0, %s295
            %p292 = scmp.ge.s32.totalorder %s291, 1
            %s296 = sphi %s280, %s280
            %s297 = sphi [#allocation2], [#allocation2]
          $region48: #{conv_block_forward.4} parent=44 // loop_header_branch
            %294 = sbr.rel (%p292) target = $region52
          $region49: #{conv_block_forward.4} parent=44 // loop_body
            %v298 = vld [vmem:[%s296] sm:%s289]
            %299 = vst [vmem:[%s297] sm:%s289] %v298
            %v300 = vld [vmem:[%s296 + $0x18] sm:%s289]
            %301 = vst [vmem:[%s297 + $0x18] sm:%s289] %v300
            %v302 = vld [vmem:[%s296 + $0x30] sm:%s289]
            %303 = vst [vmem:[%s297 + $0x30] sm:%s289] %v302
            %v304 = vld [vmem:[%s296 + $0x48] sm:%s289]
            %305 = vst [vmem:[%s297 + $0x48] sm:%s289] %v304
            %v306 = vld [vmem:[%s296 + $0x60] sm:%s289]
            %307 = vst [vmem:[%s297 + $0x60] sm:%s289] %v306
            %v308 = vld [vmem:[%s296 + $0x78] sm:%s289]
            %309 = vst [vmem:[%s297 + $0x78] sm:%s289] %v308
            %v310 = vld [vmem:[%s296 + $0x90] sm:%s289]
            %311 = vst [vmem:[%s297 + $0x90] sm:%s289] %v310
            %v312 = vld [vmem:[%s296 + $0xa8] sm:%s289]
            %313 = vst [vmem:[%s297 + $0xa8] sm:%s289] %v312
            %v314 = vld [vmem:[%s296 + $0xc0] sm:%s289]
            %315 = vst [vmem:[%s297 + $0xc0] sm:%s289] %v314
            %v316 = vld [vmem:[%s296 + $0xd8] sm:%s289]
            %317 = vst [vmem:[%s297 + $0xd8] sm:%s289] %v316
          $region50: #{conv_block_forward.4} parent=44 // loop_footer
            %s295 = sadd.s32 1, %s291
          $region51: #{conv_block_forward.4} parent=44 // loop_footer_branch
            %290 = sbr.rel target = $region47
          $region52: #{conv_block_forward.4} parent=44 // loop_exit
            _
        $region45: #{conv_block_forward.4} parent=37 // pred_fallthru
          _
        // Predicated region
        $region71: #{conv_block_forward.4} parent=37 // pred_check
          _
        $region72: #{conv_block_forward.4} parent=37 // pred_check_branch
          %407 = sbr.rel (0) target = $region74
        $region73: #{conv_block_forward.4} parent=37 // pred_region
          %408 = vsyncadd [#allocation3], 2880
        $region74: #{conv_block_forward.4} parent=37 // pred_fallthru
          _
        %s409 = smul.u32 10, 18
        %s410 = smul.u32 %s409, 1
        %s411 = sshll.u32 %s410, 4
        %412 = dma.done [#allocation3], %s411
      %v413 = vld [vmem:[#allocation2] sm:$0xff]
      %v414 = vld [vmem:[#allocation2 + $0x8] sm:$0xff]
      %v415 = vld [vmem:[#allocation2 + $0x10] sm:$0x3]
      %v416 = vld [vmem:[#allocation2 + $0x18] sm:$0xff]
      %v417 = vld [vmem:[#allocation2 + $0x20] sm:$0xff]
      %v418 = vld [vmem:[#allocation2 + $0x28] sm:$0x3]
      %v419 = vld [vmem:[#allocation2 + $0x30] sm:$0xff]
      %v420 = vld [vmem:[#allocation2 + $0x38] sm:$0xff]
      %v421 = vld [vmem:[#allocation2 + $0x40] sm:$0x3]
      %v422 = vld [vmem:[#allocation2 + $0x48] sm:$0xff]
      %v423 = vld [vmem:[#allocation2 + $0x50] sm:$0xff]
      %v424 = vld [vmem:[#allocation2 + $0x58] sm:$0x3]
      %v425 = vld [vmem:[#allocation2 + $0x60] sm:$0xff]
      %v426 = vld [vmem:[#allocation2 + $0x68] sm:$0xff]
      %v427 = vld [vmem:[#allocation2 + $0x70] sm:$0x3]
      %v428 = vld [vmem:[#allocation2 + $0x78] sm:$0xff]
      %v429 = vld [vmem:[#allocation2 + $0x80] sm:$0xff]
      %v430 = vld [vmem:[#allocation2 + $0x88] sm:$0x3]
      %v431 = vld [vmem:[#allocation2 + $0x90] sm:$0xff]
      %v432 = vld [vmem:[#allocation2 + $0x98] sm:$0xff]
      %v433 = vld [vmem:[#allocation2 + $0xa0] sm:$0x3]
      %v434 = vld [vmem:[#allocation2 + $0xa8] sm:$0xff]
      %v435 = vld [vmem:[#allocation2 + $0xb0] sm:$0xff]
      %v436 = vld [vmem:[#allocation2 + $0xb8] sm:$0x3]
      %v437 = vld [vmem:[#allocation2 + $0xc0] sm:$0xff]
      %v438 = vld [vmem:[#allocation2 + $0xc8] sm:$0xff]
      %v439 = vld [vmem:[#allocation2 + $0xd0] sm:$0x3]
      %v440 = vld [vmem:[#allocation2 + $0xd8] sm:$0xff]
      %v441 = vld [vmem:[#allocation2 + $0xe0] sm:$0xff]
      %v442 = vld [vmem:[#allocation2 + $0xe8] sm:$0x3]
      %v443 = vld [vmem:[%s3] sm:$0x1]
      %v445 = vlaneseq
      %v446 = vshrl.u32 %v445, 7
      %v447 = vsub.s32 0, %v446
      %v448 = vrot.slane %v443, %v447
      %v450 = vmul.f32 %v413, %v448
      %v451 = vmul.f32 %v414, %v448
      %v452 = vmul.f32 %v415, %v448
      %v453 = vmul.f32 %v416, %v448
      %v454 = vmul.f32 %v417, %v448
      %v455 = vmul.f32 %v418, %v448
      %v456 = vmul.f32 %v419, %v448
      %v457 = vmul.f32 %v420, %v448
      %v458 = vmul.f32 %v421, %v448
      %v459 = vmul.f32 %v422, %v448
      %v460 = vmul.f32 %v423, %v448
      %v461 = vmul.f32 %v424, %v448
      %v462 = vmul.f32 %v425, %v448
      %v463 = vmul.f32 %v426, %v448
      %v464 = vmul.f32 %v427, %v448
      %v465 = vmul.f32 %v428, %v448
      %v466 = vmul.f32 %v429, %v448
      %v467 = vmul.f32 %v430, %v448
      %v468 = vmul.f32 %v431, %v448
      %v469 = vmul.f32 %v432, %v448
      %v470 = vmul.f32 %v433, %v448
      %v471 = vmul.f32 %v434, %v448
      %v472 = vmul.f32 %v435, %v448
      %v473 = vmul.f32 %v436, %v448
      %v474 = vmul.f32 %v437, %v448
      %v475 = vmul.f32 %v438, %v448
      %v476 = vmul.f32 %v439, %v448
      %v477 = vmul.f32 %v440, %v448
      %v478 = vmul.f32 %v441, %v448
      %v479 = vmul.f32 %v442, %v448
      %v480 = vld [vmem:[%s4] sm:$0x1]
      %v482 = vlaneseq
      %v483 = vshrl.u32 %v482, 7
      %v484 = vsub.s32 0, %v483
      %v485 = vrot.slane %v480, %v484
      %v487 = vadd.f32 %v450, %v485
      %v488 = vadd.f32 %v451, %v485
      %v489 = vadd.f32 %v452, %v485
      %v490 = vadd.f32 %v453, %v485
      %v491 = vadd.f32 %v454, %v485
      %v492 = vadd.f32 %v455, %v485
      %v493 = vadd.f32 %v456, %v485
      %v494 = vadd.f32 %v457, %v485
      %v495 = vadd.f32 %v458, %v485
      %v496 = vadd.f32 %v459, %v485
      %v497 = vadd.f32 %v460, %v485
      %v498 = vadd.f32 %v461, %v485
      %v499 = vadd.f32 %v462, %v485
      %v500 = vadd.f32 %v463, %v485
      %v501 = vadd.f32 %v464, %v485
      %v502 = vadd.f32 %v465, %v485
      %v503 = vadd.f32 %v466, %v485
      %v504 = vadd.f32 %v467, %v485
      %v505 = vadd.f32 %v468, %v485
      %v506 = vadd.f32 %v469, %v485
      %v507 = vadd.f32 %v470, %v485
      %v508 = vadd.f32 %v471, %v485
      %v509 = vadd.f32 %v472, %v485
      %v510 = vadd.f32 %v473, %v485
      %v511 = vadd.f32 %v474, %v485
      %v512 = vadd.f32 %v475, %v485
      %v513 = vadd.f32 %v476, %v485
      %v514 = vadd.f32 %v477, %v485
      %v515 = vadd.f32 %v478, %v485
      %v516 = vadd.f32 %v479, %v485
      %v517 = vmax.f32 %v487, 0.0
      %v518 = vmax.f32 %v488, 0.0
      %v519 = vmax.f32 %v489, 0.0
      %v520 = vmax.f32 %v490, 0.0
      %v521 = vmax.f32 %v491, 0.0
      %v522 = vmax.f32 %v492, 0.0
      %v523 = vmax.f32 %v493, 0.0
      %v524 = vmax.f32 %v494, 0.0
      %v525 = vmax.f32 %v495, 0.0
      %v526 = vmax.f32 %v496, 0.0
      %v527 = vmax.f32 %v497, 0.0
      %v528 = vmax.f32 %v498, 0.0
      %v529 = vmax.f32 %v499, 0.0
      %v530 = vmax.f32 %v500, 0.0
      %v531 = vmax.f32 %v501, 0.0
      %v532 = vmax.f32 %v502, 0.0
      %v533 = vmax.f32 %v503, 0.0
      %v534 = vmax.f32 %v504, 0.0
      %v535 = vmax.f32 %v505, 0.0
      %v536 = vmax.f32 %v506, 0.0
      %v537 = vmax.f32 %v507, 0.0
      %v538 = vmax.f32 %v508, 0.0
      %v539 = vmax.f32 %v509, 0.0
      %v540 = vmax.f32 %v510, 0.0
      %v541 = vmax.f32 %v511, 0.0
      %v542 = vmax.f32 %v512, 0.0
      %v543 = vmax.f32 %v513, 0.0
      %v544 = vmax.f32 %v514, 0.0
      %v545 = vmax.f32 %v515, 0.0
      %v546 = vmax.f32 %v516, 0.0
      %v547 = vstv %s276
      %v548 = vadd.s32 %v547, 1
      %v549 = vadd.s32 %v547, 2
      %v550 = vadd.s32 %v547, 3
      %v551 = vadd.s32 %v547, 4
      %v552 = vadd.s32 %v547, 5
      %v553 = vadd.s32 %v547, 6
      %v554 = vadd.s32 %v547, 7
      %v555 = vadd.s32 %v547, 8
      %v556 = vadd.s32 %v547, 9
      %v557 = vlaneseq
      %v558 = vshrl.u32 %v557, 7
      %v559 = vadd.s32 %v558, 8
      %v560 = vadd.s32 %v558, 16
      %vm561 = vcmp.ge.s32.totalorder %v547, 1
      %vm562 = vcmp.ge.s32.totalorder %v548, 1
      %vm563 = vcmp.ge.s32.totalorder %v549, 1
      %vm564 = vcmp.ge.s32.totalorder %v550, 1
      %vm565 = vcmp.ge.s32.totalorder %v551, 1
      %vm566 = vcmp.ge.s32.totalorder %v552, 1
      %vm567 = vcmp.ge.s32.totalorder %v553, 1
      %vm568 = vcmp.ge.s32.totalorder %v554, 1
      %vm569 = vcmp.ge.s32.totalorder %v555, 1
      %vm570 = vcmp.ge.s32.totalorder %v556, 1
      %vm571 = vcmp.le.s32.totalorder %v547, 16
      %vm572 = vcmp.le.s32.totalorder %v548, 16
      %vm573 = vcmp.le.s32.totalorder %v549, 16
      %vm574 = vcmp.le.s32.totalorder %v550, 16
      %vm575 = vcmp.le.s32.totalorder %v551, 16
      %vm576 = vcmp.le.s32.totalorder %v552, 16
      %vm577 = vcmp.le.s32.totalorder %v553, 16
      %vm578 = vcmp.le.s32.totalorder %v554, 16
      %vm579 = vcmp.le.s32.totalorder %v555, 16
      %vm580 = vcmp.le.s32.totalorder %v556, 16
      %vm581 = vmand %vm561, %vm571
      %vm582 = vmand %vm562, %vm572
      %vm583 = vmand %vm563, %vm573
      %vm584 = vmand %vm564, %vm574
      %vm585 = vmand %vm565, %vm575
      %vm586 = vmand %vm566, %vm576
      %vm587 = vmand %vm567, %vm577
      %vm588 = vmand %vm568, %vm578
      %vm589 = vmand %vm569, %vm579
      %vm590 = vmand %vm570, %vm580
      %vm591 = vcmp.ge.s32.totalorder %v558, 1
      %vm592 = vcmp.ge.s32.totalorder %v559, 1
      %vm593 = vcmp.ge.s32.totalorder %v560, 1
      %vm594 = vmand %vm581, %vm591
      %vm595 = vmand %vm581, %vm592
      %vm596 = vmand %vm581, %vm593
      %vm597 = vmand %vm582, %vm591
      %vm598 = vmand %vm582, %vm592
      %vm599 = vmand %vm582, %vm593
      %vm600 = vmand %vm583, %vm591
      %vm601 = vmand %vm583, %vm592
      %vm602 = vmand %vm583, %vm593
      %vm603 = vmand %vm584, %vm591
      %vm604 = vmand %vm584, %vm592
      %vm605 = vmand %vm584, %vm593
      %vm606 = vmand %vm585, %vm591
      %vm607 = vmand %vm585, %vm592
      %vm608 = vmand %vm585, %vm593
      %vm609 = vmand %vm586, %vm591
      %vm610 = vmand %vm586, %vm592
      %vm611 = vmand %vm586, %vm593
      %vm612 = vmand %vm587, %vm591
      %vm613 = vmand %vm587, %vm592
      %vm614 = vmand %vm587, %vm593
      %vm615 = vmand %vm588, %vm591
      %vm616 = vmand %vm588, %vm592
      %vm617 = vmand %vm588, %vm593
      %vm618 = vmand %vm589, %vm591
      %vm619 = vmand %vm589, %vm592
      %vm620 = vmand %vm589, %vm593
      %vm621 = vmand %vm590, %vm591
      %vm622 = vmand %vm590, %vm592
      %vm623 = vmand %vm590, %vm593
      %vm624 = vcmp.le.s32.totalorder %v558, 16
      %vm625 = vcmp.le.s32.totalorder %v559, 16
      %vm626 = vcmp.le.s32.totalorder %v560, 16
      %vm627 = vmand %vm594, %vm624
      %vm628 = vmand %vm595, %vm625
      %vm629 = vmand %vm596, %vm626
      %vm630 = vmand %vm597, %vm624
      %vm631 = vmand %vm598, %vm625
      %vm632 = vmand %vm599, %vm626
      %vm633 = vmand %vm600, %vm624
      %vm634 = vmand %vm601, %vm625
      %vm635 = vmand %vm602, %vm626
      %vm636 = vmand %vm603, %vm624
      %vm637 = vmand %vm604, %vm625
      %vm638 = vmand %vm605, %vm626
      %vm639 = vmand %vm606, %vm624
      %vm640 = vmand %vm607, %vm625
      %vm641 = vmand %vm608, %vm626
      %vm642 = vmand %vm609, %vm624
      %vm643 = vmand %vm610, %vm625
      %vm644 = vmand %vm611, %vm626
      %vm645 = vmand %vm612, %vm624
      %vm646 = vmand %vm613, %vm625
      %vm647 = vmand %vm614, %vm626
      %vm648 = vmand %vm615, %vm624
      %vm649 = vmand %vm616, %vm625
      %vm650 = vmand %vm617, %vm626
      %vm651 = vmand %vm618, %vm624
      %vm652 = vmand %vm619, %vm625
      %vm653 = vmand %vm620, %vm626
      %vm654 = vmand %vm621, %vm624
      %vm655 = vmand %vm622, %vm625
      %vm656 = vmand %vm623, %vm626
      %v657 = vsel %vm627, 1, 0
      %v658 = vsel %vm628, 1, 0
      %v659 = vsel %vm629, 1, 0
      %v660 = vsel %vm630, 1, 0
      %v661 = vsel %vm631, 1, 0
      %v662 = vsel %vm632, 1, 0
      %v663 = vsel %vm633, 1, 0
      %v664 = vsel %vm634, 1, 0
      %v665 = vsel %vm635, 1, 0
      %v666 = vsel %vm636, 1, 0
      %v667 = vsel %vm637, 1, 0
      %v668 = vsel %vm638, 1, 0
      %v669 = vsel %vm639, 1, 0
      %v670 = vsel %vm640, 1, 0
      %v671 = vsel %vm641, 1, 0
      %v672 = vsel %vm642, 1, 0
      %v673 = vsel %vm643, 1, 0
      %v674 = vsel %vm644, 1, 0
      %v675 = vsel %vm645, 1, 0
      %v676 = vsel %vm646, 1, 0
      %v677 = vsel %vm647, 1, 0
      %v678 = vsel %vm648, 1, 0
      %v679 = vsel %vm649, 1, 0
      %v680 = vsel %vm650, 1, 0
      %v681 = vsel %vm651, 1, 0
      %v682 = vsel %vm652, 1, 0
      %v683 = vsel %vm653, 1, 0
      %v684 = vsel %vm654, 1, 0
      %v685 = vsel %vm655, 1, 0
      %v686 = vsel %vm656, 1, 0
      %vm687 = vcmp.eq.s32.totalorder %v657, 1
      %vm688 = vcmp.eq.s32.totalorder %v658, 1
      %vm689 = vcmp.eq.s32.totalorder %v659, 1
      %vm690 = vcmp.eq.s32.totalorder %v660, 1
      %vm691 = vcmp.eq.s32.totalorder %v661, 1
      %vm692 = vcmp.eq.s32.totalorder %v662, 1
      %vm693 = vcmp.eq.s32.totalorder %v663, 1
      %vm694 = vcmp.eq.s32.totalorder %v664, 1
      %vm695 = vcmp.eq.s32.totalorder %v665, 1
      %vm696 = vcmp.eq.s32.totalorder %v666, 1
      %vm697 = vcmp.eq.s32.totalorder %v667, 1
      %vm698 = vcmp.eq.s32.totalorder %v668, 1
      %vm699 = vcmp.eq.s32.totalorder %v669, 1
      %vm700 = vcmp.eq.s32.totalorder %v670, 1
      %vm701 = vcmp.eq.s32.totalorder %v671, 1
      %vm702 = vcmp.eq.s32.totalorder %v672, 1
      %vm703 = vcmp.eq.s32.totalorder %v673, 1
      %vm704 = vcmp.eq.s32.totalorder %v674, 1
      %vm705 = vcmp.eq.s32.totalorder %v675, 1
      %vm706 = vcmp.eq.s32.totalorder %v676, 1
      %vm707 = vcmp.eq.s32.totalorder %v677, 1
      %vm708 = vcmp.eq.s32.totalorder %v678, 1
      %vm709 = vcmp.eq.s32.totalorder %v679, 1
      %vm710 = vcmp.eq.s32.totalorder %v680, 1
      %vm711 = vcmp.eq.s32.totalorder %v681, 1
      %vm712 = vcmp.eq.s32.totalorder %v682, 1
      %vm713 = vcmp.eq.s32.totalorder %v683, 1
      %vm714 = vcmp.eq.s32.totalorder %v684, 1
      %vm715 = vcmp.eq.s32.totalorder %v685, 1
      %vm716 = vcmp.eq.s32.totalorder %v686, 1
      %v717 = vsel %vm687, %v517, 0.0
      %v718 = vsel %vm688, %v518, 0.0
      %v719 = vsel %vm689, %v519, 0.0
      %v720 = vsel %vm690, %v520, 0.0
      %v721 = vsel %vm691, %v521, 0.0
      %v722 = vsel %vm692, %v522, 0.0
      %v723 = vsel %vm693, %v523, 0.0
      %v724 = vsel %vm694, %v524, 0.0
      %v725 = vsel %vm695, %v525, 0.0
      %v726 = vsel %vm696, %v526, 0.0
      %v727 = vsel %vm697, %v527, 0.0
      %v728 = vsel %vm698, %v528, 0.0
      %v729 = vsel %vm699, %v529, 0.0
      %v730 = vsel %vm700, %v530, 0.0
      %v731 = vsel %vm701, %v531, 0.0
      %v732 = vsel %vm702, %v532, 0.0
      %v733 = vsel %vm703, %v533, 0.0
      %v734 = vsel %vm704, %v534, 0.0
      %v735 = vsel %vm705, %v535, 0.0
      %v736 = vsel %vm706, %v536, 0.0
      %v737 = vsel %vm707, %v537, 0.0
      %v738 = vsel %vm708, %v538, 0.0
      %v739 = vsel %vm709, %v539, 0.0
      %v740 = vsel %vm710, %v540, 0.0
      %v741 = vsel %vm711, %v541, 0.0
      %v742 = vsel %vm712, %v542, 0.0
      %v743 = vsel %vm713, %v543, 0.0
      %v744 = vsel %vm714, %v544, 0.0
      %v745 = vsel %vm715, %v545, 0.0
      %v746 = vsel %vm716, %v546, 0.0
      %v747 = vpack.c.bf16 %v718, %v717
      %v748 = vpack.c.bf16 %v719, %v719
      %v749 = vpack.c.bf16 %v721, %v720
      %v750 = vpack.c.bf16 %v722, %v722
      %v751 = vpack.c.bf16 %v724, %v723
      %v752 = vpack.c.bf16 %v725, %v725
      %v753 = vpack.c.bf16 %v727, %v726
      %v754 = vpack.c.bf16 %v728, %v728
      %v755 = vpack.c.bf16 %v730, %v729
      %v756 = vpack.c.bf16 %v731, %v731
      %v757 = vpack.c.bf16 %v733, %v732
      %v758 = vpack.c.bf16 %v734, %v734
      %v759 = vpack.c.bf16 %v736, %v735
      %v760 = vpack.c.bf16 %v737, %v737
      %v761 = vpack.c.bf16 %v739, %v738
      %v762 = vpack.c.bf16 %v740, %v740
      %v763 = vpack.c.bf16 %v742, %v741
      %v764 = vpack.c.bf16 %v743, %v743
      %v765 = vpack.c.bf16 %v745, %v744
      %v766 = vpack.c.bf16 %v746, %v746
      %vm767 = vsmask.f32 7424
      %v769 = vshrl.u32 %v747, 16
      %v771 = vshll.u32 %v747, 16
      %v773 = vrot.slane %v771, 1
      %v774 = vor.u32 %v769, %v773
      %v776 = vshll.u32 %v748, 16
      %v778 = vrot.slane %v776, 1
      %v779 = vsel %vm767, %v774, %v778
      %v781 = vshrl.u32 %v749, 16
      %v783 = vshll.u32 %v749, 16
      %v785 = vrot.slane %v783, 1
      %v786 = vor.u32 %v781, %v785
      %v788 = vshll.u32 %v750, 16
      %v790 = vrot.slane %v788, 1
      %v791 = vsel %vm767, %v786, %v790
      %v793 = vshrl.u32 %v751, 16
      %v795 = vshll.u32 %v751, 16
      %v797 = vrot.slane %v795, 1
      %v798 = vor.u32 %v793, %v797
      %v800 = vshll.u32 %v752, 16
      %v802 = vrot.slane %v800, 1
      %v803 = vsel %vm767, %v798, %v802
      %v805 = vshrl.u32 %v753, 16
      %v807 = vshll.u32 %v753, 16
      %v809 = vrot.slane %v807, 1
      %v810 = vor.u32 %v805, %v809
      %v812 = vshll.u32 %v754, 16
      %v814 = vrot.slane %v812, 1
      %v815 = vsel %vm767, %v810, %v814
      %v817 = vshrl.u32 %v755, 16
      %v819 = vshll.u32 %v755, 16
      %v821 = vrot.slane %v819, 1
      %v822 = vor.u32 %v817, %v821
      %v824 = vshll.u32 %v756, 16
      %v826 = vrot.slane %v824, 1
      %v827 = vsel %vm767, %v822, %v826
      %v829 = vshrl.u32 %v757, 16
      %v831 = vshll.u32 %v757, 16
      %v833 = vrot.slane %v831, 1
      %v834 = vor.u32 %v829, %v833
      %v836 = vshll.u32 %v758, 16
      %v838 = vrot.slane %v836, 1
      %v839 = vsel %vm767, %v834, %v838
      %v841 = vshrl.u32 %v759, 16
      %v843 = vshll.u32 %v759, 16
      %v845 = vrot.slane %v843, 1
      %v846 = vor.u32 %v841, %v845
      %v848 = vshll.u32 %v760, 16
      %v850 = vrot.slane %v848, 1
      %v851 = vsel %vm767, %v846, %v850
      %v853 = vshrl.u32 %v761, 16
      %v855 = vshll.u32 %v761, 16
      %v857 = vrot.slane %v855, 1
      %v858 = vor.u32 %v853, %v857
      %v860 = vshll.u32 %v762, 16
      %v862 = vrot.slane %v860, 1
      %v863 = vsel %vm767, %v858, %v862
      %vm888 = vcmask 1046528
      %v889 = vrot.slane %v747, 1
      %v890 = vrot.slane %v748, 1
      %v891 = vsel %vm888, %v889, %v890
      %v892 = vrot.slane %v749, 1
      %v893 = vrot.slane %v750, 1
      %v894 = vsel %vm888, %v892, %v893
      %v895 = vrot.slane %v751, 1
      %v896 = vrot.slane %v752, 1
      %v897 = vsel %vm888, %v895, %v896
      %v898 = vrot.slane %v753, 1
      %v899 = vrot.slane %v754, 1
      %v900 = vsel %vm888, %v898, %v899
      %v901 = vrot.slane %v755, 1
      %v902 = vrot.slane %v756, 1
      %v903 = vsel %vm888, %v901, %v902
      %v904 = vrot.slane %v757, 1
      %v905 = vrot.slane %v758, 1
      %v906 = vsel %vm888, %v904, %v905
      %v907 = vrot.slane %v759, 1
      %v908 = vrot.slane %v760, 1
      %v909 = vsel %vm888, %v907, %v908
      %v910 = vrot.slane %v761, 1
      %v911 = vrot.slane %v762, 1
      %v912 = vsel %vm888, %v910, %v911
      %v922 = vshrl.u32 %v763, 16
      %v924 = vshll.u32 %v763, 16
      %v926 = vrot.slane %v924, 1
      %v927 = vor.u32 %v922, %v926
      %v929 = vshll.u32 %v764, 16
      %v931 = vrot.slane %v929, 1
      %v932 = vsel %vm767, %v927, %v931
      %v936 = vrot.slane %v763, 1
      %v937 = vrot.slane %v764, 1
      %v938 = vsel %vm888, %v936, %v937
      %v941 = vshrl.u32 %v765, 16
      %v943 = vshll.u32 %v765, 16
      %v945 = vrot.slane %v943, 1
      %v946 = vor.u32 %v941, %v945
      %v948 = vshll.u32 %v766, 16
      %v950 = vrot.slane %v948, 1
      %v951 = vsel %vm767, %v946, %v950
      %v955 = vrot.slane %v765, 1
      %v956 = vrot.slane %v766, 1
      %v957 = vsel %vm888, %v955, %v956
      %v959 = vld [vmem:[%s1] sm:$0xf]
      %v960 = vld [vmem:[%s1 + $0x4] sm:$0xf]
      %v961 = vld [vmem:[%s1 + $0x8] sm:$0xf]
      %v962 = vld [vmem:[%s1 + $0xc] sm:$0xf]
      %v963 = vld [vmem:[%s1 + $0x10] sm:$0xf]
      %v964 = vld [vmem:[%s1 + $0x14] sm:$0xf]
      %v965 = vld [vmem:[%s1 + $0x18] sm:$0xf]
      %v966 = vld [vmem:[%s1 + $0x1c] sm:$0xf]
      %v967 = vld [vmem:[%s1 + $0x20] sm:$0xf]
      %v968 = vld [vmem:[%s1 + $0x24] sm:$0xf]
      %v969 = vld [vmem:[%s1 + $0x28] sm:$0xf]
      %v970 = vld [vmem:[%s1 + $0x2c] sm:$0xf]
      %v971 = vld [vmem:[%s1 + $0x30] sm:$0xf]
      %v972 = vld [vmem:[%s1 + $0x34] sm:$0xf]
      %v973 = vld [vmem:[%s1 + $0x38] sm:$0xf]
      %v974 = vld [vmem:[%s1 + $0x3c] sm:$0xf]
      %v975 = vld [vmem:[%s1 + $0x40] sm:$0xf]
      %v976 = vld [vmem:[%s1 + $0x44] sm:$0xf]
      %v977 = vld [vmem:[%s1 + $0x48] sm:$0xf]
      %v978 = vld [vmem:[%s1 + $0x4c] sm:$0xf]
      %v979 = vld [vmem:[%s1 + $0x50] sm:$0xf]
      %v980 = vld [vmem:[%s1 + $0x54] sm:$0xf]
      %v981 = vld [vmem:[%s1 + $0x58] sm:$0xf]
      %v982 = vld [vmem:[%s1 + $0x5c] sm:$0xf]
      %v983 = vld [vmem:[%s1 + $0x60] sm:$0xf]
      %v984 = vld [vmem:[%s1 + $0x64] sm:$0xf]
      %v985 = vld [vmem:[%s1 + $0x68] sm:$0xf]
      %v986 = vld [vmem:[%s1 + $0x6c] sm:$0xf]
      %v987 = vld [vmem:[%s1 + $0x70] sm:$0xf]
      %v988 = vld [vmem:[%s1 + $0x74] sm:$0xf]
      %v989 = vld [vmem:[%s1 + $0x78] sm:$0xf]
      %v990 = vld [vmem:[%s1 + $0x7c] sm:$0xf]
      %v991 = vld [vmem:[%s1 + $0x80] sm:$0xf]
      %v992 = vld [vmem:[%s1 + $0x84] sm:$0xf]
      %v993 = vld [vmem:[%s1 + $0x88] sm:$0xf]
      %v994 = vld [vmem:[%s1 + $0x8c] sm:$0xf]
      %v995 = vld [vmem:[%s1 + $0x90] sm:$0xf]
      %v996 = vld [vmem:[%s1 + $0x94] sm:$0xf]
      %v997 = vld [vmem:[%s1 + $0x98] sm:$0xf]
      %v998 = vld [vmem:[%s1 + $0x9c] sm:$0xf]
      %v999 = vld [vmem:[%s1 + $0xa0] sm:$0xf]
      %v1000 = vld [vmem:[%s1 + $0xa4] sm:$0xf]
      %v1001 = vld [vmem:[%s1 + $0xa8] sm:$0xf]
      %v1002 = vld [vmem:[%s1 + $0xac] sm:$0xf]
      %v1003 = vld [vmem:[%s1 + $0xb0] sm:$0xf]
      %v1004 = vld [vmem:[%s1 + $0xb4] sm:$0xf]
      %v1005 = vld [vmem:[%s1 + $0xb8] sm:$0xf]
      %v1006 = vld [vmem:[%s1 + $0xbc] sm:$0xf]
      %v1007 = vld [vmem:[%s1 + $0xc0] sm:$0xf]
      %v1008 = vld [vmem:[%s1 + $0xc4] sm:$0xf]
      %v1009 = vld [vmem:[%s1 + $0xc8] sm:$0xf]
      %v1010 = vld [vmem:[%s1 + $0xcc] sm:$0xf]
      %v1011 = vld [vmem:[%s1 + $0xd0] sm:$0xf]
      %v1012 = vld [vmem:[%s1 + $0xd4] sm:$0xf]
      %v1013 = vld [vmem:[%s1 + $0xd8] sm:$0xf]
      %v1014 = vld [vmem:[%s1 + $0xdc] sm:$0xf]
      %v1015 = vld [vmem:[%s1 + $0xe0] sm:$0xf]
      %v1016 = vld [vmem:[%s1 + $0xe4] sm:$0xf]
      %v1017 = vld [vmem:[%s1 + $0xe8] sm:$0xf]
      %v1018 = vld [vmem:[%s1 + $0xec] sm:$0xf]
      %v1019 = vld [vmem:[%s1 + $0xf0] sm:$0xf]
      %v1020 = vld [vmem:[%s1 + $0xf4] sm:$0xf]
      %v1021 = vld [vmem:[%s1 + $0xf8] sm:$0xf]
      %v1022 = vld [vmem:[%s1 + $0xfc] sm:$0xf]
      %v1023 = vld [vmem:[%s1 + $0x100] sm:$0xf]
      %v1024 = vld [vmem:[%s1 + $0x104] sm:$0xf]
      %v1025 = vld [vmem:[%s1 + $0x108] sm:$0xf]
      %v1026 = vld [vmem:[%s1 + $0x10c] sm:$0xf]
      %v1027 = vld [vmem:[%s1 + $0x110] sm:$0xf]
      %v1028 = vld [vmem:[%s1 + $0x114] sm:$0xf]
      %v1029 = vld [vmem:[%s1 + $0x118] sm:$0xf]
      %v1030 = vld [vmem:[%s1 + $0x11c] sm:$0xf]
      %v1031 = vld [vmem:[%s1 + $0x120] sm:$0xf]
      %v1032 = vld [vmem:[%s1 + $0x124] sm:$0xf]
      %v1033 = vld [vmem:[%s1 + $0x128] sm:$0xf]
      %v1034 = vld [vmem:[%s1 + $0x12c] sm:$0xf]
      %v1035 = vld [vmem:[%s1 + $0x130] sm:$0xf]
      %v1036 = vld [vmem:[%s1 + $0x134] sm:$0xf]
      %v1037 = vld [vmem:[%s1 + $0x138] sm:$0xf]
      %v1038 = vld [vmem:[%s1 + $0x13c] sm:$0xf]
      %v1039 = vld [vmem:[%s1 + $0x140] sm:$0xf]
      %v1040 = vld [vmem:[%s1 + $0x144] sm:$0xf]
      %v1041 = vld [vmem:[%s1 + $0x148] sm:$0xf]
      %v1042 = vld [vmem:[%s1 + $0x14c] sm:$0xf]
      %v1043 = vld [vmem:[%s1 + $0x150] sm:$0xf]
      %v1044 = vld [vmem:[%s1 + $0x154] sm:$0xf]
      %v1045 = vld [vmem:[%s1 + $0x158] sm:$0xf]
      %v1046 = vld [vmem:[%s1 + $0x15c] sm:$0xf]
      %v1047 = vld [vmem:[%s1 + $0x160] sm:$0xf]
      %v1048 = vld [vmem:[%s1 + $0x164] sm:$0xf]
      %v1049 = vld [vmem:[%s1 + $0x168] sm:$0xf]
      %v1050 = vld [vmem:[%s1 + $0x16c] sm:$0xf]
      %v1051 = vld [vmem:[%s1 + $0x170] sm:$0xf]
      %v1052 = vld [vmem:[%s1 + $0x174] sm:$0xf]
      %v1053 = vld [vmem:[%s1 + $0x178] sm:$0xf]
      %v1054 = vld [vmem:[%s1 + $0x17c] sm:$0xf]
      %v1055 = vld [vmem:[%s1 + $0x180] sm:$0xf]
      %v1056 = vld [vmem:[%s1 + $0x184] sm:$0xf]
      %v1057 = vld [vmem:[%s1 + $0x188] sm:$0xf]
      %v1058 = vld [vmem:[%s1 + $0x18c] sm:$0xf]
      %v1059 = vld [vmem:[%s1 + $0x190] sm:$0xf]
      %v1060 = vld [vmem:[%s1 + $0x194] sm:$0xf]
      %v1061 = vld [vmem:[%s1 + $0x198] sm:$0xf]
      %v1062 = vld [vmem:[%s1 + $0x19c] sm:$0xf]
      %v1063 = vld [vmem:[%s1 + $0x1a0] sm:$0xf]
      %v1064 = vld [vmem:[%s1 + $0x1a4] sm:$0xf]
      %v1065 = vld [vmem:[%s1 + $0x1a8] sm:$0xf]
      %v1066 = vld [vmem:[%s1 + $0x1ac] sm:$0xf]
      %v1067 = vld [vmem:[%s1 + $0x1b0] sm:$0xf]
      %v1068 = vld [vmem:[%s1 + $0x1b4] sm:$0xf]
      %v1069 = vld [vmem:[%s1 + $0x1b8] sm:$0xf]
      %v1070 = vld [vmem:[%s1 + $0x1bc] sm:$0xf]
      %v1071 = vld [vmem:[%s1 + $0x1c0] sm:$0xf]
      %v1072 = vld [vmem:[%s1 + $0x1c4] sm:$0xf]
      %v1073 = vld [vmem:[%s1 + $0x1c8] sm:$0xf]
      %v1074 = vld [vmem:[%s1 + $0x1cc] sm:$0xf]
      %v1075 = vld [vmem:[%s1 + $0x1d0] sm:$0xf]
      %v1076 = vld [vmem:[%s1 + $0x1d4] sm:$0xf]
      %v1077 = vld [vmem:[%s1 + $0x1d8] sm:$0xf]
      %v1078 = vld [vmem:[%s1 + $0x1dc] sm:$0xf]
      %v1079 = vld [vmem:[%s1 + $0x1e0] sm:$0xf]
      %v1080 = vld [vmem:[%s1 + $0x1e4] sm:$0xf]
      %v1081 = vld [vmem:[%s1 + $0x1e8] sm:$0xf]
      %v1082 = vld [vmem:[%s1 + $0x1ec] sm:$0xf]
      %v1083 = vld [vmem:[%s1 + $0x1f0] sm:$0xf]
      %v1084 = vld [vmem:[%s1 + $0x1f4] sm:$0xf]
      %v1085 = vld [vmem:[%s1 + $0x1f8] sm:$0xf]
      %v1086 = vld [vmem:[%s1 + $0x1fc] sm:$0xf]
      %v1087 = vld [vmem:[%s1 + $0x200] sm:$0xf]
      %v1088 = vld [vmem:[%s1 + $0x204] sm:$0xf]
      %v1089 = vld [vmem:[%s1 + $0x208] sm:$0xf]
      %v1090 = vld [vmem:[%s1 + $0x20c] sm:$0xf]
      %v1091 = vld [vmem:[%s1 + $0x210] sm:$0xf]
      %v1092 = vld [vmem:[%s1 + $0x214] sm:$0xf]
      %v1093 = vld [vmem:[%s1 + $0x218] sm:$0xf]
      %v1094 = vld [vmem:[%s1 + $0x21c] sm:$0xf]
      %v1095 = vld [vmem:[%s1 + $0x220] sm:$0xf]
      %v1096 = vld [vmem:[%s1 + $0x224] sm:$0xf]
      %v1097 = vld [vmem:[%s1 + $0x228] sm:$0xf]
      %v1098 = vld [vmem:[%s1 + $0x22c] sm:$0xf]
      %v1099 = vld [vmem:[%s1 + $0x230] sm:$0xf]
      %v1100 = vld [vmem:[%s1 + $0x234] sm:$0xf]
      %v1101 = vld [vmem:[%s1 + $0x238] sm:$0xf]
      %v1102 = vld [vmem:[%s1 + $0x23c] sm:$0xf]
      %v1103 = vld [vmem:[%s2] sm:$0x1]
      %v1105 = vlaneseq
      %v1106 = vshrl.u32 %v1105, 7
      %v1107 = vsub.s32 0, %v1106
      %v1108 = vrot.slane %v1103, %v1107
      %v1254 = vunpack.c.l.b16 %v959
      %v1255 = vunpack.c.l.b16 %v960
      %v1256 = vunpack.c.l.b16 %v961
      %v1257 = vunpack.c.l.b16 %v962
      %v1258 = vunpack.c.l.b16 %v963
      %v1259 = vunpack.c.l.b16 %v964
      %v1260 = vunpack.c.l.b16 %v965
      %v1261 = vunpack.c.l.b16 %v966
      %v1262 = vunpack.c.l.b16 %v967
      %v1263 = vunpack.c.l.b16 %v968
      %v1264 = vunpack.c.l.b16 %v969
      %v1265 = vunpack.c.l.b16 %v970
      %v1266 = vunpack.c.l.b16 %v971
      %v1267 = vunpack.c.l.b16 %v972
      %v1268 = vunpack.c.l.b16 %v973
      %v1269 = vunpack.c.l.b16 %v974
      %v1270 = vunpack.c.l.b16 %v975
      %v1271 = vunpack.c.l.b16 %v976
      %v1272 = vunpack.c.l.b16 %v977
      %v1273 = vunpack.c.l.b16 %v978
      %v1274 = vunpack.c.l.b16 %v979
      %v1275 = vunpack.c.l.b16 %v980
      %v1276 = vunpack.c.l.b16 %v981
      %v1277 = vunpack.c.l.b16 %v982
      %v1278 = vunpack.c.l.b16 %v983
      %v1279 = vunpack.c.l.b16 %v984
      %v1280 = vunpack.c.l.b16 %v985
      %v1281 = vunpack.c.l.b16 %v986
      %v1282 = vunpack.c.l.b16 %v987
      %v1283 = vunpack.c.l.b16 %v988
      %v1284 = vunpack.c.l.b16 %v989
      %v1285 = vunpack.c.l.b16 %v990
      %v1286 = vunpack.c.l.b16 %v991
      %v1287 = vunpack.c.l.b16 %v992
      %v1288 = vunpack.c.l.b16 %v993
      %v1289 = vunpack.c.l.b16 %v994
      %v1290 = vunpack.c.l.b16 %v995
      %v1291 = vunpack.c.l.b16 %v996
      %v1292 = vunpack.c.l.b16 %v997
      %v1293 = vunpack.c.l.b16 %v998
      %v1294 = vunpack.c.l.b16 %v999
      %v1295 = vunpack.c.l.b16 %v1000
      %v1296 = vunpack.c.l.b16 %v1001
      %v1297 = vunpack.c.l.b16 %v1002
      %v1298 = vunpack.c.l.b16 %v1003
      %v1299 = vunpack.c.l.b16 %v1004
      %v1300 = vunpack.c.l.b16 %v1005
      %v1301 = vunpack.c.l.b16 %v1006
      %v1302 = vunpack.c.l.b16 %v1007
      %v1303 = vunpack.c.l.b16 %v1008
      %v1304 = vunpack.c.l.b16 %v1009
      %v1305 = vunpack.c.l.b16 %v1010
      %v1306 = vunpack.c.l.b16 %v1011
      %v1307 = vunpack.c.l.b16 %v1012
      %v1308 = vunpack.c.l.b16 %v1013
      %v1309 = vunpack.c.l.b16 %v1014
      %v1310 = vunpack.c.l.b16 %v1015
      %v1311 = vunpack.c.l.b16 %v1016
      %v1312 = vunpack.c.l.b16 %v1017
      %v1313 = vunpack.c.l.b16 %v1018
      %v1314 = vunpack.c.l.b16 %v1019
      %v1315 = vunpack.c.l.b16 %v1020
      %v1316 = vunpack.c.l.b16 %v1021
      %v1317 = vunpack.c.l.b16 %v1022
      %v1318 = vunpack.c.l.b16 %v1023
      %v1319 = vunpack.c.l.b16 %v1024
      %v1320 = vunpack.c.l.b16 %v1025
      %v1321 = vunpack.c.l.b16 %v1026
      %v1322 = vunpack.c.l.b16 %v1027
      %v1323 = vunpack.c.l.b16 %v1028
      %v1324 = vunpack.c.l.b16 %v1029
      %v1325 = vunpack.c.l.b16 %v1030
      %v1326 = vunpack.c.l.b16 %v1031
      %v1327 = vunpack.c.l.b16 %v1032
      %v1328 = vunpack.c.l.b16 %v1033
      %v1329 = vunpack.c.l.b16 %v1034
      %v1330 = vunpack.c.l.b16 %v1035
      %v1331 = vunpack.c.l.b16 %v1036
      %v1332 = vunpack.c.l.b16 %v1037
      %v1333 = vunpack.c.l.b16 %v1038
      %v1334 = vunpack.c.l.b16 %v1039
      %v1335 = vunpack.c.l.b16 %v1040
      %v1336 = vunpack.c.l.b16 %v1041
      %v1337 = vunpack.c.l.b16 %v1042
      %v1338 = vunpack.c.l.b16 %v1043
      %v1339 = vunpack.c.l.b16 %v1044
      %v1340 = vunpack.c.l.b16 %v1045
      %v1341 = vunpack.c.l.b16 %v1046
      %v1342 = vunpack.c.l.b16 %v1047
      %v1343 = vunpack.c.l.b16 %v1048
      %v1344 = vunpack.c.l.b16 %v1049
      %v1345 = vunpack.c.l.b16 %v1050
      %v1346 = vunpack.c.l.b16 %v1051
      %v1347 = vunpack.c.l.b16 %v1052
      %v1348 = vunpack.c.l.b16 %v1053
      %v1349 = vunpack.c.l.b16 %v1054
      %v1350 = vunpack.c.l.b16 %v1055
      %v1351 = vunpack.c.l.b16 %v1056
      %v1352 = vunpack.c.l.b16 %v1057
      %v1353 = vunpack.c.l.b16 %v1058
      %v1354 = vunpack.c.l.b16 %v1059
      %v1355 = vunpack.c.l.b16 %v1060
      %v1356 = vunpack.c.l.b16 %v1061
      %v1357 = vunpack.c.l.b16 %v1062
      %v1358 = vunpack.c.l.b16 %v1063
      %v1359 = vunpack.c.l.b16 %v1064
      %v1360 = vunpack.c.l.b16 %v1065
      %v1361 = vunpack.c.l.b16 %v1066
      %v1362 = vunpack.c.l.b16 %v1067
      %v1363 = vunpack.c.l.b16 %v1068
      %v1364 = vunpack.c.l.b16 %v1069
      %v1365 = vunpack.c.l.b16 %v1070
      %v1366 = vunpack.c.l.b16 %v1071
      %v1367 = vunpack.c.l.b16 %v1072
      %v1368 = vunpack.c.l.b16 %v1073
      %v1369 = vunpack.c.l.b16 %v1074
      %v1370 = vunpack.c.l.b16 %v1075
      %v1371 = vunpack.c.l.b16 %v1076
      %v1372 = vunpack.c.l.b16 %v1077
      %v1373 = vunpack.c.l.b16 %v1078
      %v1374 = vunpack.c.l.b16 %v1079
      %v1375 = vunpack.c.l.b16 %v1080
      %v1376 = vunpack.c.l.b16 %v1081
      %v1377 = vunpack.c.l.b16 %v1082
      %v1378 = vunpack.c.l.b16 %v1083
      %v1379 = vunpack.c.l.b16 %v1084
      %v1380 = vunpack.c.l.b16 %v1085
      %v1381 = vunpack.c.l.b16 %v1086
      %v1382 = vunpack.c.l.b16 %v1087
      %v1383 = vunpack.c.l.b16 %v1088
      %v1384 = vunpack.c.l.b16 %v1089
      %v1385 = vunpack.c.l.b16 %v1090
      %v1386 = vunpack.c.l.b16 %v1091
      %v1387 = vunpack.c.l.b16 %v1092
      %v1388 = vunpack.c.l.b16 %v1093
      %v1389 = vunpack.c.l.b16 %v1094
      %v1390 = vunpack.c.l.b16 %v1095
      %v1391 = vunpack.c.l.b16 %v1096
      %v1392 = vunpack.c.l.b16 %v1097
      %v1393 = vunpack.c.l.b16 %v1098
      %v1394 = vunpack.c.l.b16 %v1099
      %v1395 = vunpack.c.l.b16 %v1100
      %v1396 = vunpack.c.l.b16 %v1101
      %v1397 = vunpack.c.l.b16 %v1102
      %v1398 = vpack.c.b16 %v1255, %v1254
      %v1399 = vpack.c.b16 %v1257, %v1256
      %v1400 = vpack.c.b16 %v1259, %v1258
      %v1401 = vpack.c.b16 %v1261, %v1260
      %v1402 = vpack.c.b16 %v1263, %v1262
      %v1403 = vpack.c.b16 %v1265, %v1264
      %v1404 = vpack.c.b16 %v1267, %v1266
      %v1405 = vpack.c.b16 %v1269, %v1268
      %v1406 = vpack.c.b16 %v1271, %v1270
      %v1407 = vpack.c.b16 %v1273, %v1272
      %v1408 = vpack.c.b16 %v1275, %v1274
      %v1409 = vpack.c.b16 %v1277, %v1276
      %v1410 = vpack.c.b16 %v1279, %v1278
      %v1411 = vpack.c.b16 %v1281, %v1280
      %v1412 = vpack.c.b16 %v1283, %v1282
      %v1413 = vpack.c.b16 %v1285, %v1284
      %v1414 = vpack.c.b16 %v1287, %v1286
      %v1415 = vpack.c.b16 %v1289, %v1288
      %v1416 = vpack.c.b16 %v1291, %v1290
      %v1417 = vpack.c.b16 %v1293, %v1292
      %v1418 = vpack.c.b16 %v1295, %v1294
      %v1419 = vpack.c.b16 %v1297, %v1296
      %v1420 = vpack.c.b16 %v1299, %v1298
      %v1421 = vpack.c.b16 %v1301, %v1300
      %v1422 = vpack.c.b16 %v1303, %v1302
      %v1423 = vpack.c.b16 %v1305, %v1304
      %v1424 = vpack.c.b16 %v1307, %v1306
      %v1425 = vpack.c.b16 %v1309, %v1308
      %v1426 = vpack.c.b16 %v1311, %v1310
      %v1427 = vpack.c.b16 %v1313, %v1312
      %v1428 = vpack.c.b16 %v1315, %v1314
      %v1429 = vpack.c.b16 %v1317, %v1316
      %v1430 = vpack.c.b16 %v1319, %v1318
      %v1431 = vpack.c.b16 %v1321, %v1320
      %v1432 = vpack.c.b16 %v1323, %v1322
      %v1433 = vpack.c.b16 %v1325, %v1324
      %v1434 = vpack.c.b16 %v1327, %v1326
      %v1435 = vpack.c.b16 %v1329, %v1328
      %v1436 = vpack.c.b16 %v1331, %v1330
      %v1437 = vpack.c.b16 %v1333, %v1332
      %v1438 = vpack.c.b16 %v1335, %v1334
      %v1439 = vpack.c.b16 %v1337, %v1336
      %v1440 = vpack.c.b16 %v1339, %v1338
      %v1441 = vpack.c.b16 %v1341, %v1340
      %v1442 = vpack.c.b16 %v1343, %v1342
      %v1443 = vpack.c.b16 %v1345, %v1344
      %v1444 = vpack.c.b16 %v1347, %v1346
      %v1445 = vpack.c.b16 %v1349, %v1348
      %v1446 = vpack.c.b16 %v1351, %v1350
      %v1447 = vpack.c.b16 %v1353, %v1352
      %v1448 = vpack.c.b16 %v1355, %v1354
      %v1449 = vpack.c.b16 %v1357, %v1356
      %v1450 = vpack.c.b16 %v1359, %v1358
      %v1451 = vpack.c.b16 %v1361, %v1360
      %v1452 = vpack.c.b16 %v1363, %v1362
      %v1453 = vpack.c.b16 %v1365, %v1364
      %v1454 = vpack.c.b16 %v1367, %v1366
      %v1455 = vpack.c.b16 %v1369, %v1368
      %v1456 = vpack.c.b16 %v1371, %v1370
      %v1457 = vpack.c.b16 %v1373, %v1372
      %v1458 = vpack.c.b16 %v1375, %v1374
      %v1459 = vpack.c.b16 %v1377, %v1376
      %v1460 = vpack.c.b16 %v1379, %v1378
      %v1461 = vpack.c.b16 %v1381, %v1380
      %v1462 = vpack.c.b16 %v1383, %v1382
      %v1463 = vpack.c.b16 %v1385, %v1384
      %v1464 = vpack.c.b16 %v1387, %v1386
      %v1465 = vpack.c.b16 %v1389, %v1388
      %v1466 = vpack.c.b16 %v1391, %v1390
      %v1467 = vpack.c.b16 %v1393, %v1392
      %v1468 = vpack.c.b16 %v1395, %v1394
      %v1469 = vpack.c.b16 %v1397, %v1396
      %1542 = vmatprep.subr.bf16.mxu0 0
      %1543 = vmatpush1.bf16.msra.mxu0 %v1398
      %1544 = vmatprep.subr.bf16.mxu0 0
      %1545 = vmatpush1.bf16.msra.mxu0 %v1399
      %1546 = vmatprep.subr.bf16.mxu0 0
      %1547 = vmatpush1.bf16.msra.mxu0 %v1400
      %1548 = vmatprep.subr.bf16.mxu0 0
      %1549 = vmatpush1.bf16.msra.mxu0 %v1401
      %1550 = vmatprep.subr.bf16.mxu0 0
      %1551 = vmatpush1.bf16.msra.mxu0 %v1402
      %1552 = vmatprep.subr.bf16.mxu0 0
      %1553 = vmatpush1.bf16.msra.mxu0 %v1403
      %1554 = vmatprep.subr.bf16.mxu0 0
      %1555 = vmatpush1.bf16.msra.mxu0 %v1404
      %1556 = vmatprep.subr.bf16.mxu0 0
      %1557 = vmatpush1.bf16.msra.mxu0 %v1405
      %1558 = vmatprep.subr.bf16.mxu0 0
      %1559 = vmatpush1.bf16.msra.mxu0 %v1406
      %1560 = vmatprep.subr.bf16.mxu0 0
      %1561 = vmatpush1.bf16.msra.mxu0 %v1407
      %1562 = vmatprep.subr.bf16.mxu0 0
      %1563 = vmatpush1.bf16.msra.mxu0 %v1408
      %1564 = vmatprep.subr.bf16.mxu0 0
      %1565 = vmatpush1.bf16.msra.mxu0 %v1409
      %1566 = vmatprep.subr.bf16.mxu0 0
      %1567 = vmatpush1.bf16.msra.mxu0 %v1410
      %1568 = vmatprep.subr.bf16.mxu0 0
      %1569 = vmatpush1.bf16.msra.mxu0 %v1411
      %1570 = vmatprep.subr.bf16.mxu0 0
      %1571 = vmatpush1.bf16.msra.mxu0 %v1412
      %1572 = vmatprep.subr.bf16.mxu0 0
      %1573 = vmatpush1.bf16.msra.mxu0 %v1413
      %1574 = vmatprep.mubr.bf16.mxu0 %v779
      %1575 = vmatmul.mubr.bf16.gmra.mrb[0].mxu0 %v747
      %v1576 = vpop.f32.mrb[0].mxu0
      %v1577 = vadd.f32 %v1108, %v1576
      %v1578 = vpop.f32.mrb[0].mxu0
      %v1579 = vpop.f32.mrb[0].mxu0
      %v1580 = vadd.f32 %v1108, %v1579
      %v1581 = vpop.f32.mrb[0].mxu0
      %1582 = vmatprep.mubr.bf16.mxu0 %v791
      %1583 = vmatmul.mubr.bf16.gmra.mrb[0].mxu0 %v749
      %v1584 = vpop.f32.mrb[0].mxu0
      %v1585 = vadd.f32 %v1108, %v1584
      %v1586 = vpop.f32.mrb[0].mxu0
      %v1587 = vpop.f32.mrb[0].mxu0
      %v1588 = vadd.f32 %v1108, %v1587
      %v1589 = vpop.f32.mrb[0].mxu0
      %1590 = vmatprep.mubr.bf16.mxu0 %v803
      %1591 = vmatmul.mubr.bf16.gmra.mrb[0].mxu0 %v751
      %v1592 = vpop.f32.mrb[0].mxu0
      %v1593 = vadd.f32 %v1108, %v1592
      %v1594 = vpop.f32.mrb[0].mxu0
      %v1595 = vpop.f32.mrb[0].mxu0
      %v1596 = vadd.f32 %v1108, %v1595
      %v1597 = vpop.f32.mrb[0].mxu0
      %1598 = vmatprep.mubr.bf16.mxu0 %v815
      %1599 = vmatmul.mubr.bf16.gmra.mrb[0].mxu0 %v753
      %v1600 = vpop.f32.mrb[0].mxu0
      %v1601 = vadd.f32 %v1108, %v1600
      %v1602 = vpop.f32.mrb[0].mxu0
      %v1603 = vpop.f32.mrb[0].mxu0
      %v1604 = vadd.f32 %v1108, %v1603
      %v1605 = vpop.f32.mrb[0].mxu0
      %1606 = vmatprep.mubr.bf16.mxu0 %v827
      %1607 = vmatmul.mubr.bf16.gmra.mrb[0].mxu0 %v755
      %v1608 = vpop.f32.mrb[0].mxu0
      %v1609 = vadd.f32 %v1108, %v1608
      %v1610 = vpop.f32.mrb[0].mxu0
      %v1611 = vpop.f32.mrb[0].mxu0
      %v1612 = vadd.f32 %v1108, %v1611
      %v1613 = vpop.f32.mrb[0].mxu0
      %1614 = vmatprep.mubr.bf16.mxu0 %v839
      %1615 = vmatmul.mubr.bf16.gmra.mrb[0].mxu0 %v757
      %v1616 = vpop.f32.mrb[0].mxu0
      %v1617 = vadd.f32 %v1108, %v1616
      %v1618 = vpop.f32.mrb[0].mxu0
      %v1619 = vpop.f32.mrb[0].mxu0
      %v1620 = vadd.f32 %v1108, %v1619
      %v1621 = vpop.f32.mrb[0].mxu0
      %1622 = vmatprep.mubr.bf16.mxu0 %v851
      %1623 = vmatmul.mubr.bf16.gmra.mrb[0].mxu0 %v759
      %v1624 = vpop.f32.mrb[0].mxu0
      %v1625 = vadd.f32 %v1108, %v1624
      %v1626 = vpop.f32.mrb[0].mxu0
      %v1627 = vpop.f32.mrb[0].mxu0
      %v1628 = vadd.f32 %v1108, %v1627
      %v1629 = vpop.f32.mrb[0].mxu0
      %1630 = vmatprep.mubr.bf16.mxu0 %v863
      %1631 = vmatmul.mubr.bf16.gmra.mrb[0].mxu0 %v761
      %v1632 = vpop.f32.mrb[0].mxu0
      %v1633 = vadd.f32 %v1108, %v1632
      %v1634 = vpop.f32.mrb[0].mxu0
      %v1635 = vpop.f32.mrb[0].mxu0
      %v1636 = vadd.f32 %v1108, %v1635
      %v1637 = vpop.f32.mrb[0].mxu0
      %1638 = vdwg.mxu0
      %1639 = vmatprep.subr.bf16.mxu0 0
      %1640 = vmatpush1.bf16.msra.mxu0 %v1414
      %1641 = vmatprep.subr.bf16.mxu0 0
      %1642 = vmatpush1.bf16.msra.mxu0 %v1415
      %1643 = vmatprep.subr.bf16.mxu0 0
      %1644 = vmatpush1.bf16.msra.mxu0 %v1416
      %1645 = vmatprep.subr.bf16.mxu0 0
      %1646 = vmatpush1.bf16.msra.mxu0 %v1417
      %1647 = vmatprep.subr.bf16.mxu0 0
      %1648 = vmatpush1.bf16.msra.mxu0 %v1418
      %1649 = vmatprep.subr.bf16.mxu0 0
      %1650 = vmatpush1.bf16.msra.mxu0 %v1419
      %1651 = vmatprep.subr.bf16.mxu0 0
      %1652 = vmatpush1.bf16.msra.mxu0 %v1420
      %1653 = vmatprep.subr.bf16.mxu0 0
      %1654 = vmatpush1.bf16.msra.mxu0 %v1421
      %1655 = vmatprep.subr.bf16.mxu0 0
      %1656 = vmatpush1.bf16.msra.mxu0 %v1422
      %1657 = vmatprep.subr.bf16.mxu0 0
      %1658 = vmatpush1.bf16.msra.mxu0 %v1423
      %1659 = vmatprep.subr.bf16.mxu0 0
      %1660 = vmatpush1.bf16.msra.mxu0 %v1424
      %1661 = vmatprep.subr.bf16.mxu0 0
      %1662 = vmatpush1.bf16.msra.mxu0 %v1425
      %1663 = vmatprep.subr.bf16.mxu0 0
      %1664 = vmatpush1.bf16.msra.mxu0 %v1426
      %1665 = vmatprep.subr.bf16.mxu0 0
      %1666 = vmatpush1.bf16.msra.mxu0 %v1427
      %1667 = vmatprep.subr.bf16.mxu0 0
      %1668 = vmatpush1.bf16.msra.mxu0 %v1428
      %1669 = vmatprep.subr.bf16.mxu0 0
      %1670 = vmatpush1.bf16.msra.mxu0 %v1429
      %1671 = vmatprep.mubr.bf16.mxu0 %v749
      %1672 = vmatmul.mubr.bf16.gmra.mrb[0].mxu0 %v891
      %v1673 = vpop.f32.mrb[0].mxu0
      %v1674 = vadd.f32 %v1577, %v1673
      %v1675 = vpop.f32.mrb[0].mxu0
      %v1676 = vpop.f32.mrb[0].mxu0
      %v1677 = vadd.f32 %v1580, %v1676
      %v1678 = vpop.f32.mrb[0].mxu0
      %1679 = vmatprep.mubr.bf16.mxu0 %v751
      %1680 = vmatmul.mubr.bf16.gmra.mrb[0].mxu0 %v894
      %v1681 = vpop.f32.mrb[0].mxu0
      %v1682 = vadd.f32 %v1585, %v1681
      %v1683 = vpop.f32.mrb[0].mxu0
      %v1684 = vpop.f32.mrb[0].mxu0
      %v1685 = vadd.f32 %v1588, %v1684
      %v1686 = vpop.f32.mrb[0].mxu0
      %1687 = vmatprep.mubr.bf16.mxu0 %v753
      %1688 = vmatmul.mubr.bf16.gmra.mrb[0].mxu0 %v897
      %v1689 = vpop.f32.mrb[0].mxu0
      %v1690 = vadd.f32 %v1593, %v1689
      %v1691 = vpop.f32.mrb[0].mxu0
      %v1692 = vpop.f32.mrb[0].mxu0
      %v1693 = vadd.f32 %v1596, %v1692
      %v1694 = vpop.f32.mrb[0].mxu0
      %1695 = vmatprep.mubr.bf16.mxu0 %v755
      %1696 = vmatmul.mubr.bf16.gmra.mrb[0].mxu0 %v900
      %v1697 = vpop.f32.mrb[0].mxu0
      %v1698 = vadd.f32 %v1601, %v1697
      %v1699 = vpop.f32.mrb[0].mxu0
      %v1700 = vpop.f32.mrb[0].mxu0
      %v1701 = vadd.f32 %v1604, %v1700
      %v1702 = vpop.f32.mrb[0].mxu0
      %1703 = vmatprep.mubr.bf16.mxu0 %v757
      %1704 = vmatmul.mubr.bf16.gmra.mrb[0].mxu0 %v903
      %v1705 = vpop.f32.mrb[0].mxu0
      %v1706 = vadd.f32 %v1609, %v1705
      %v1707 = vpop.f32.mrb[0].mxu0
      %v1708 = vpop.f32.mrb[0].mxu0
      %v1709 = vadd.f32 %v1612, %v1708
      %v1710 = vpop.f32.mrb[0].mxu0
      %1711 = vmatprep.mubr.bf16.mxu0 %v759
      %1712 = vmatmul.mubr.bf16.gmra.mrb[0].mxu0 %v906
      %v1713 = vpop.f32.mrb[0].mxu0
      %v1714 = vadd.f32 %v1617, %v1713
      %v1715 = vpop.f32.mrb[0].mxu0
      %v1716 = vpop.f32.mrb[0].mxu0
      %v1717 = vadd.f32 %v1620, %v1716
      %v1718 = vpop.f32.mrb[0].mxu0
      %1719 = vmatprep.mubr.bf16.mxu0 %v761
      %1720 = vmatmul.mubr.bf16.gmra.mrb[0].mxu0 %v909
      %v1721 = vpop.f32.mrb[0].mxu0
      %v1722 = vadd.f32 %v1625, %v1721
      %v1723 = vpop.f32.mrb[0].mxu0
      %v1724 = vpop.f32.mrb[0].mxu0
      %v1725 = vadd.f32 %v1628, %v1724
      %v1726 = vpop.f32.mrb[0].mxu0
      %1727 = vmatprep.mubr.bf16.mxu0 %v763
      %1728 = vmatmul.mubr.bf16.gmra.mrb[0].mxu0 %v912
      %v1729 = vpop.f32.mrb[0].mxu0
      %v1730 = vadd.f32 %v1633, %v1729
      %v1731 = vpop.f32.mrb[0].mxu0
      %v1732 = vpop.f32.mrb[0].mxu0
      %v1733 = vadd.f32 %v1636, %v1732
      %v1734 = vpop.f32.mrb[0].mxu0
      %1735 = vdwg.mxu0
      %1736 = vmatprep.subr.bf16.mxu0 0
      %1737 = vmatpush1.bf16.msra.mxu0 %v1430
      %1738 = vmatprep.subr.bf16.mxu0 0
      %1739 = vmatpush1.bf16.msra.mxu0 %v1431
      %1740 = vmatprep.subr.bf16.mxu0 0
      %1741 = vmatpush1.bf16.msra.mxu0 %v1432
      %1742 = vmatprep.subr.bf16.mxu0 0
      %1743 = vmatpush1.bf16.msra.mxu0 %v1433
      %1744 = vmatprep.subr.bf16.mxu0 0
      %1745 = vmatpush1.bf16.msra.mxu0 %v1434
      %1746 = vmatprep.subr.bf16.mxu0 0
      %1747 = vmatpush1.bf16.msra.mxu0 %v1435
      %1748 = vmatprep.subr.bf16.mxu0 0
      %1749 = vmatpush1.bf16.msra.mxu0 %v1436
      %1750 = vmatprep.subr.bf16.mxu0 0
      %1751 = vmatpush1.bf16.msra.mxu0 %v1437
      %1752 = vmatprep.subr.bf16.mxu0 0
      %1753 = vmatpush1.bf16.msra.mxu0 %v1438
      %1754 = vmatprep.subr.bf16.mxu0 0
      %1755 = vmatpush1.bf16.msra.mxu0 %v1439
      %1756 = vmatprep.subr.bf16.mxu0 0
      %1757 = vmatpush1.bf16.msra.mxu0 %v1440
      %1758 = vmatprep.subr.bf16.mxu0 0
      %1759 = vmatpush1.bf16.msra.mxu0 %v1441
      %1760 = vmatprep.subr.bf16.mxu0 0
      %1761 = vmatpush1.bf16.msra.mxu0 %v1442
      %1762 = vmatprep.subr.bf16.mxu0 0
      %1763 = vmatpush1.bf16.msra.mxu0 %v1443
      %1764 = vmatprep.subr.bf16.mxu0 0
      %1765 = vmatpush1.bf16.msra.mxu0 %v1444
      %1766 = vmatprep.subr.bf16.mxu0 0
      %1767 = vmatpush1.bf16.msra.mxu0 %v1445
      %1768 = vmatprep.mubr.bf16.mxu0 %v894
      %1769 = vmatmul.mubr.bf16.gmra.mrb[0].mxu0 %v791
      %v1770 = vpop.f32.mrb[0].mxu0
      %v1771 = vadd.f32 %v1674, %v1770
      %v1772 = vpop.f32.mrb[0].mxu0
      %v1773 = vpop.f32.mrb[0].mxu0
      %v1774 = vadd.f32 %v1677, %v1773
      %v1775 = vpop.f32.mrb[0].mxu0
      %1776 = vmatprep.mubr.bf16.mxu0 %v897
      %1777 = vmatmul.mubr.bf16.gmra.mrb[0].mxu0 %v803
      %v1778 = vpop.f32.mrb[0].mxu0
      %v1779 = vadd.f32 %v1682, %v1778
      %v1780 = vpop.f32.mrb[0].mxu0
      %v1781 = vpop.f32.mrb[0].mxu0
      %v1782 = vadd.f32 %v1685, %v1781
      %v1783 = vpop.f32.mrb[0].mxu0
      %1784 = vmatprep.mubr.bf16.mxu0 %v900
      %1785 = vmatmul.mubr.bf16.gmra.mrb[0].mxu0 %v815
      %v1786 = vpop.f32.mrb[0].mxu0
      %v1787 = vadd.f32 %v1690, %v1786
      %v1788 = vpop.f32.mrb[0].mxu0
      %v1789 = vpop.f32.mrb[0].mxu0
      %v1790 = vadd.f32 %v1693, %v1789
      %v1791 = vpop.f32.mrb[0].mxu0
      %1792 = vmatprep.mubr.bf16.mxu0 %v903
      %1793 = vmatmul.mubr.bf16.gmra.mrb[0].mxu0 %v827
      %v1794 = vpop.f32.mrb[0].mxu0
      %v1795 = vadd.f32 %v1698, %v1794
      %v1796 = vpop.f32.mrb[0].mxu0
      %v1797 = vpop.f32.mrb[0].mxu0
      %v1798 = vadd.f32 %v1701, %v1797
      %v1799 = vpop.f32.mrb[0].mxu0
      %1800 = vmatprep.mubr.bf16.mxu0 %v906
      %1801 = vmatmul.mubr.bf16.gmra.mrb[0].mxu0 %v839
      %v1802 = vpop.f32.mrb[0].mxu0
      %v1803 = vadd.f32 %v1706, %v1802
      %v1804 = vpop.f32.mrb[0].mxu0
      %v1805 = vpop.f32.mrb[0].mxu0
      %v1806 = vadd.f32 %v1709, %v1805
      %v1807 = vpop.f32.mrb[0].mxu0
      %1808 = vmatprep.mubr.bf16.mxu0 %v909
      %1809 = vmatmul.mubr.bf16.gmra.mrb[0].mxu0 %v851
      %v1810 = vpop.f32.mrb[0].mxu0
      %v1811 = vadd.f32 %v1714, %v1810
      %v1812 = vpop.f32.mrb[0].mxu0
      %v1813 = vpop.f32.mrb[0].mxu0
      %v1814 = vadd.f32 %v1717, %v1813
      %v1815 = vpop.f32.mrb[0].mxu0
      %1816 = vmatprep.mubr.bf16.mxu0 %v912
      %1817 = vmatmul.mubr.bf16.gmra.mrb[0].mxu0 %v863
      %v1818 = vpop.f32.mrb[0].mxu0
      %v1819 = vadd.f32 %v1722, %v1818
      %v1820 = vpop.f32.mrb[0].mxu0
      %v1821 = vpop.f32.mrb[0].mxu0
      %v1822 = vadd.f32 %v1725, %v1821
      %v1823 = vpop.f32.mrb[0].mxu0
      %1824 = vmatprep.mubr.bf16.mxu0 %v938
      %1825 = vmatmul.mubr.bf16.gmra.mrb[0].mxu0 %v932
      %v1826 = vpop.f32.mrb[0].mxu0
      %v1827 = vadd.f32 %v1730, %v1826
      %v1828 = vpop.f32.mrb[0].mxu0
      %v1829 = vpop.f32.mrb[0].mxu0
      %v1830 = vadd.f32 %v1733, %v1829
      %v1831 = vpop.f32.mrb[0].mxu0
      %1832 = vdwg.mxu0
      %1833 = vmatprep.subr.bf16.mxu0 0
      %1834 = vmatpush1.bf16.msra.mxu0 %v1446
      %1835 = vmatprep.subr.bf16.mxu0 0
      %1836 = vmatpush1.bf16.msra.mxu0 %v1447
      %1837 = vmatprep.subr.bf16.mxu0 0
      %1838 = vmatpush1.bf16.msra.mxu0 %v1448
      %1839 = vmatprep.subr.bf16.mxu0 0
      %1840 = vmatpush1.bf16.msra.mxu0 %v1449
      %1841 = vmatprep.subr.bf16.mxu0 0
      %1842 = vmatpush1.bf16.msra.mxu0 %v1450
      %1843 = vmatprep.subr.bf16.mxu0 0
      %1844 = vmatpush1.bf16.msra.mxu0 %v1451
      %1845 = vmatprep.subr.bf16.mxu0 0
      %1846 = vmatpush1.bf16.msra.mxu0 %v1452
      %1847 = vmatprep.subr.bf16.mxu0 0
      %1848 = vmatpush1.bf16.msra.mxu0 %v1453
      %1849 = vmatprep.subr.bf16.mxu0 0
      %1850 = vmatpush1.bf16.msra.mxu0 %v1454
      %1851 = vmatprep.subr.bf16.mxu0 0
      %1852 = vmatpush1.bf16.msra.mxu0 %v1455
      %1853 = vmatprep.subr.bf16.mxu0 0
      %1854 = vmatpush1.bf16.msra.mxu0 %v1456
      %1855 = vmatprep.subr.bf16.mxu0 0
      %1856 = vmatpush1.bf16.msra.mxu0 %v1457
      %1857 = vmatprep.subr.bf16.mxu0 0
      %1858 = vmatpush1.bf16.msra.mxu0 %v1458
      %1859 = vmatprep.subr.bf16.mxu0 0
      %1860 = vmatpush1.bf16.msra.mxu0 %v1459
      %1861 = vmatprep.subr.bf16.mxu0 0
      %1862 = vmatpush1.bf16.msra.mxu0 %v1460
      %1863 = vmatprep.subr.bf16.mxu0 0
      %1864 = vmatpush1.bf16.msra.mxu0 %v1461
      %1865 = vmatprep.mubr.bf16.mxu0 %v803
      %1866 = vmatmul.mubr.bf16.gmra.mrb[0].mxu0 %v751
      %v1867 = vpop.f32.mrb[0].mxu0
      %v1868 = vadd.f32 %v1771, %v1867
      %v1869 = vpop.f32.mrb[0].mxu0
      %v1870 = vpop.f32.mrb[0].mxu0
      %v1871 = vadd.f32 %v1774, %v1870
      %v1872 = vpop.f32.mrb[0].mxu0
      %1873 = vmatprep.mubr.bf16.mxu0 %v815
      %1874 = vmatmul.mubr.bf16.gmra.mrb[0].mxu0 %v753
      %v1875 = vpop.f32.mrb[0].mxu0
      %v1876 = vadd.f32 %v1779, %v1875
      %v1877 = vpop.f32.mrb[0].mxu0
      %v1878 = vpop.f32.mrb[0].mxu0
      %v1879 = vadd.f32 %v1782, %v1878
      %v1880 = vpop.f32.mrb[0].mxu0
      %1881 = vmatprep.mubr.bf16.mxu0 %v827
      %1882 = vmatmul.mubr.bf16.gmra.mrb[0].mxu0 %v755
      %v1883 = vpop.f32.mrb[0].mxu0
      %v1884 = vadd.f32 %v1787, %v1883
      %v1885 = vpop.f32.mrb[0].mxu0
      %v1886 = vpop.f32.mrb[0].mxu0
      %v1887 = vadd.f32 %v1790, %v1886
      %v1888 = vpop.f32.mrb[0].mxu0
      %1889 = vmatprep.mubr.bf16.mxu0 %v839
      %1890 = vmatmul.mubr.bf16.gmra.mrb[0].mxu0 %v757
      %v1891 = vpop.f32.mrb[0].mxu0
      %v1892 = vadd.f32 %v1795, %v1891
      %v1893 = vpop.f32.mrb[0].mxu0
      %v1894 = vpop.f32.mrb[0].mxu0
      %v1895 = vadd.f32 %v1798, %v1894
      %v1896 = vpop.f32.mrb[0].mxu0
      %1897 = vmatprep.mubr.bf16.mxu0 %v851
      %1898 = vmatmul.mubr.bf16.gmra.mrb[0].mxu0 %v759
      %v1899 = vpop.f32.mrb[0].mxu0
      %v1900 = vadd.f32 %v1803, %v1899
      %v1901 = vpop.f32.mrb[0].mxu0
      %v1902 = vpop.f32.mrb[0].mxu0
      %v1903 = vadd.f32 %v1806, %v1902
      %v1904 = vpop.f32.mrb[0].mxu0
      %1905 = vmatprep.mubr.bf16.mxu0 %v863
      %1906 = vmatmul.mubr.bf16.gmra.mrb[0].mxu0 %v761
      %v1907 = vpop.f32.mrb[0].mxu0
      %v1908 = vadd.f32 %v1811, %v1907
      %v1909 = vpop.f32.mrb[0].mxu0
      %v1910 = vpop.f32.mrb[0].mxu0
      %v1911 = vadd.f32 %v1814, %v1910
      %v1912 = vpop.f32.mrb[0].mxu0
      %1913 = vmatprep.mubr.bf16.mxu0 %v932
      %1914 = vmatmul.mubr.bf16.gmra.mrb[0].mxu0 %v763
      %v1915 = vpop.f32.mrb[0].mxu0
      %v1916 = vadd.f32 %v1819, %v1915
      %v1917 = vpop.f32.mrb[0].mxu0
      %v1918 = vpop.f32.mrb[0].mxu0
      %v1919 = vadd.f32 %v1822, %v1918
      %v1920 = vpop.f32.mrb[0].mxu0
      %1921 = vmatprep.mubr.bf16.mxu0 %v951
      %1922 = vmatmul.mubr.bf16.gmra.mrb[0].mxu0 %v765
      %v1923 = vpop.f32.mrb[0].mxu0
      %v1924 = vadd.f32 %v1827, %v1923
      %v1925 = vpop.f32.mrb[0].mxu0
      %v1926 = vpop.f32.mrb[0].mxu0
      %v1927 = vadd.f32 %v1830, %v1926
      %v1928 = vpop.f32.mrb[0].mxu0
      %1929 = vdwg.mxu0
      %1930 = vmatprep.subr.bf16.mxu0 0
      %1931 = vmatpush1.bf16.msra.mxu0 %v1462
      %1932 = vmatprep.subr.bf16.mxu0 0
      %1933 = vmatpush1.bf16.msra.mxu0 %v1463
      %1934 = vmatprep.subr.bf16.mxu0 0
      %1935 = vmatpush1.bf16.msra.mxu0 %v1464
      %1936 = vmatprep.subr.bf16.mxu0 0
      %1937 = vmatpush1.bf16.msra.mxu0 %v1465
      %1938 = vmatprep.subr.bf16.mxu0 0
      %1939 = vmatpush1.bf16.msra.mxu0 %v1466
      %1940 = vmatprep.subr.bf16.mxu0 0
      %1941 = vmatpush1.bf16.msra.mxu0 %v1467
      %1942 = vmatprep.subr.bf16.mxu0 0
      %1943 = vmatpush1.bf16.msra.mxu0 %v1468
      %1944 = vmatprep.subr.bf16.mxu0 0
      %1945 = vmatpush1.bf16.msra.mxu0 %v1469
      %1946 = vmatprep.subr.bf16.mxu0 0
      %1947 = vmatpush1.bf16.msra.mxu0 0
      %1948 = vmatprep.subr.bf16.mxu0 0
      %1949 = vmatpush1.bf16.msra.mxu0 0
      %1950 = vmatprep.subr.bf16.mxu0 0
      %1951 = vmatpush1.bf16.msra.mxu0 0
      %1952 = vmatprep.subr.bf16.mxu0 0
      %1953 = vmatpush1.bf16.msra.mxu0 0
      %1954 = vmatprep.subr.bf16.mxu0 0
      %1955 = vmatpush1.bf16.msra.mxu0 0
      %1956 = vmatprep.subr.bf16.mxu0 0
      %1957 = vmatpush1.bf16.msra.mxu0 0
      %1958 = vmatprep.subr.bf16.mxu0 0
      %1959 = vmatpush1.bf16.msra.mxu0 0
      %1960 = vmatprep.subr.bf16.mxu0 0
      %1961 = vmatpush1.bf16.msra.mxu0 0
      %1962 = vmatprep.mubr.bf16.mxu0 0
      %1963 = vmatmul.mubr.bf16.gmra.mrb[0].mxu0 %v897
      %v1964 = vpop.f32.mrb[0].mxu0
      %v1965 = vadd.f32 %v1868, %v1964
      %v1966 = vpop.f32.mrb[0].mxu0
      %v1967 = vpop.f32.mrb[0].mxu0
      %v1968 = vadd.f32 %v1871, %v1967
      %v1969 = vpop.f32.mrb[0].mxu0
      %1970 = vmatprep.mubr.bf16.mxu0 0
      %1971 = vmatmul.mubr.bf16.gmra.mrb[0].mxu0 %v900
      %v1972 = vpop.f32.mrb[0].mxu0
      %v1973 = vadd.f32 %v1876, %v1972
      %v1974 = vpop.f32.mrb[0].mxu0
      %v1975 = vpop.f32.mrb[0].mxu0
      %v1976 = vadd.f32 %v1879, %v1975
      %v1977 = vpop.f32.mrb[0].mxu0
      %1978 = vmatprep.mubr.bf16.mxu0 0
      %1979 = vmatmul.mubr.bf16.gmra.mrb[0].mxu0 %v903
      %v1980 = vpop.f32.mrb[0].mxu0
      %v1981 = vadd.f32 %v1884, %v1980
      %v1982 = vpop.f32.mrb[0].mxu0
      %v1983 = vpop.f32.mrb[0].mxu0
      %v1984 = vadd.f32 %v1887, %v1983
      %v1985 = vpop.f32.mrb[0].mxu0
      %1986 = vmatprep.mubr.bf16.mxu0 0
      %1987 = vmatmul.mubr.bf16.gmra.mrb[0].mxu0 %v906
      %v1988 = vpop.f32.mrb[0].mxu0
      %v1989 = vadd.f32 %v1892, %v1988
      %v1990 = vpop.f32.mrb[0].mxu0
      %v1991 = vpop.f32.mrb[0].mxu0
      %v1992 = vadd.f32 %v1895, %v1991
      %v1993 = vpop.f32.mrb[0].mxu0
      %1994 = vmatprep.mubr.bf16.mxu0 0
      %1995 = vmatmul.mubr.bf16.gmra.mrb[0].mxu0 %v909
      %v1996 = vpop.f32.mrb[0].mxu0
      %v1997 = vadd.f32 %v1900, %v1996
      %v1998 = vpop.f32.mrb[0].mxu0
      %v1999 = vpop.f32.mrb[0].mxu0
      %v2000 = vadd.f32 %v1903, %v1999
      %v2001 = vpop.f32.mrb[0].mxu0
      %2002 = vmatprep.mubr.bf16.mxu0 0
      %2003 = vmatmul.mubr.bf16.gmra.mrb[0].mxu0 %v912
      %v2004 = vpop.f32.mrb[0].mxu0
      %v2005 = vadd.f32 %v1908, %v2004
      %v2006 = vpop.f32.mrb[0].mxu0
      %v2007 = vpop.f32.mrb[0].mxu0
      %v2008 = vadd.f32 %v1911, %v2007
      %v2009 = vpop.f32.mrb[0].mxu0
      %2010 = vmatprep.mubr.bf16.mxu0 0
      %2011 = vmatmul.mubr.bf16.gmra.mrb[0].mxu0 %v938
      %v2012 = vpop.f32.mrb[0].mxu0
      %v2013 = vadd.f32 %v1916, %v2012
      %v2014 = vpop.f32.mrb[0].mxu0
      %v2015 = vpop.f32.mrb[0].mxu0
      %v2016 = vadd.f32 %v1919, %v2015
      %v2017 = vpop.f32.mrb[0].mxu0
      %2018 = vmatprep.mubr.bf16.mxu0 0
      %2019 = vmatmul.mubr.bf16.gmra.mrb[0].mxu0 %v957
      %v2020 = vpop.f32.mrb[0].mxu0
      %v2021 = vadd.f32 %v1924, %v2020
      %v2022 = vpop.f32.mrb[0].mxu0
      %v2023 = vpop.f32.mrb[0].mxu0
      %v2024 = vadd.f32 %v1927, %v2023
      %v2025 = vpop.f32.mrb[0].mxu0
      %2026 = vdwg.mxu0
      %p2027 = scmp.eq.s32.totalorder %s24, 0
      // Predicated region
      $region75: #{conv_block_forward.4} parent=35 // pred_check
        %p2028 = pneg %p2027
      $region76: #{conv_block_forward.4} parent=35 // pred_check_branch
        %2030 = sbr.rel (%p2028) target = $region78
      $region77: #{conv_block_forward.4} parent=35 // pred_region
        %2031 = vst [vmem:[%s271] sm:$0x1] 0.0
        %2032 = vst [vmem:[%s274] sm:$0x1] 0.0
      $region78: #{conv_block_forward.4} parent=35 // pred_fallthru
        _
      %v2033 = vld [vmem:[%s271] sm:$0x1]
      %v2034 = vadd.f32 %v1965, %v1968
      %v2035 = vadd.f32 %v2034, %v1973
      %v2036 = vadd.f32 %v2035, %v1976
      %v2037 = vadd.f32 %v2036, %v1981
      %v2038 = vadd.f32 %v2037, %v1984
      %v2039 = vadd.f32 %v2038, %v1989
      %v2040 = vadd.f32 %v2039, %v1992
      %v2041 = vadd.f32 %v2040, %v1997
      %v2042 = vadd.f32 %v2041, %v2000
      %v2043 = vadd.f32 %v2042, %v2005
      %v2044 = vadd.f32 %v2043, %v2008
      %v2045 = vadd.f32 %v2044, %v2013
      %v2046 = vadd.f32 %v2045, %v2016
      %v2047 = vadd.f32 %v2046, %v2021
      %v2048 = vadd.f32 %v2047, %v2024
      %v2049 = vrot.slane %v2048, 4
      %v2050 = vadd.f32 %v2048, %v2049
      %v2051 = vrot.slane %v2050, 2
      %v2052 = vadd.f32 %v2050, %v2051
      %v2053 = vrot.slane %v2052, 1
      %v2054 = vadd.f32 %v2052, %v2053
      %v2055 = vadd.f32 %v2033, %v2054
      %2056 = vst [vmem:[%s271] sm:$0x1] %v2055
      %v2057 = vld [vmem:[%s274] sm:$0x1]
      %v2058 = vmul.f32 %v1965, %v1965
      %v2059 = vmul.f32 %v1968, %v1968
      %v2060 = vmul.f32 %v1973, %v1973
      %v2061 = vmul.f32 %v1976, %v1976
      %v2062 = vmul.f32 %v1981, %v1981
      %v2063 = vmul.f32 %v1984, %v1984
      %v2064 = vmul.f32 %v1989, %v1989
      %v2065 = vmul.f32 %v1992, %v1992
      %v2066 = vmul.f32 %v1997, %v1997
      %v2067 = vmul.f32 %v2000, %v2000
      %v2068 = vmul.f32 %v2005, %v2005
      %v2069 = vmul.f32 %v2008, %v2008
      %v2070 = vmul.f32 %v2013, %v2013
      %v2071 = vmul.f32 %v2016, %v2016
      %v2072 = vmul.f32 %v2021, %v2021
      %v2073 = vmul.f32 %v2024, %v2024
      %v2074 = vadd.f32 %v2058, %v2059
      %v2075 = vadd.f32 %v2074, %v2060
      %v2076 = vadd.f32 %v2075, %v2061
      %v2077 = vadd.f32 %v2076, %v2062
      %v2078 = vadd.f32 %v2077, %v2063
      %v2079 = vadd.f32 %v2078, %v2064
      %v2080 = vadd.f32 %v2079, %v2065
      %v2081 = vadd.f32 %v2080, %v2066
      %v2082 = vadd.f32 %v2081, %v2067
      %v2083 = vadd.f32 %v2082, %v2068
      %v2084 = vadd.f32 %v2083, %v2069
      %v2085 = vadd.f32 %v2084, %v2070
      %v2086 = vadd.f32 %v2085, %v2071
      %v2087 = vadd.f32 %v2086, %v2072
      %v2088 = vadd.f32 %v2087, %v2073
      %v2089 = vrot.slane %v2088, 4
      %v2090 = vadd.f32 %v2088, %v2089
      %v2091 = vrot.slane %v2090, 2
      %v2092 = vadd.f32 %v2090, %v2091
      %v2093 = vrot.slane %v2092, 1
      %v2094 = vadd.f32 %v2092, %v2093
      %v2095 = vadd.f32 %v2057, %v2094
      %2096 = vst [vmem:[%s274] sm:$0x1] %v2095
      %2097 = vst [vmem:[%s267] sm:$0xff] %v1965
      %2098 = vst [vmem:[%s267 + $0x8] sm:$0xff] %v1968
      %2099 = vst [vmem:[%s267 + $0x10] sm:$0xff] %v1973
      %2100 = vst [vmem:[%s267 + $0x18] sm:$0xff] %v1976
      %2101 = vst [vmem:[%s267 + $0x20] sm:$0xff] %v1981
      %2102 = vst [vmem:[%s267 + $0x28] sm:$0xff] %v1984
      %2103 = vst [vmem:[%s267 + $0x30] sm:$0xff] %v1989
      %2104 = vst [vmem:[%s267 + $0x38] sm:$0xff] %v1992
      %2105 = vst [vmem:[%s267 + $0x40] sm:$0xff] %v1997
      %2106 = vst [vmem:[%s267 + $0x48] sm:$0xff] %v2000
      %2107 = vst [vmem:[%s267 + $0x50] sm:$0xff] %v2005
      %2108 = vst [vmem:[%s267 + $0x58] sm:$0xff] %v2008
      %2109 = vst [vmem:[%s267 + $0x60] sm:$0xff] %v2013
      %2110 = vst [vmem:[%s267 + $0x68] sm:$0xff] %v2016
      %2111 = vst [vmem:[%s267 + $0x70] sm:$0xff] %v2021
      %2112 = vst [vmem:[%s267 + $0x78] sm:$0xff] %v2024
      %s2113 = smul.u32 8, %s24
      %p2114 = scmp.lt.s32.totalorder %s23, 1
      %s2115 = scalar_select %p2114, %s23, 1
      %p2116 = scmp.lt.s32.totalorder %s2113, 15
      %s2117 = scalar_select %p2116, %s2113, 15
      %s2118 = smul.addr %s2117, 2
      %s2119 = smul.addr %s2115, 32
      %s2120 = sadd.s32 %s2118, %s2119
      %s2121 = smul.addr %s2120, 8
      %s2122 = scalar_lea.vmem %s5, %s2121
      %p2123 = scmp.lt.s32.totalorder %s23, 1
      %s2124 = scalar_select %p2123, %s23, 1
      %s2125 = scalar_lea.vmem %s6, %s2124
      %p2126 = scmp.lt.s32.totalorder %s23, 1
      %s2127 = scalar_select %p2126, %s23, 1
      %s2128 = scalar_lea.vmem %s7, %s2127
      // Predicated region
      $region79: #{conv_block_forward.4} parent=35 // pred_check
        %p2129 = pneg %p135
      $region80: #{conv_block_forward.4} parent=35 // pred_check_branch
        %2131 = sbr.rel (%p2129) target = $region82
      $region81: #{conv_block_forward.4} parent=35 // pred_region
        %s2132 = smul.u32 8, %s24
      $region82: #{conv_block_forward.4} parent=35 // pred_fallthru
        _
      // Predicated region
      $region83: #{conv_block_forward.4} parent=35 // pred_check
        %p2133 = pneg %p161
      $region84: #{conv_block_forward.4} parent=35 // pred_check_branch
        %2135 = sbr.rel (%p2133) target = $region86
      $region85: #{conv_block_forward.4} parent=35 // pred_region
        _
      $region86: #{conv_block_forward.4} parent=35 // pred_fallthru
        _
      // Predicated region
      $region87: #{conv_block_forward.4} parent=35 // pred_check
        %p2136 = pneg %p187
      $region88: #{conv_block_forward.4} parent=35 // pred_check_branch
        %2138 = sbr.rel (%p2136) target = $region90
      $region89: #{conv_block_forward.4} parent=35 // pred_region
        _
      $region90: #{conv_block_forward.4} parent=35 // pred_fallthru
        _
    $region36: #{conv_block_forward.4} parent=5 // pred_fallthru
      _
    %p2139 = scmp.le.s32.totalorder 2, %s14
    // Predicated region
    $region91: #{conv_block_forward.4} parent=5 // pred_check
      %p2140 = pneg %p2139
    $region92: #{conv_block_forward.4} parent=5 // pred_check_branch
      %2142 = sbr.rel (%p2140) target = $region94
    $region93: #{conv_block_forward.4} parent=5 // pred_region
      %s2143 = ssub.s32 %s14, 2
      // Predicated region
      $region95: #{conv_block_forward.4} parent=93 // pred_check
        %p2144 = pneg %p141
      $region96: #{conv_block_forward.4} parent=93 // pred_check_branch
        %2146 = sbr.rel (%p2144) target = $region98
      $region97: #{conv_block_forward.4} parent=93 // pred_region
        %s2147 = smul.u32 8, %s26
        %p2148 = scmp.lt.s32.totalorder %s25, 1
        %s2149 = scalar_select %p2148, %s25, 1
        %p2150 = scmp.lt.s32.totalorder %s2147, 15
        %s2151 = scalar_select %p2150, %s2147, 15
        %s2152 = smul.addr %s2151, 2
        %s2153 = smul.addr %s2149, 32
        %s2154 = sadd.s32 %s2152, %s2153
        %s2155 = smul.addr %s2154, 8
        %s2156 = scalar_lea.vmem %s5, %s2155
      $region98: #{conv_block_forward.4} parent=93 // pred_fallthru
        _
      // Predicated region
      $region99: #{conv_block_forward.4} parent=93 // pred_check
        %p2157 = pneg %p167
      $region100: #{conv_block_forward.4} parent=93 // pred_check_branch
        %2159 = sbr.rel (%p2157) target = $region102
      $region101: #{conv_block_forward.4} parent=93 // pred_region
        %p2160 = scmp.lt.s32.totalorder %s25, 1
        %s2161 = scalar_select %p2160, %s25, 1
        %s2162 = scalar_lea.vmem %s6, %s2161
      $region102: #{conv_block_forward.4} parent=93 // pred_fallthru
        _
      // Predicated region
      $region103: #{conv_block_forward.4} parent=93 // pred_check
        %p2163 = pneg %p193
      $region104: #{conv_block_forward.4} parent=93 // pred_check_branch
        %2165 = sbr.rel (%p2163) target = $region106
      $region105: #{conv_block_forward.4} parent=93 // pred_region
        %p2166 = scmp.lt.s32.totalorder %s25, 1
        %s2167 = scalar_select %p2166, %s25, 1
        %s2168 = scalar_lea.vmem %s7, %s2167
      $region106: #{conv_block_forward.4} parent=93 // pred_fallthru
        _
    $region94: #{conv_block_forward.4} parent=5 // pred_fallthru
      _
  $region6: #{conv_block_forward.4} parent=0 // loop_footer
    %s18 = sadd.s32 1, %s14
  $region7: #{conv_block_forward.4} parent=0 // loop_footer_branch
    %13 = sbr.rel target = $region3
  $region8: #{conv_block_forward.4} parent=0 // loop_exit
    _

</llo_original>
